<compile_context>
chip_gen: v7x
topology: tpu7x:2x2x1
jax: 0.10.0
libtpu: 0.0.40
codegen_flags: <defaults>
</compile_context>

<pallas_src>
import functools

import jax
import jax.numpy as jnp
from jax import lax
from jax.experimental import pallas as pl
from jax.experimental.pallas import tpu as pltpu

# ----------------------- small synthetic Idefics2VisionConfig ----------------
HIDDEN = 32          # config.hidden_size
INTERMEDIATE = 64    # config.intermediate_size
NUM_HEADS = 2        # config.num_attention_heads
HEAD_DIM = HIDDEN // NUM_HEADS
NUM_LAYERS = 2       # config.num_hidden_layers
NUM_CHANNELS = 3     # config.num_channels
IMAGE_SIZE = 32      # config.image_size
PATCH_SIZE = 8       # config.patch_size
LN_EPS = 1e-6        # config.layer_norm_eps
NPS = IMAGE_SIZE // PATCH_SIZE          # num_patches_per_side
NUM_POSITIONS = NPS * NPS

# ----------------------- lane-dense (padded) dimensions ----------------------
LANE = 128
DP = ((HIDDEN + LANE - 1) // LANE) * LANE              # padded hidden      = 128
IP = ((INTERMEDIATE + LANE - 1) // LANE) * LANE        # padded intermediate= 128
HD_P = DP // NUM_HEADS                                 # padded head dim    = 64
K_FEAT = NUM_CHANNELS * PATCH_SIZE * PATCH_SIZE        # conv patch features= 192
KP = ((K_FEAT + LANE - 1) // LANE) * LANE              # padded patch feats = 256
MXU_DTYPE = jnp.bfloat16


def _gelu_tanh(x):
    # config.hidden_act == "gelu_pytorch_tanh" (SigLIP default)
    return 0.5 * x * (1.0 + jnp.tanh(0.7978845608028654 * (x + 0.044715 * x * x * x)))


# ------------------------------ fused Pallas kernel ---------------------------
def _fused_vit_kernel(patches_ref, pos_ref, w_pe_ref, b_pe_ref,
                      ln1w_ref, ln1b_ref, wqkv_ref, bqkv_ref, wo_ref, bo_ref,
                      ln2w_ref, ln2b_ref, w1_ref, b1_ref, w2_ref, b2_ref,
                      post_w_ref, post_b_ref, out_ref,
                      *, num_layers, num_heads, hd_p, d_valid, dp, eps):
    """Full Idefics2 vision forward for one batch element (block = (1, P, *))."""
    f32 = jnp.float32
    # Lane-validity mask so LayerNorm stats ignore the zero-padded hidden lanes.
    lane_mask = (lax.broadcasted_iota(jnp.int32, (1, dp), 1) < d_valid).astype(f32)
    inv_d = 1.0 / d_valid

    def layernorm(v, w, b):
        # padded lanes of v are always exactly zero, so the plain sum is the
        # masked sum; only the variance needs the explicit lane mask.
        mu = jnp.sum(v, axis=-1, keepdims=True) * inv_d
        cen = (v - mu) * lane_mask
        var = jnp.sum(cen * cen, axis=-1, keepdims=True) * inv_d
        return cen * lax.rsqrt(var + eps) * w + b          # w, b are zero on pad lanes

    def mm(a, b):
        # bf16 MXU operands, f32 accumulation.
        return jnp.dot(a.astype(MXU_DTYPE), b.astype(MXU_DTYPE),
                       preferred_element_type=f32)

    # ---- patch embedding (conv stride==kernel as matmul) + bias + position emb
    x = mm(patches_ref[0], w_pe_ref[...]) + b_pe_ref[...] + pos_ref[0].astype(f32)

    # ---- encoder layers (statically unrolled, all weights VMEM-resident) -----
    for l in range(num_layers):
        # ----- self attention -----
        h = layernorm(x, ln1w_ref[l], ln1b_ref[l])
        qkv = mm(h, wqkv_ref[l]) + bqkv_ref[l]             # (P, 3*dp)
        wo_l = wo_ref[l]                                   # (dp, dp)
        attn = bo_ref[l]                                   # (1, dp) -> broadcasts
        for hh in range(num_heads):
            q_h = qkv[:, 0 * dp + hh * hd_p: 0 * dp + (hh + 1) * hd_p]
            k_h = qkv[:, 1 * dp + hh * hd_p: 1 * dp + (hh + 1) * hd_p]
            v_h = qkv[:, 2 * dp + hh * hd_p: 2 * dp + (hh + 1) * hd_p]
            # 1/sqrt(head_dim) scale is pre-folded into the q weights/bias.
            s = lax.dot_general(q_h.astype(MXU_DTYPE), k_h.astype(MXU_DTYPE),
                                (((1,), (1,)), ((), ())),
                                preferred_element_type=f32)        # (P, P)
            s = s - jnp.max(s, axis=-1, keepdims=True)
            p = jnp.exp(s)
            p = p * pl.reciprocal(jnp.sum(p, axis=-1, keepdims=True), approx=True)
            o_h = mm(p, v_h)                                       # (P, hd_p)
            # accumulate straight into the out-projection (no concatenate)
            attn = attn + mm(o_h, wo_l[hh * hd_p:(hh + 1) * hd_p, :])
        x = x + attn

        # ----- MLP -----
        h2 = layernorm(x, ln2w_ref[l], ln2b_ref[l])
        m = mm(h2, w1_ref[l]) + b1_ref[l]
        m = _gelu_tanh(m)
        m = mm(m, w2_ref[l]) + b2_ref[l]
        x = x + m

    # ---- post layernorm + lane-dense store ------------------------------------
    out_ref[0] = layernorm(x, post_w_ref[...], post_b_ref[...]).astype(out_ref.dtype)


# --------------------------- weight padding / stacking -------------------------
def _pad2(a, rows, cols):
    return jnp.pad(a, ((0, rows - a.shape[0]), (0, cols - a.shape[1])))


def _pad_head_cols(a, scale=1.0):
    """(rows, HIDDEN) laid out [head, head_dim] on last axis -> (rows, DP)."""
    rows = a.shape[0]
    a3 = (a * scale).reshape(rows, NUM_HEADS, HEAD_DIM)
    a3 = jnp.pad(a3, ((0, 0), (0, 0), (0, HD_P - HEAD_DIM)))
    return a3.reshape(rows, DP)


def prepare_fused_params(params):
    """Zero-pad to lane-dense shapes and stack per-layer weights on a layer axis."""
    scale = float(HEAD_DIM) ** -0.5
    D = HIDDEN

    w_pe = params['conv_w'].reshape(D, -1).T               # (C*ps*ps, D)
    w_pe = _pad2(w_pe, KP, DP)
    b_pe = _pad2(params['conv_b'].reshape(1, D), 1, DP)
    pos_emb = _pad2(params['pos_emb'], NUM_POSITIONS, DP)

    def pad_layer(lp):
        wqkv, bqkv = lp['wqkv'], lp['bqkv']
        wq, wk, wv = wqkv[:, :D], wqkv[:, D:2 * D], wqkv[:, 2 * D:]
        bq, bk, bv = bqkv[:, :D], bqkv[:, D:2 * D], bqkv[:, 2 * D:]
        # fold the attention scale into the q columns (weights AND bias)
        wqkv_p = jnp.concatenate(
            [_pad_head_cols(wq, scale), _pad_head_cols(wk), _pad_head_cols(wv)], axis=1)
        wqkv_p = jnp.pad(wqkv_p, ((0, DP - D), (0, 0)))
        bqkv_p = jnp.concatenate(
            [_pad_head_cols(bq, scale), _pad_head_cols(bk), _pad_head_cols(bv)], axis=1)
        # out-projection rows follow the padded [head, head_dim] layout
        wo3 = lp['wo'].reshape(NUM_HEADS, HEAD_DIM, D)
        wo3 = jnp.pad(wo3, ((0, 0), (0, HD_P - HEAD_DIM), (0, DP - D)))
        wo_p = wo3.reshape(DP, DP)
        return dict(
            ln1_w=_pad2(lp['ln1_w'], 1, DP), ln1_b=_pad2(lp['ln1_b'], 1, DP),
            wqkv=wqkv_p, bqkv=bqkv_p,
            wo=wo_p, bo=_pad2(lp['bo'], 1, DP),
            ln2_w=_pad2(lp['ln2_w'], 1, DP), ln2_b=_pad2(lp['ln2_b'], 1, DP),
            w1=_pad2(lp['w1'], DP, IP), b1=_pad2(lp['b1'], 1, IP),
            w2=_pad2(lp['w2'], IP, DP), b2=_pad2(lp['b2'], 1, DP),
        )

    padded = [pad_layer(lp) for lp in params['layers']]
    fused = {k: jnp.stack([p_[k] for p_ in padded], axis=0) for k in padded[0]}
    fused.update(
        w_pe=w_pe, b_pe=b_pe, pos_emb=pos_emb,
        post_w=_pad2(params['post_ln_w'], 1, DP),
        post_b=_pad2(params['post_ln_b'], 1, DP),
    )
    return fused


# ---------------------------- position ids (vectorized) ------------------------
def compute_position_ids(patch_attention_mask, nps):
    """Vectorized, jit-friendly version of Idefics2VisionEmbeddings' bucketize
    logic (tgt_sizes=None, rectangular top-left valid region)."""
    B, Hp, Wp = patch_attention_mask.shape
    m = patch_attention_mask.astype(jnp.float32)
    nb_h = jnp.sum(m[:, :, 0], axis=1)                       # (B,)
    nb_w = jnp.sum(m[:, 0, :], axis=1)                       # (B,)
    boundaries = jnp.arange(1.0 / nps, 1.0, 1.0 / nps, dtype=jnp.float32)
    frac_h = jnp.arange(Hp, dtype=jnp.float32)[None, :] / nb_h[:, None]   # (B, Hp)
    frac_w = jnp.arange(Wp, dtype=jnp.float32)[None, :] / nb_w[:, None]   # (B, Wp)
    bh = jnp.searchsorted(boundaries, frac_h, side='right')
    bw = jnp.searchsorted(boundaries, frac_w, side='right')
    pos = bh[:, :, None] * nps + bw[:, None, :]              # (B, Hp, Wp)
    pos = jnp.where(patch_attention_mask, pos, 0)
    return pos.reshape(B, Hp * Wp).astype(jnp.int32)


# --------------------------------- full forward --------------------------------
def idefics2_vision_transformer(pixel_values, patch_attention_mask, params):
    B, C, H, W = pixel_values.shape
    Hp, Wp = H // PATCH_SIZE, W // PATCH_SIZE
    P = Hp * Wp

    fused = prepare_fused_params(params)

    # Patch extraction (conv stride==kernel) + position-embedding gather done
    # with XLA ops in the wrapper.
    # TODO(synk): at production image sizes, fold the patch extraction and the
    # pos-emb gather into the kernel via Element / scalar-prefetch index maps
    # to avoid the extra HBM pass.
    patches = pixel_values.reshape(B, C, Hp, PATCH_SIZE, Wp, PATCH_SIZE)
    patches = patches.transpose(0, 2, 4, 1, 3, 5).reshape(B, P, K_FEAT)
    patches = jnp.pad(patches, ((0, 0), (0, 0), (0, KP - K_FEAT)))

    position_ids = compute_position_ids(patch_attention_mask, NPS)      # (B, P)
    pos_gathered = jnp.take(fused['pos_emb'], position_ids, axis=0)     # (B, P, DP)

    kernel = functools.partial(
        _fused_vit_kernel, num_layers=NUM_LAYERS, num_heads=NUM_HEADS,
        hd_p=HD_P, d_valid=HIDDEN, dp=DP, eps=LN_EPS)

    weight_names = ['w_pe', 'b_pe', 'ln1_w', 'ln1_b', 'wqkv', 'bqkv', 'wo', 'bo',
                    'ln2_w', 'ln2_b', 'w1', 'b1', 'w2', 'b2', 'post_w', 'post_b']
    weights = [fused[n] for n in weight_names]

    in_specs = [pl.BlockSpec((1, P, KP), lambda b: (b, 0, 0)),
                pl.BlockSpec((1, P, DP), lambda b: (b, 0, 0))]
    # Weights: full-array blocks, same block index every grid step (loaded once).
    in_specs += [pl.BlockSpec(w.shape, lambda b, nd=w.ndim: (0,) * nd)
                 for w in weights]

    out = pl.pallas_call(
        kernel,
        out_shape=jax.ShapeDtypeStruct((B, P, DP), jnp.float32),
        grid=(B,),
        in_specs=in_specs,
        out_specs=pl.BlockSpec((1, P, DP), lambda b: (b, 0, 0)),
        compiler_params=pltpu.CompilerParams(
            dimension_semantics=("parallel",)),
    )(patches, pos_gathered, *weights)

    # slice the lane-dense slab back to the logical hidden size
    return out[:, :, :HIDDEN]


# ----------------------------------- parameters --------------------------------
def init_params(key):
    keys = iter(jax.random.split(key, 64))

    def nrm(shape, scale=0.02):
        return scale * jax.random.normal(next(keys), shape, dtype=jnp.float32)

    params = {
        'conv_w': nrm((HIDDEN, NUM_CHANNELS, PATCH_SIZE, PATCH_SIZE)),
        'conv_b': nrm((HIDDEN,)),
        'pos_emb': nrm((NUM_POSITIONS, HIDDEN)),
        'post_ln_w': jnp.ones((1, HIDDEN), jnp.float32),
        'post_ln_b': jnp.zeros((1, HIDDEN), jnp.float32),
        'layers': [],
    }
    for _ in range(NUM_LAYERS):
        params['layers'].append({
            'ln1_w': jnp.ones((1, HIDDEN), jnp.float32),
            'ln1_b': jnp.zeros((1, HIDDEN), jnp.float32),
            'wqkv': nrm((HIDDEN, 3 * HIDDEN)),
            'bqkv': nrm((1, 3 * HIDDEN)),
            'wo': nrm((HIDDEN, HIDDEN)),
            'bo': nrm((1, HIDDEN)),
            'ln2_w': jnp.ones((1, HIDDEN), jnp.float32),
            'ln2_b': jnp.zeros((1, HIDDEN), jnp.float32),
            'w1': nrm((HIDDEN, INTERMEDIATE)),
            'b1': nrm((1, INTERMEDIATE)),
            'w2': nrm((INTERMEDIATE, HIDDEN)),
            'b2': nrm((1, HIDDEN)),
        })
    return params


if __name__ == "__main__":
    key = jax.random.PRNGKey(0)
    pkey, wkey = jax.random.split(key)

    B = 2
    pixel_values = jax.random.normal(
        pkey, (B, NUM_CHANNELS, IMAGE_SIZE, IMAGE_SIZE), dtype=jnp.float32)
    patch_attention_mask = jnp.ones((B, NPS, NPS), dtype=bool)

    params = init_params(wkey)
    out = idefics2_vision_transformer(pixel_values, patch_attention_mask, params)
    out = jax.block_until_ready(out)

    assert out.shape == (B, NUM_POSITIONS, HIDDEN), out.shape
    assert bool(jnp.all(jnp.isfinite(out)))
    print("KERNEL_OK")
</pallas_src>

<mosaic_0001>
module attributes {stable_mosaic.version = 11 : i64} {
  func.func @_fused_vit_kernel(%arg0: i32, %arg1: memref<1x16x256xf32, #tpu.memory_space<vmem>>, %arg2: memref<1x16x128xf32, #tpu.memory_space<vmem>>, %arg3: memref<256x128xf32, #tpu.memory_space<vmem>>, %arg4: memref<1x128xf32, #tpu.memory_space<vmem>>, %arg5: memref<2x1x128xf32, #tpu.memory_space<vmem>>, %arg6: memref<2x1x128xf32, #tpu.memory_space<vmem>>, %arg7: memref<2x128x384xf32, #tpu.memory_space<vmem>>, %arg8: memref<2x1x384xf32, #tpu.memory_space<vmem>>, %arg9: memref<2x128x128xf32, #tpu.memory_space<vmem>>, %arg10: memref<2x1x128xf32, #tpu.memory_space<vmem>>, %arg11: memref<2x1x128xf32, #tpu.memory_space<vmem>>, %arg12: memref<2x1x128xf32, #tpu.memory_space<vmem>>, %arg13: memref<2x128x128xf32, #tpu.memory_space<vmem>>, %arg14: memref<2x1x128xf32, #tpu.memory_space<vmem>>, %arg15: memref<2x128x128xf32, #tpu.memory_space<vmem>>, %arg16: memref<2x1x128xf32, #tpu.memory_space<vmem>>, %arg17: memref<1x128xf32, #tpu.memory_space<vmem>>, %arg18: memref<1x128xf32, #tpu.memory_space<vmem>>, %arg19: memref<1x16x128xf32, #tpu.memory_space<vmem>>) attributes {dimension_semantics = [#tpu.dimension_semantics<parallel>], iteration_bounds = array<i64: 2>, scalar_prefetch = 0 : i64, scratch_operands = 0 : i64, tpu.core_type = #tpu.core_type<tc>, window_params = [{transform_indices = @transform_0, window_bounds = array<i64: 1, 16, 256>}, {transform_indices = @transform_1, window_bounds = array<i64: 1, 16, 128>}, {pipeline_mode = #tpu.pipeline_mode<synchronous>, transform_indices = @transform_2, window_bounds = array<i64: 256, 128>}, {pipeline_mode = #tpu.pipeline_mode<synchronous>, transform_indices = @transform_3, window_bounds = array<i64: 1, 128>}, {pipeline_mode = #tpu.pipeline_mode<synchronous>, transform_indices = @transform_4, window_bounds = array<i64: 2, 1, 128>}, {pipeline_mode = #tpu.pipeline_mode<synchronous>, transform_indices = @transform_5, window_bounds = array<i64: 2, 1, 128>}, {pipeline_mode = #tpu.pipeline_mode<synchronous>, transform_indices = @transform_6, window_bounds = array<i64: 2, 128, 384>}, {pipeline_mode = #tpu.pipeline_mode<synchronous>, transform_indices = @transform_7, window_bounds = array<i64: 2, 1, 384>}, {pipeline_mode = #tpu.pipeline_mode<synchronous>, transform_indices = @transform_8, window_bounds = array<i64: 2, 128, 128>}, {pipeline_mode = #tpu.pipeline_mode<synchronous>, transform_indices = @transform_9, window_bounds = array<i64: 2, 1, 128>}, {pipeline_mode = #tpu.pipeline_mode<synchronous>, transform_indices = @transform_10, window_bounds = array<i64: 2, 1, 128>}, {pipeline_mode = #tpu.pipeline_mode<synchronous>, transform_indices = @transform_11, window_bounds = array<i64: 2, 1, 128>}, {pipeline_mode = #tpu.pipeline_mode<synchronous>, transform_indices = @transform_12, window_bounds = array<i64: 2, 128, 128>}, {pipeline_mode = #tpu.pipeline_mode<synchronous>, transform_indices = @transform_13, window_bounds = array<i64: 2, 1, 128>}, {pipeline_mode = #tpu.pipeline_mode<synchronous>, transform_indices = @transform_14, window_bounds = array<i64: 2, 128, 128>}, {pipeline_mode = #tpu.pipeline_mode<synchronous>, transform_indices = @transform_15, window_bounds = array<i64: 2, 1, 128>}, {pipeline_mode = #tpu.pipeline_mode<synchronous>, transform_indices = @transform_16, window_bounds = array<i64: 1, 128>}, {pipeline_mode = #tpu.pipeline_mode<synchronous>, transform_indices = @transform_17, window_bounds = array<i64: 1, 128>}, {transform_indices = @transform_18, window_bounds = array<i64: 1, 16, 128>}]} {
    %0 = tpu.iota {dimensions = array<i32: 1>} : vector<1x128xi32>
    %c32_i32 = arith.constant 32 : i32
    %1 = vector.broadcast %c32_i32 : i32 to vector<1x128xi32>
    %2 = arith.cmpi slt, %0, %1 : vector<1x128xi32>
    %3 = arith.extui %2 : vector<1x128xi1> to vector<1x128xi32>
    %4 = arith.sitofp %3 : vector<1x128xi32> to vector<1x128xf32>
    %c0 = arith.constant 0 : index
    %c0_0 = arith.constant 0 : index
    %c0_1 = arith.constant 0 : index
    %5 = vector.load %arg1[%c0, %c0_0, %c0_1] : memref<1x16x256xf32, #tpu.memory_space<vmem>>, vector<1x16x256xf32>
    %6 = vector.shape_cast %5 : vector<1x16x256xf32> to vector<16x256xf32>
    %c0_2 = arith.constant 0 : index
    %c0_3 = arith.constant 0 : index
    %7 = vector.load %arg3[%c0_2, %c0_3] : memref<256x128xf32, #tpu.memory_space<vmem>>, vector<256x128xf32>
    %8 = arith.truncf %6 : vector<16x256xf32> to vector<16x256xbf16>
    %9 = arith.truncf %7 : vector<256x128xf32> to vector<256x128xbf16>
    %cst = arith.constant dense<0.000000e+00> : vector<16x128xf32>
    %10 = tpu.matmul %8, %9, %cst {dimension_numbers = #tpu.dot_dimension_numbers<[1], [0], [0], [1], [0, 0, 1, 1], [], []>} : vector<16x256xbf16>, vector<256x128xbf16>, vector<16x128xf32> -> vector<16x128xf32>
    %c0_4 = arith.constant 0 : index
    %c0_5 = arith.constant 0 : index
    %11 = vector.load %arg4[%c0_4, %c0_5] : memref<1x128xf32, #tpu.memory_space<vmem>>, vector<1x128xf32>
    %12 = vector.broadcast %11 : vector<1x128xf32> to vector<16x128xf32>
    %13 = arith.addf %10, %12 : vector<16x128xf32>
    %c0_6 = arith.constant 0 : index
    %c0_7 = arith.constant 0 : index
    %c0_8 = arith.constant 0 : index
    %14 = vector.load %arg2[%c0_6, %c0_7, %c0_8] : memref<1x16x128xf32, #tpu.memory_space<vmem>>, vector<1x16x128xf32>
    %15 = vector.shape_cast %14 : vector<1x16x128xf32> to vector<16x128xf32>
    %16 = arith.addf %13, %15 : vector<16x128xf32>
    %c0_9 = arith.constant 0 : index
    %c0_10 = arith.constant 0 : index
    %c0_11 = arith.constant 0 : index
    %17 = vector.load %arg5[%c0_9, %c0_10, %c0_11] : memref<2x1x128xf32, #tpu.memory_space<vmem>>, vector<1x1x128xf32>
    %18 = vector.shape_cast %17 : vector<1x1x128xf32> to vector<1x128xf32>
    %c0_12 = arith.constant 0 : index
    %c0_13 = arith.constant 0 : index
    %c0_14 = arith.constant 0 : index
    %19 = vector.load %arg6[%c0_12, %c0_13, %c0_14] : memref<2x1x128xf32, #tpu.memory_space<vmem>>, vector<1x1x128xf32>
    %20 = vector.shape_cast %19 : vector<1x1x128xf32> to vector<1x128xf32>
    %cst_15 = arith.constant dense<0.000000e+00> : vector<16xf32>
    %21 = vector.multi_reduction <add>, %16, %cst_15 [1] : vector<16x128xf32> to vector<16xf32>
    %22 = vector.shape_cast %21 : vector<16xf32> to vector<16x1xf32>
    %cst_16 = arith.constant 3.125000e-02 : f32
    %23 = vector.broadcast %cst_16 : f32 to vector<16x1xf32>
    %24 = arith.mulf %22, %23 : vector<16x1xf32>
    %25 = vector.broadcast %24 : vector<16x1xf32> to vector<16x128xf32>
    %26 = arith.subf %16, %25 : vector<16x128xf32>
    %27 = vector.broadcast %4 : vector<1x128xf32> to vector<16x128xf32>
    %28 = arith.mulf %26, %27 : vector<16x128xf32>
    %29 = arith.mulf %28, %28 : vector<16x128xf32>
    %cst_17 = arith.constant dense<0.000000e+00> : vector<16xf32>
    %30 = vector.multi_reduction <add>, %29, %cst_17 [1] : vector<16x128xf32> to vector<16xf32>
    %31 = vector.shape_cast %30 : vector<16xf32> to vector<16x1xf32>
    %cst_18 = arith.constant 3.125000e-02 : f32
    %32 = vector.broadcast %cst_18 : f32 to vector<16x1xf32>
    %33 = arith.mulf %31, %32 : vector<16x1xf32>
    %cst_19 = arith.constant 9.99999997E-7 : f32
    %34 = vector.broadcast %cst_19 : f32 to vector<16x1xf32>
    %35 = arith.addf %33, %34 : vector<16x1xf32>
    %36 = math.rsqrt %35 : vector<16x1xf32>
    %37 = vector.broadcast %36 : vector<16x1xf32> to vector<16x128xf32>
    %38 = arith.mulf %28, %37 : vector<16x128xf32>
    %39 = vector.broadcast %18 : vector<1x128xf32> to vector<16x128xf32>
    %40 = arith.mulf %38, %39 : vector<16x128xf32>
    %41 = vector.broadcast %20 : vector<1x128xf32> to vector<16x128xf32>
    %42 = arith.addf %40, %41 : vector<16x128xf32>
    %c0_20 = arith.constant 0 : index
    %c0_21 = arith.constant 0 : index
    %c0_22 = arith.constant 0 : index
    %43 = vector.load %arg7[%c0_20, %c0_21, %c0_22] : memref<2x128x384xf32, #tpu.memory_space<vmem>>, vector<1x128x384xf32>
    %44 = vector.shape_cast %43 : vector<1x128x384xf32> to vector<128x384xf32>
    %45 = arith.truncf %42 : vector<16x128xf32> to vector<16x128xbf16>
    %46 = arith.truncf %44 : vector<128x384xf32> to vector<128x384xbf16>
    %cst_23 = arith.constant dense<0.000000e+00> : vector<16x384xf32>
    %47 = tpu.matmul %45, %46, %cst_23 {dimension_numbers = #tpu.dot_dimension_numbers<[1], [0], [0], [1], [0, 0, 1, 1], [], []>} : vector<16x128xbf16>, vector<128x384xbf16>, vector<16x384xf32> -> vector<16x384xf32>
    %c0_24 = arith.constant 0 : index
    %c0_25 = arith.constant 0 : index
    %c0_26 = arith.constant 0 : index
    %48 = vector.load %arg8[%c0_24, %c0_25, %c0_26] : memref<2x1x384xf32, #tpu.memory_space<vmem>>, vector<1x1x384xf32>
    %49 = vector.shape_cast %48 : vector<1x1x384xf32> to vector<1x384xf32>
    %50 = vector.broadcast %49 : vector<1x384xf32> to vector<16x384xf32>
    %51 = arith.addf %47, %50 : vector<16x384xf32>
    %c0_27 = arith.constant 0 : index
    %c0_28 = arith.constant 0 : index
    %c0_29 = arith.constant 0 : index
    %52 = vector.load %arg9[%c0_27, %c0_28, %c0_29] : memref<2x128x128xf32, #tpu.memory_space<vmem>>, vector<1x128x128xf32>
    %53 = vector.shape_cast %52 : vector<1x128x128xf32> to vector<128x128xf32>
    %c0_30 = arith.constant 0 : index
    %c0_31 = arith.constant 0 : index
    %c0_32 = arith.constant 0 : index
    %54 = vector.load %arg10[%c0_30, %c0_31, %c0_32] : memref<2x1x128xf32, #tpu.memory_space<vmem>>, vector<1x1x128xf32>
    %55 = vector.shape_cast %54 : vector<1x1x128xf32> to vector<1x128xf32>
    %56 = vector.extract_strided_slice %51 {offsets = [0, 0], sizes = [16, 64], strides = [1, 1]} : vector<16x384xf32> to vector<16x64xf32>
    %57 = vector.extract_strided_slice %51 {offsets = [0, 128], sizes = [16, 64], strides = [1, 1]} : vector<16x384xf32> to vector<16x64xf32>
    %58 = vector.extract_strided_slice %51 {offsets = [0, 256], sizes = [16, 64], strides = [1, 1]} : vector<16x384xf32> to vector<16x64xf32>
    %59 = arith.truncf %56 : vector<16x64xf32> to vector<16x64xbf16>
    %60 = arith.truncf %57 : vector<16x64xf32> to vector<16x64xbf16>
    %cst_33 = arith.constant dense<0.000000e+00> : vector<16x16xf32>
    %61 = tpu.matmul %59, %60, %cst_33 {dimension_numbers = #tpu.dot_dimension_numbers<[1], [1], [0], [0], [0, 0, 1, 0], [], []>} : vector<16x64xbf16>, vector<16x64xbf16>, vector<16x16xf32> -> vector<16x16xf32>
    %cst_34 = arith.constant dense<0xFF800000> : vector<16xf32>
    %62 = vector.multi_reduction <maximumf>, %61, %cst_34 [1] : vector<16x16xf32> to vector<16xf32>
    %63 = vector.shape_cast %62 : vector<16xf32> to vector<16x1xf32>
    %64 = vector.broadcast %63 : vector<16x1xf32> to vector<16x16xf32>
    %65 = arith.subf %61, %64 : vector<16x16xf32>
    %66 = math.exp %65 : vector<16x16xf32>
    %cst_35 = arith.constant dense<0.000000e+00> : vector<16xf32>
    %67 = vector.multi_reduction <add>, %66, %cst_35 [1] : vector<16x16xf32> to vector<16xf32>
    %68 = vector.shape_cast %67 : vector<16xf32> to vector<16x1xf32>
    %69 = tpu.reciprocal %68 {approx = true} : vector<16x1xf32> -> vector<16x1xf32>
    %70 = vector.broadcast %69 : vector<16x1xf32> to vector<16x16xf32>
    %71 = arith.mulf %66, %70 : vector<16x16xf32>
    %72 = arith.truncf %71 : vector<16x16xf32> to vector<16x16xbf16>
    %73 = arith.truncf %58 : vector<16x64xf32> to vector<16x64xbf16>
    %cst_36 = arith.constant dense<0.000000e+00> : vector<16x64xf32>
    %74 = tpu.matmul %72, %73, %cst_36 {dimension_numbers = #tpu.dot_dimension_numbers<[1], [0], [0], [1], [0, 0, 1, 1], [], []>} : vector<16x16xbf16>, vector<16x64xbf16>, vector<16x64xf32> -> vector<16x64xf32>
    %75 = vector.extract_strided_slice %53 {offsets = [0, 0], sizes = [64, 128], strides = [1, 1]} : vector<128x128xf32> to vector<64x128xf32>
    %76 = arith.truncf %74 : vector<16x64xf32> to vector<16x64xbf16>
    %77 = arith.truncf %75 : vector<64x128xf32> to vector<64x128xbf16>
    %cst_37 = arith.constant dense<0.000000e+00> : vector<16x128xf32>
    %78 = tpu.matmul %76, %77, %cst_37 {dimension_numbers = #tpu.dot_dimension_numbers<[1], [0], [0], [1], [0, 0, 1, 1], [], []>} : vector<16x64xbf16>, vector<64x128xbf16>, vector<16x128xf32> -> vector<16x128xf32>
    %79 = vector.broadcast %55 : vector<1x128xf32> to vector<16x128xf32>
    %80 = arith.addf %79, %78 : vector<16x128xf32>
    %81 = vector.extract_strided_slice %51 {offsets = [0, 64], sizes = [16, 64], strides = [1, 1]} : vector<16x384xf32> to vector<16x64xf32>
    %82 = vector.extract_strided_slice %51 {offsets = [0, 192], sizes = [16, 64], strides = [1, 1]} : vector<16x384xf32> to vector<16x64xf32>
    %83 = vector.extract_strided_slice %51 {offsets = [0, 320], sizes = [16, 64], strides = [1, 1]} : vector<16x384xf32> to vector<16x64xf32>
    %84 = arith.truncf %81 : vector<16x64xf32> to vector<16x64xbf16>
    %85 = arith.truncf %82 : vector<16x64xf32> to vector<16x64xbf16>
    %cst_38 = arith.constant dense<0.000000e+00> : vector<16x16xf32>
    %86 = tpu.matmul %84, %85, %cst_38 {dimension_numbers = #tpu.dot_dimension_numbers<[1], [1], [0], [0], [0, 0, 1, 0], [], []>} : vector<16x64xbf16>, vector<16x64xbf16>, vector<16x16xf32> -> vector<16x16xf32>
    %cst_39 = arith.constant dense<0xFF800000> : vector<16xf32>
    %87 = vector.multi_reduction <maximumf>, %86, %cst_39 [1] : vector<16x16xf32> to vector<16xf32>
    %88 = vector.shape_cast %87 : vector<16xf32> to vector<16x1xf32>
    %89 = vector.broadcast %88 : vector<16x1xf32> to vector<16x16xf32>
    %90 = arith.subf %86, %89 : vector<16x16xf32>
    %91 = math.exp %90 : vector<16x16xf32>
    %cst_40 = arith.constant dense<0.000000e+00> : vector<16xf32>
    %92 = vector.multi_reduction <add>, %91, %cst_40 [1] : vector<16x16xf32> to vector<16xf32>
    %93 = vector.shape_cast %92 : vector<16xf32> to vector<16x1xf32>
    %94 = tpu.reciprocal %93 {approx = true} : vector<16x1xf32> -> vector<16x1xf32>
    %95 = vector.broadcast %94 : vector<16x1xf32> to vector<16x16xf32>
    %96 = arith.mulf %91, %95 : vector<16x16xf32>
    %97 = arith.truncf %96 : vector<16x16xf32> to vector<16x16xbf16>
    %98 = arith.truncf %83 : vector<16x64xf32> to vector<16x64xbf16>
    %cst_41 = arith.constant dense<0.000000e+00> : vector<16x64xf32>
    %99 = tpu.matmul %97, %98, %cst_41 {dimension_numbers = #tpu.dot_dimension_numbers<[1], [0], [0], [1], [0, 0, 1, 1], [], []>} : vector<16x16xbf16>, vector<16x64xbf16>, vector<16x64xf32> -> vector<16x64xf32>
    %100 = vector.extract_strided_slice %53 {offsets = [64, 0], sizes = [64, 128], strides = [1, 1]} : vector<128x128xf32> to vector<64x128xf32>
    %101 = arith.truncf %99 : vector<16x64xf32> to vector<16x64xbf16>
    %102 = arith.truncf %100 : vector<64x128xf32> to vector<64x128xbf16>
    %cst_42 = arith.constant dense<0.000000e+00> : vector<16x128xf32>
    %103 = tpu.matmul %101, %102, %cst_42 {dimension_numbers = #tpu.dot_dimension_numbers<[1], [0], [0], [1], [0, 0, 1, 1], [], []>} : vector<16x64xbf16>, vector<64x128xbf16>, vector<16x128xf32> -> vector<16x128xf32>
    %104 = arith.addf %80, %103 : vector<16x128xf32>
    %105 = arith.addf %16, %104 : vector<16x128xf32>
    %c0_43 = arith.constant 0 : index
    %c0_44 = arith.constant 0 : index
    %c0_45 = arith.constant 0 : index
    %106 = vector.load %arg11[%c0_43, %c0_44, %c0_45] : memref<2x1x128xf32, #tpu.memory_space<vmem>>, vector<1x1x128xf32>
    %107 = vector.shape_cast %106 : vector<1x1x128xf32> to vector<1x128xf32>
    %c0_46 = arith.constant 0 : index
    %c0_47 = arith.constant 0 : index
    %c0_48 = arith.constant 0 : index
    %108 = vector.load %arg12[%c0_46, %c0_47, %c0_48] : memref<2x1x128xf32, #tpu.memory_space<vmem>>, vector<1x1x128xf32>
    %109 = vector.shape_cast %108 : vector<1x1x128xf32> to vector<1x128xf32>
    %cst_49 = arith.constant dense<0.000000e+00> : vector<16xf32>
    %110 = vector.multi_reduction <add>, %105, %cst_49 [1] : vector<16x128xf32> to vector<16xf32>
    %111 = vector.shape_cast %110 : vector<16xf32> to vector<16x1xf32>
    %cst_50 = arith.constant 3.125000e-02 : f32
    %112 = vector.broadcast %cst_50 : f32 to vector<16x1xf32>
    %113 = arith.mulf %111, %112 : vector<16x1xf32>
    %114 = vector.broadcast %113 : vector<16x1xf32> to vector<16x128xf32>
    %115 = arith.subf %105, %114 : vector<16x128xf32>
    %116 = vector.broadcast %4 : vector<1x128xf32> to vector<16x128xf32>
    %117 = arith.mulf %115, %116 : vector<16x128xf32>
    %118 = arith.mulf %117, %117 : vector<16x128xf32>
    %cst_51 = arith.constant dense<0.000000e+00> : vector<16xf32>
    %119 = vector.multi_reduction <add>, %118, %cst_51 [1] : vector<16x128xf32> to vector<16xf32>
    %120 = vector.shape_cast %119 : vector<16xf32> to vector<16x1xf32>
    %cst_52 = arith.constant 3.125000e-02 : f32
    %121 = vector.broadcast %cst_52 : f32 to vector<16x1xf32>
    %122 = arith.mulf %120, %121 : vector<16x1xf32>
    %cst_53 = arith.constant 9.99999997E-7 : f32
    %123 = vector.broadcast %cst_53 : f32 to vector<16x1xf32>
    %124 = arith.addf %122, %123 : vector<16x1xf32>
    %125 = math.rsqrt %124 : vector<16x1xf32>
    %126 = vector.broadcast %125 : vector<16x1xf32> to vector<16x128xf32>
    %127 = arith.mulf %117, %126 : vector<16x128xf32>
    %128 = vector.broadcast %107 : vector<1x128xf32> to vector<16x128xf32>
    %129 = arith.mulf %127, %128 : vector<16x128xf32>
    %130 = vector.broadcast %109 : vector<1x128xf32> to vector<16x128xf32>
    %131 = arith.addf %129, %130 : vector<16x128xf32>
    %c0_54 = arith.constant 0 : index
    %c0_55 = arith.constant 0 : index
    %c0_56 = arith.constant 0 : index
    %132 = vector.load %arg13[%c0_54, %c0_55, %c0_56] : memref<2x128x128xf32, #tpu.memory_space<vmem>>, vector<1x128x128xf32>
    %133 = vector.shape_cast %132 : vector<1x128x128xf32> to vector<128x128xf32>
    %134 = arith.truncf %131 : vector<16x128xf32> to vector<16x128xbf16>
    %135 = arith.truncf %133 : vector<128x128xf32> to vector<128x128xbf16>
    %cst_57 = arith.constant dense<0.000000e+00> : vector<16x128xf32>
    %136 = tpu.matmul %134, %135, %cst_57 {dimension_numbers = #tpu.dot_dimension_numbers<[1], [0], [0], [1], [0, 0, 1, 1], [], []>} : vector<16x128xbf16>, vector<128x128xbf16>, vector<16x128xf32> -> vector<16x128xf32>
    %c0_58 = arith.constant 0 : index
    %c0_59 = arith.constant 0 : index
    %c0_60 = arith.constant 0 : index
    %137 = vector.load %arg14[%c0_58, %c0_59, %c0_60] : memref<2x1x128xf32, #tpu.memory_space<vmem>>, vector<1x1x128xf32>
    %138 = vector.shape_cast %137 : vector<1x1x128xf32> to vector<1x128xf32>
    %139 = vector.broadcast %138 : vector<1x128xf32> to vector<16x128xf32>
    %140 = arith.addf %136, %139 : vector<16x128xf32>
    %cst_61 = arith.constant 5.000000e-01 : f32
    %141 = vector.broadcast %cst_61 : f32 to vector<16x128xf32>
    %142 = arith.mulf %141, %140 : vector<16x128xf32>
    %cst_62 = arith.constant 4.471500e-02 : f32
    %143 = vector.broadcast %cst_62 : f32 to vector<16x128xf32>
    %144 = arith.mulf %143, %140 : vector<16x128xf32>
    %145 = arith.mulf %144, %140 : vector<16x128xf32>
    %146 = arith.mulf %145, %140 : vector<16x128xf32>
    %147 = arith.addf %140, %146 : vector<16x128xf32>
    %cst_63 = arith.constant 0.797884583 : f32
    %148 = vector.broadcast %cst_63 : f32 to vector<16x128xf32>
    %149 = arith.mulf %148, %147 : vector<16x128xf32>
    %150 = math.tanh %149 : vector<16x128xf32>
    %cst_64 = arith.constant 1.000000e+00 : f32
    %151 = vector.broadcast %cst_64 : f32 to vector<16x128xf32>
    %152 = arith.addf %151, %150 : vector<16x128xf32>
    %153 = arith.mulf %142, %152 : vector<16x128xf32>
    %c0_65 = arith.constant 0 : index
    %c0_66 = arith.constant 0 : index
    %c0_67 = arith.constant 0 : index
    %154 = vector.load %arg15[%c0_65, %c0_66, %c0_67] : memref<2x128x128xf32, #tpu.memory_space<vmem>>, vector<1x128x128xf32>
    %155 = vector.shape_cast %154 : vector<1x128x128xf32> to vector<128x128xf32>
    %156 = arith.truncf %153 : vector<16x128xf32> to vector<16x128xbf16>
    %157 = arith.truncf %155 : vector<128x128xf32> to vector<128x128xbf16>
    %cst_68 = arith.constant dense<0.000000e+00> : vector<16x128xf32>
    %158 = tpu.matmul %156, %157, %cst_68 {dimension_numbers = #tpu.dot_dimension_numbers<[1], [0], [0], [1], [0, 0, 1, 1], [], []>} : vector<16x128xbf16>, vector<128x128xbf16>, vector<16x128xf32> -> vector<16x128xf32>
    %c0_69 = arith.constant 0 : index
    %c0_70 = arith.constant 0 : index
    %c0_71 = arith.constant 0 : index
    %159 = vector.load %arg16[%c0_69, %c0_70, %c0_71] : memref<2x1x128xf32, #tpu.memory_space<vmem>>, vector<1x1x128xf32>
    %160 = vector.shape_cast %159 : vector<1x1x128xf32> to vector<1x128xf32>
    %161 = vector.broadcast %160 : vector<1x128xf32> to vector<16x128xf32>
    %162 = arith.addf %158, %161 : vector<16x128xf32>
    %163 = arith.addf %105, %162 : vector<16x128xf32>
    %c1 = arith.constant 1 : index
    %c0_72 = arith.constant 0 : index
    %c0_73 = arith.constant 0 : index
    %164 = vector.load %arg5[%c1, %c0_72, %c0_73] : memref<2x1x128xf32, #tpu.memory_space<vmem>>, vector<1x1x128xf32>
    %165 = vector.shape_cast %164 : vector<1x1x128xf32> to vector<1x128xf32>
    %c1_74 = arith.constant 1 : index
    %c0_75 = arith.constant 0 : index
    %c0_76 = arith.constant 0 : index
    %166 = vector.load %arg6[%c1_74, %c0_75, %c0_76] : memref<2x1x128xf32, #tpu.memory_space<vmem>>, vector<1x1x128xf32>
    %167 = vector.shape_cast %166 : vector<1x1x128xf32> to vector<1x128xf32>
    %cst_77 = arith.constant dense<0.000000e+00> : vector<16xf32>
    %168 = vector.multi_reduction <add>, %163, %cst_77 [1] : vector<16x128xf32> to vector<16xf32>
    %169 = vector.shape_cast %168 : vector<16xf32> to vector<16x1xf32>
    %cst_78 = arith.constant 3.125000e-02 : f32
    %170 = vector.broadcast %cst_78 : f32 to vector<16x1xf32>
    %171 = arith.mulf %169, %170 : vector<16x1xf32>
    %172 = vector.broadcast %171 : vector<16x1xf32> to vector<16x128xf32>
    %173 = arith.subf %163, %172 : vector<16x128xf32>
    %174 = vector.broadcast %4 : vector<1x128xf32> to vector<16x128xf32>
    %175 = arith.mulf %173, %174 : vector<16x128xf32>
    %176 = arith.mulf %175, %175 : vector<16x128xf32>
    %cst_79 = arith.constant dense<0.000000e+00> : vector<16xf32>
    %177 = vector.multi_reduction <add>, %176, %cst_79 [1] : vector<16x128xf32> to vector<16xf32>
    %178 = vector.shape_cast %177 : vector<16xf32> to vector<16x1xf32>
    %cst_80 = arith.constant 3.125000e-02 : f32
    %179 = vector.broadcast %cst_80 : f32 to vector<16x1xf32>
    %180 = arith.mulf %178, %179 : vector<16x1xf32>
    %cst_81 = arith.constant 9.99999997E-7 : f32
    %181 = vector.broadcast %cst_81 : f32 to vector<16x1xf32>
    %182 = arith.addf %180, %181 : vector<16x1xf32>
    %183 = math.rsqrt %182 : vector<16x1xf32>
    %184 = vector.broadcast %183 : vector<16x1xf32> to vector<16x128xf32>
    %185 = arith.mulf %175, %184 : vector<16x128xf32>
    %186 = vector.broadcast %165 : vector<1x128xf32> to vector<16x128xf32>
    %187 = arith.mulf %185, %186 : vector<16x128xf32>
    %188 = vector.broadcast %167 : vector<1x128xf32> to vector<16x128xf32>
    %189 = arith.addf %187, %188 : vector<16x128xf32>
    %c1_82 = arith.constant 1 : index
    %c0_83 = arith.constant 0 : index
    %c0_84 = arith.constant 0 : index
    %190 = vector.load %arg7[%c1_82, %c0_83, %c0_84] : memref<2x128x384xf32, #tpu.memory_space<vmem>>, vector<1x128x384xf32>
    %191 = vector.shape_cast %190 : vector<1x128x384xf32> to vector<128x384xf32>
    %192 = arith.truncf %189 : vector<16x128xf32> to vector<16x128xbf16>
    %193 = arith.truncf %191 : vector<128x384xf32> to vector<128x384xbf16>
    %cst_85 = arith.constant dense<0.000000e+00> : vector<16x384xf32>
    %194 = tpu.matmul %192, %193, %cst_85 {dimension_numbers = #tpu.dot_dimension_numbers<[1], [0], [0], [1], [0, 0, 1, 1], [], []>} : vector<16x128xbf16>, vector<128x384xbf16>, vector<16x384xf32> -> vector<16x384xf32>
    %c1_86 = arith.constant 1 : index
    %c0_87 = arith.constant 0 : index
    %c0_88 = arith.constant 0 : index
    %195 = vector.load %arg8[%c1_86, %c0_87, %c0_88] : memref<2x1x384xf32, #tpu.memory_space<vmem>>, vector<1x1x384xf32>
    %196 = vector.shape_cast %195 : vector<1x1x384xf32> to vector<1x384xf32>
    %197 = vector.broadcast %196 : vector<1x384xf32> to vector<16x384xf32>
    %198 = arith.addf %194, %197 : vector<16x384xf32>
    %c1_89 = arith.constant 1 : index
    %c0_90 = arith.constant 0 : index
    %c0_91 = arith.constant 0 : index
    %199 = vector.load %arg9[%c1_89, %c0_90, %c0_91] : memref<2x128x128xf32, #tpu.memory_space<vmem>>, vector<1x128x128xf32>
    %200 = vector.shape_cast %199 : vector<1x128x128xf32> to vector<128x128xf32>
    %c1_92 = arith.constant 1 : index
    %c0_93 = arith.constant 0 : index
    %c0_94 = arith.constant 0 : index
    %201 = vector.load %arg10[%c1_92, %c0_93, %c0_94] : memref<2x1x128xf32, #tpu.memory_space<vmem>>, vector<1x1x128xf32>
    %202 = vector.shape_cast %201 : vector<1x1x128xf32> to vector<1x128xf32>
    %203 = vector.extract_strided_slice %198 {offsets = [0, 0], sizes = [16, 64], strides = [1, 1]} : vector<16x384xf32> to vector<16x64xf32>
    %204 = vector.extract_strided_slice %198 {offsets = [0, 128], sizes = [16, 64], strides = [1, 1]} : vector<16x384xf32> to vector<16x64xf32>
    %205 = vector.extract_strided_slice %198 {offsets = [0, 256], sizes = [16, 64], strides = [1, 1]} : vector<16x384xf32> to vector<16x64xf32>
    %206 = arith.truncf %203 : vector<16x64xf32> to vector<16x64xbf16>
    %207 = arith.truncf %204 : vector<16x64xf32> to vector<16x64xbf16>
    %cst_95 = arith.constant dense<0.000000e+00> : vector<16x16xf32>
    %208 = tpu.matmul %206, %207, %cst_95 {dimension_numbers = #tpu.dot_dimension_numbers<[1], [1], [0], [0], [0, 0, 1, 0], [], []>} : vector<16x64xbf16>, vector<16x64xbf16>, vector<16x16xf32> -> vector<16x16xf32>
    %cst_96 = arith.constant dense<0xFF800000> : vector<16xf32>
    %209 = vector.multi_reduction <maximumf>, %208, %cst_96 [1] : vector<16x16xf32> to vector<16xf32>
    %210 = vector.shape_cast %209 : vector<16xf32> to vector<16x1xf32>
    %211 = vector.broadcast %210 : vector<16x1xf32> to vector<16x16xf32>
    %212 = arith.subf %208, %211 : vector<16x16xf32>
    %213 = math.exp %212 : vector<16x16xf32>
    %cst_97 = arith.constant dense<0.000000e+00> : vector<16xf32>
    %214 = vector.multi_reduction <add>, %213, %cst_97 [1] : vector<16x16xf32> to vector<16xf32>
    %215 = vector.shape_cast %214 : vector<16xf32> to vector<16x1xf32>
    %216 = tpu.reciprocal %215 {approx = true} : vector<16x1xf32> -> vector<16x1xf32>
    %217 = vector.broadcast %216 : vector<16x1xf32> to vector<16x16xf32>
    %218 = arith.mulf %213, %217 : vector<16x16xf32>
    %219 = arith.truncf %218 : vector<16x16xf32> to vector<16x16xbf16>
    %220 = arith.truncf %205 : vector<16x64xf32> to vector<16x64xbf16>
    %cst_98 = arith.constant dense<0.000000e+00> : vector<16x64xf32>
    %221 = tpu.matmul %219, %220, %cst_98 {dimension_numbers = #tpu.dot_dimension_numbers<[1], [0], [0], [1], [0, 0, 1, 1], [], []>} : vector<16x16xbf16>, vector<16x64xbf16>, vector<16x64xf32> -> vector<16x64xf32>
    %222 = vector.extract_strided_slice %200 {offsets = [0, 0], sizes = [64, 128], strides = [1, 1]} : vector<128x128xf32> to vector<64x128xf32>
    %223 = arith.truncf %221 : vector<16x64xf32> to vector<16x64xbf16>
    %224 = arith.truncf %222 : vector<64x128xf32> to vector<64x128xbf16>
    %cst_99 = arith.constant dense<0.000000e+00> : vector<16x128xf32>
    %225 = tpu.matmul %223, %224, %cst_99 {dimension_numbers = #tpu.dot_dimension_numbers<[1], [0], [0], [1], [0, 0, 1, 1], [], []>} : vector<16x64xbf16>, vector<64x128xbf16>, vector<16x128xf32> -> vector<16x128xf32>
    %226 = vector.broadcast %202 : vector<1x128xf32> to vector<16x128xf32>
    %227 = arith.addf %226, %225 : vector<16x128xf32>
    %228 = vector.extract_strided_slice %198 {offsets = [0, 64], sizes = [16, 64], strides = [1, 1]} : vector<16x384xf32> to vector<16x64xf32>
    %229 = vector.extract_strided_slice %198 {offsets = [0, 192], sizes = [16, 64], strides = [1, 1]} : vector<16x384xf32> to vector<16x64xf32>
    %230 = vector.extract_strided_slice %198 {offsets = [0, 320], sizes = [16, 64], strides = [1, 1]} : vector<16x384xf32> to vector<16x64xf32>
    %231 = arith.truncf %228 : vector<16x64xf32> to vector<16x64xbf16>
    %232 = arith.truncf %229 : vector<16x64xf32> to vector<16x64xbf16>
    %cst_100 = arith.constant dense<0.000000e+00> : vector<16x16xf32>
    %233 = tpu.matmul %231, %232, %cst_100 {dimension_numbers = #tpu.dot_dimension_numbers<[1], [1], [0], [0], [0, 0, 1, 0], [], []>} : vector<16x64xbf16>, vector<16x64xbf16>, vector<16x16xf32> -> vector<16x16xf32>
    %cst_101 = arith.constant dense<0xFF800000> : vector<16xf32>
    %234 = vector.multi_reduction <maximumf>, %233, %cst_101 [1] : vector<16x16xf32> to vector<16xf32>
    %235 = vector.shape_cast %234 : vector<16xf32> to vector<16x1xf32>
    %236 = vector.broadcast %235 : vector<16x1xf32> to vector<16x16xf32>
    %237 = arith.subf %233, %236 : vector<16x16xf32>
    %238 = math.exp %237 : vector<16x16xf32>
    %cst_102 = arith.constant dense<0.000000e+00> : vector<16xf32>
    %239 = vector.multi_reduction <add>, %238, %cst_102 [1] : vector<16x16xf32> to vector<16xf32>
    %240 = vector.shape_cast %239 : vector<16xf32> to vector<16x1xf32>
    %241 = tpu.reciprocal %240 {approx = true} : vector<16x1xf32> -> vector<16x1xf32>
    %242 = vector.broadcast %241 : vector<16x1xf32> to vector<16x16xf32>
    %243 = arith.mulf %238, %242 : vector<16x16xf32>
    %244 = arith.truncf %243 : vector<16x16xf32> to vector<16x16xbf16>
    %245 = arith.truncf %230 : vector<16x64xf32> to vector<16x64xbf16>
    %cst_103 = arith.constant dense<0.000000e+00> : vector<16x64xf32>
    %246 = tpu.matmul %244, %245, %cst_103 {dimension_numbers = #tpu.dot_dimension_numbers<[1], [0], [0], [1], [0, 0, 1, 1], [], []>} : vector<16x16xbf16>, vector<16x64xbf16>, vector<16x64xf32> -> vector<16x64xf32>
    %247 = vector.extract_strided_slice %200 {offsets = [64, 0], sizes = [64, 128], strides = [1, 1]} : vector<128x128xf32> to vector<64x128xf32>
    %248 = arith.truncf %246 : vector<16x64xf32> to vector<16x64xbf16>
    %249 = arith.truncf %247 : vector<64x128xf32> to vector<64x128xbf16>
    %cst_104 = arith.constant dense<0.000000e+00> : vector<16x128xf32>
    %250 = tpu.matmul %248, %249, %cst_104 {dimension_numbers = #tpu.dot_dimension_numbers<[1], [0], [0], [1], [0, 0, 1, 1], [], []>} : vector<16x64xbf16>, vector<64x128xbf16>, vector<16x128xf32> -> vector<16x128xf32>
    %251 = arith.addf %227, %250 : vector<16x128xf32>
    %252 = arith.addf %163, %251 : vector<16x128xf32>
    %c1_105 = arith.constant 1 : index
    %c0_106 = arith.constant 0 : index
    %c0_107 = arith.constant 0 : index
    %253 = vector.load %arg11[%c1_105, %c0_106, %c0_107] : memref<2x1x128xf32, #tpu.memory_space<vmem>>, vector<1x1x128xf32>
    %254 = vector.shape_cast %253 : vector<1x1x128xf32> to vector<1x128xf32>
    %c1_108 = arith.constant 1 : index
    %c0_109 = arith.constant 0 : index
    %c0_110 = arith.constant 0 : index
    %255 = vector.load %arg12[%c1_108, %c0_109, %c0_110] : memref<2x1x128xf32, #tpu.memory_space<vmem>>, vector<1x1x128xf32>
    %256 = vector.shape_cast %255 : vector<1x1x128xf32> to vector<1x128xf32>
    %cst_111 = arith.constant dense<0.000000e+00> : vector<16xf32>
    %257 = vector.multi_reduction <add>, %252, %cst_111 [1] : vector<16x128xf32> to vector<16xf32>
    %258 = vector.shape_cast %257 : vector<16xf32> to vector<16x1xf32>
    %cst_112 = arith.constant 3.125000e-02 : f32
    %259 = vector.broadcast %cst_112 : f32 to vector<16x1xf32>
    %260 = arith.mulf %258, %259 : vector<16x1xf32>
    %261 = vector.broadcast %260 : vector<16x1xf32> to vector<16x128xf32>
    %262 = arith.subf %252, %261 : vector<16x128xf32>
    %263 = vector.broadcast %4 : vector<1x128xf32> to vector<16x128xf32>
    %264 = arith.mulf %262, %263 : vector<16x128xf32>
    %265 = arith.mulf %264, %264 : vector<16x128xf32>
    %cst_113 = arith.constant dense<0.000000e+00> : vector<16xf32>
    %266 = vector.multi_reduction <add>, %265, %cst_113 [1] : vector<16x128xf32> to vector<16xf32>
    %267 = vector.shape_cast %266 : vector<16xf32> to vector<16x1xf32>
    %cst_114 = arith.constant 3.125000e-02 : f32
    %268 = vector.broadcast %cst_114 : f32 to vector<16x1xf32>
    %269 = arith.mulf %267, %268 : vector<16x1xf32>
    %cst_115 = arith.constant 9.99999997E-7 : f32
    %270 = vector.broadcast %cst_115 : f32 to vector<16x1xf32>
    %271 = arith.addf %269, %270 : vector<16x1xf32>
    %272 = math.rsqrt %271 : vector<16x1xf32>
    %273 = vector.broadcast %272 : vector<16x1xf32> to vector<16x128xf32>
    %274 = arith.mulf %264, %273 : vector<16x128xf32>
    %275 = vector.broadcast %254 : vector<1x128xf32> to vector<16x128xf32>
    %276 = arith.mulf %274, %275 : vector<16x128xf32>
    %277 = vector.broadcast %256 : vector<1x128xf32> to vector<16x128xf32>
    %278 = arith.addf %276, %277 : vector<16x128xf32>
    %c1_116 = arith.constant 1 : index
    %c0_117 = arith.constant 0 : index
    %c0_118 = arith.constant 0 : index
    %279 = vector.load %arg13[%c1_116, %c0_117, %c0_118] : memref<2x128x128xf32, #tpu.memory_space<vmem>>, vector<1x128x128xf32>
    %280 = vector.shape_cast %279 : vector<1x128x128xf32> to vector<128x128xf32>
    %281 = arith.truncf %278 : vector<16x128xf32> to vector<16x128xbf16>
    %282 = arith.truncf %280 : vector<128x128xf32> to vector<128x128xbf16>
    %cst_119 = arith.constant dense<0.000000e+00> : vector<16x128xf32>
    %283 = tpu.matmul %281, %282, %cst_119 {dimension_numbers = #tpu.dot_dimension_numbers<[1], [0], [0], [1], [0, 0, 1, 1], [], []>} : vector<16x128xbf16>, vector<128x128xbf16>, vector<16x128xf32> -> vector<16x128xf32>
    %c1_120 = arith.constant 1 : index
    %c0_121 = arith.constant 0 : index
    %c0_122 = arith.constant 0 : index
    %284 = vector.load %arg14[%c1_120, %c0_121, %c0_122] : memref<2x1x128xf32, #tpu.memory_space<vmem>>, vector<1x1x128xf32>
    %285 = vector.shape_cast %284 : vector<1x1x128xf32> to vector<1x128xf32>
    %286 = vector.broadcast %285 : vector<1x128xf32> to vector<16x128xf32>
    %287 = arith.addf %283, %286 : vector<16x128xf32>
    %cst_123 = arith.constant 5.000000e-01 : f32
    %288 = vector.broadcast %cst_123 : f32 to vector<16x128xf32>
    %289 = arith.mulf %288, %287 : vector<16x128xf32>
    %cst_124 = arith.constant 4.471500e-02 : f32
    %290 = vector.broadcast %cst_124 : f32 to vector<16x128xf32>
    %291 = arith.mulf %290, %287 : vector<16x128xf32>
    %292 = arith.mulf %291, %287 : vector<16x128xf32>
    %293 = arith.mulf %292, %287 : vector<16x128xf32>
    %294 = arith.addf %287, %293 : vector<16x128xf32>
    %cst_125 = arith.constant 0.797884583 : f32
    %295 = vector.broadcast %cst_125 : f32 to vector<16x128xf32>
    %296 = arith.mulf %295, %294 : vector<16x128xf32>
    %297 = math.tanh %296 : vector<16x128xf32>
    %cst_126 = arith.constant 1.000000e+00 : f32
    %298 = vector.broadcast %cst_126 : f32 to vector<16x128xf32>
    %299 = arith.addf %298, %297 : vector<16x128xf32>
    %300 = arith.mulf %289, %299 : vector<16x128xf32>
    %c1_127 = arith.constant 1 : index
    %c0_128 = arith.constant 0 : index
    %c0_129 = arith.constant 0 : index
    %301 = vector.load %arg15[%c1_127, %c0_128, %c0_129] : memref<2x128x128xf32, #tpu.memory_space<vmem>>, vector<1x128x128xf32>
    %302 = vector.shape_cast %301 : vector<1x128x128xf32> to vector<128x128xf32>
    %303 = arith.truncf %300 : vector<16x128xf32> to vector<16x128xbf16>
    %304 = arith.truncf %302 : vector<128x128xf32> to vector<128x128xbf16>
    %cst_130 = arith.constant dense<0.000000e+00> : vector<16x128xf32>
    %305 = tpu.matmul %303, %304, %cst_130 {dimension_numbers = #tpu.dot_dimension_numbers<[1], [0], [0], [1], [0, 0, 1, 1], [], []>} : vector<16x128xbf16>, vector<128x128xbf16>, vector<16x128xf32> -> vector<16x128xf32>
    %c1_131 = arith.constant 1 : index
    %c0_132 = arith.constant 0 : index
    %c0_133 = arith.constant 0 : index
    %306 = vector.load %arg16[%c1_131, %c0_132, %c0_133] : memref<2x1x128xf32, #tpu.memory_space<vmem>>, vector<1x1x128xf32>
    %307 = vector.shape_cast %306 : vector<1x1x128xf32> to vector<1x128xf32>
    %308 = vector.broadcast %307 : vector<1x128xf32> to vector<16x128xf32>
    %309 = arith.addf %305, %308 : vector<16x128xf32>
    %310 = arith.addf %252, %309 : vector<16x128xf32>
    %c0_134 = arith.constant 0 : index
    %c0_135 = arith.constant 0 : index
    %311 = vector.load %arg17[%c0_134, %c0_135] : memref<1x128xf32, #tpu.memory_space<vmem>>, vector<1x128xf32>
    %c0_136 = arith.constant 0 : index
    %c0_137 = arith.constant 0 : index
    %312 = vector.load %arg18[%c0_136, %c0_137] : memref<1x128xf32, #tpu.memory_space<vmem>>, vector<1x128xf32>
    %cst_138 = arith.constant dense<0.000000e+00> : vector<16xf32>
    %313 = vector.multi_reduction <add>, %310, %cst_138 [1] : vector<16x128xf32> to vector<16xf32>
    %314 = vector.shape_cast %313 : vector<16xf32> to vector<16x1xf32>
    %cst_139 = arith.constant 3.125000e-02 : f32
    %315 = vector.broadcast %cst_139 : f32 to vector<16x1xf32>
    %316 = arith.mulf %314, %315 : vector<16x1xf32>
    %317 = vector.broadcast %316 : vector<16x1xf32> to vector<16x128xf32>
    %318 = arith.subf %310, %317 : vector<16x128xf32>
    %319 = vector.broadcast %4 : vector<1x128xf32> to vector<16x128xf32>
    %320 = arith.mulf %318, %319 : vector<16x128xf32>
    %321 = arith.mulf %320, %320 : vector<16x128xf32>
    %cst_140 = arith.constant dense<0.000000e+00> : vector<16xf32>
    %322 = vector.multi_reduction <add>, %321, %cst_140 [1] : vector<16x128xf32> to vector<16xf32>
    %323 = vector.shape_cast %322 : vector<16xf32> to vector<16x1xf32>
    %cst_141 = arith.constant 3.125000e-02 : f32
    %324 = vector.broadcast %cst_141 : f32 to vector<16x1xf32>
    %325 = arith.mulf %323, %324 : vector<16x1xf32>
    %cst_142 = arith.constant 9.99999997E-7 : f32
    %326 = vector.broadcast %cst_142 : f32 to vector<16x1xf32>
    %327 = arith.addf %325, %326 : vector<16x1xf32>
    %328 = math.rsqrt %327 : vector<16x1xf32>
    %329 = vector.broadcast %328 : vector<16x1xf32> to vector<16x128xf32>
    %330 = arith.mulf %320, %329 : vector<16x128xf32>
    %331 = vector.broadcast %311 : vector<1x128xf32> to vector<16x128xf32>
    %332 = arith.mulf %330, %331 : vector<16x128xf32>
    %333 = vector.broadcast %312 : vector<1x128xf32> to vector<16x128xf32>
    %334 = arith.addf %332, %333 : vector<16x128xf32>
    %c0_143 = arith.constant 0 : index
    %c0_144 = arith.constant 0 : index
    %c0_145 = arith.constant 0 : index
    %335 = vector.load %arg19[%c0_143, %c0_144, %c0_145] : memref<1x16x128xf32, #tpu.memory_space<vmem>>, vector<1x16x128xf32>
    %336 = vector.shape_cast %335 : vector<1x16x128xf32> to vector<16x128xf32>
    %337 = vector.shape_cast %334 : vector<16x128xf32> to vector<1x16x128xf32>
    tpu.vector_store %arg19[%c0_143, %c0_144, %c0_145], %337 {strides = array<i32>} : memref<1x16x128xf32, #tpu.memory_space<vmem>>, vector<1x16x128xf32>,
    return
  }
  func.func @transform_0(%arg0: i32) -> (i32, i32, i32) {
    %c0_i32 = arith.constant 0 : i32
    %c0_i32_0 = arith.constant 0 : i32
    %c0_i32_1 = arith.constant 0 : i32
    return %arg0, %c0_i32, %c0_i32_0 : i32, i32, i32
  }
  func.func @transform_1(%arg0: i32) -> (i32, i32, i32) {
    %c0_i32 = arith.constant 0 : i32
    %c0_i32_0 = arith.constant 0 : i32
    %c0_i32_1 = arith.constant 0 : i32
    return %arg0, %c0_i32, %c0_i32_0 : i32, i32, i32
  }
  func.func @transform_2(%arg0: i32) -> (i32, i32) {
    %c0_i32 = arith.constant 0 : i32
    %c0_i32_0 = arith.constant 0 : i32
    %c0_i32_1 = arith.constant 0 : i32
    return %c0_i32, %c0_i32_0 : i32, i32
  }
  func.func @transform_3(%arg0: i32) -> (i32, i32) {
    %c0_i32 = arith.constant 0 : i32
    %c0_i32_0 = arith.constant 0 : i32
    %c0_i32_1 = arith.constant 0 : i32
    return %c0_i32, %c0_i32_0 : i32, i32
  }
  func.func @transform_4(%arg0: i32) -> (i32, i32, i32) {
    %c0_i32 = arith.constant 0 : i32
    %c0_i32_0 = arith.constant 0 : i32
    %c0_i32_1 = arith.constant 0 : i32
    %c0_i32_2 = arith.constant 0 : i32
    return %c0_i32, %c0_i32_0, %c0_i32_1 : i32, i32, i32
  }
  func.func @transform_5(%arg0: i32) -> (i32, i32, i32) {
    %c0_i32 = arith.constant 0 : i32
    %c0_i32_0 = arith.constant 0 : i32
    %c0_i32_1 = arith.constant 0 : i32
    %c0_i32_2 = arith.constant 0 : i32
    return %c0_i32, %c0_i32_0, %c0_i32_1 : i32, i32, i32
  }
  func.func @transform_6(%arg0: i32) -> (i32, i32, i32) {
    %c0_i32 = arith.constant 0 : i32
    %c0_i32_0 = arith.constant 0 : i32
    %c0_i32_1 = arith.constant 0 : i32
    %c0_i32_2 = arith.constant 0 : i32
    return %c0_i32, %c0_i32_0, %c0_i32_1 : i32, i32, i32
  }
  func.func @transform_7(%arg0: i32) -> (i32, i32, i32) {
    %c0_i32 = arith.constant 0 : i32
    %c0_i32_0 = arith.constant 0 : i32
    %c0_i32_1 = arith.constant 0 : i32
    %c0_i32_2 = arith.constant 0 : i32
    return %c0_i32, %c0_i32_0, %c0_i32_1 : i32, i32, i32
  }
  func.func @transform_8(%arg0: i32) -> (i32, i32, i32) {
    %c0_i32 = arith.constant 0 : i32
    %c0_i32_0 = arith.constant 0 : i32
    %c0_i32_1 = arith.constant 0 : i32
    %c0_i32_2 = arith.constant 0 : i32
    return %c0_i32, %c0_i32_0, %c0_i32_1 : i32, i32, i32
  }
  func.func @transform_9(%arg0: i32) -> (i32, i32, i32) {
    %c0_i32 = arith.constant 0 : i32
    %c0_i32_0 = arith.constant 0 : i32
    %c0_i32_1 = arith.constant 0 : i32
    %c0_i32_2 = arith.constant 0 : i32
    return %c0_i32, %c0_i32_0, %c0_i32_1 : i32, i32, i32
  }
  func.func @transform_10(%arg0: i32) -> (i32, i32, i32) {
    %c0_i32 = arith.constant 0 : i32
    %c0_i32_0 = arith.constant 0 : i32
    %c0_i32_1 = arith.constant 0 : i32
    %c0_i32_2 = arith.constant 0 : i32
    return %c0_i32, %c0_i32_0, %c0_i32_1 : i32, i32, i32
  }
  func.func @transform_11(%arg0: i32) -> (i32, i32, i32) {
    %c0_i32 = arith.constant 0 : i32
    %c0_i32_0 = arith.constant 0 : i32
    %c0_i32_1 = arith.constant 0 : i32
    %c0_i32_2 = arith.constant 0 : i32
    return %c0_i32, %c0_i32_0, %c0_i32_1 : i32, i32, i32
  }
  func.func @transform_12(%arg0: i32) -> (i32, i32, i32) {
    %c0_i32 = arith.constant 0 : i32
    %c0_i32_0 = arith.constant 0 : i32
    %c0_i32_1 = arith.constant 0 : i32
    %c0_i32_2 = arith.constant 0 : i32
    return %c0_i32, %c0_i32_0, %c0_i32_1 : i32, i32, i32
  }
  func.func @transform_13(%arg0: i32) -> (i32, i32, i32) {
    %c0_i32 = arith.constant 0 : i32
    %c0_i32_0 = arith.constant 0 : i32
    %c0_i32_1 = arith.constant 0 : i32
    %c0_i32_2 = arith.constant 0 : i32
    return %c0_i32, %c0_i32_0, %c0_i32_1 : i32, i32, i32
  }
  func.func @transform_14(%arg0: i32) -> (i32, i32, i32) {
    %c0_i32 = arith.constant 0 : i32
    %c0_i32_0 = arith.constant 0 : i32
    %c0_i32_1 = arith.constant 0 : i32
    %c0_i32_2 = arith.constant 0 : i32
    return %c0_i32, %c0_i32_0, %c0_i32_1 : i32, i32, i32
  }
  func.func @transform_15(%arg0: i32) -> (i32, i32, i32) {
    %c0_i32 = arith.constant 0 : i32
    %c0_i32_0 = arith.constant 0 : i32
    %c0_i32_1 = arith.constant 0 : i32
    %c0_i32_2 = arith.constant 0 : i32
    return %c0_i32, %c0_i32_0, %c0_i32_1 : i32, i32, i32
  }
  func.func @transform_16(%arg0: i32) -> (i32, i32) {
    %c0_i32 = arith.constant 0 : i32
    %c0_i32_0 = arith.constant 0 : i32
    %c0_i32_1 = arith.constant 0 : i32
    return %c0_i32, %c0_i32_0 : i32, i32
  }
  func.func @transform_17(%arg0: i32) -> (i32, i32) {
    %c0_i32 = arith.constant 0 : i32
    %c0_i32_0 = arith.constant 0 : i32
    %c0_i32_1 = arith.constant 0 : i32
    return %c0_i32, %c0_i32_0 : i32, i32
  }
  func.func @transform_18(%arg0: i32) -> (i32, i32, i32) {
    %c0_i32 = arith.constant 0 : i32
    %c0_i32_0 = arith.constant 0 : i32
    %c0_i32_1 = arith.constant 0 : i32
    return %arg0, %c0_i32, %c0_i32_0 : i32, i32, i32
  }
}

</mosaic_0001>

<llo_original>
// kernel: tpu_custom_call.1
$region0: #{tpu_custom_call.1}
  #allocation0 [shape = 'u32[]', space=smem, size = 0x4, offset = 0x4, fixed_abs, tag = 'smem constant byte address 0x4 - core index']
  #allocation1 [shape = 'u32[144,128]{1,0:T(1,128)}', space=vmem, size = 0x12000, scoped, tag = 'internal scratch']
  %s0 = inlined_call_operand.hbm [shape: f32[2,16,256], index: 0, kind: input, shape index: {}]
  %s1 = inlined_call_operand.hbm [shape: f32[2,16,128], index: 1, kind: input, shape index: {}]
  %s2 = inlined_call_operand.hbm [shape: f32[256,128], index: 2, kind: input, shape index: {}]
  %s3 = inlined_call_operand.hbm [shape: f32[1,128], index: 3, kind: input, shape index: {}]
  %s4 = inlined_call_operand.vmem [shape: f32[2,1,128], index: 4, kind: input, shape index: {}]
  %s5 = inlined_call_operand.vmem [shape: f32[2,1,128], index: 5, kind: input, shape index: {}]
  %s6 = inlined_call_operand.hbm [shape: f32[2,128,384], index: 6, kind: input, shape index: {}]
  %s7 = inlined_call_operand.vmem [shape: f32[2,1,384], index: 7, kind: input, shape index: {}]
  %s8 = inlined_call_operand.hbm [shape: f32[2,128,128], index: 8, kind: input, shape index: {}]
  %s9 = inlined_call_operand.vmem [shape: f32[2,1,128], index: 9, kind: input, shape index: {}]
  %s10 = inlined_call_operand.vmem [shape: f32[2,1,128], index: 10, kind: input, shape index: {}]
  %s11 = inlined_call_operand.vmem [shape: f32[2,1,128], index: 11, kind: input, shape index: {}]
  %s12 = inlined_call_operand.hbm [shape: f32[2,128,128], index: 12, kind: input, shape index: {}]
  %s13 = inlined_call_operand.vmem [shape: f32[2,1,128], index: 13, kind: input, shape index: {}]
  %s14 = inlined_call_operand.hbm [shape: f32[2,128,128], index: 14, kind: input, shape index: {}]
  %s15 = inlined_call_operand.vmem [shape: f32[2,1,128], index: 15, kind: input, shape index: {}]
  %s16 = inlined_call_operand.vmem [shape: f32[1,128], index: 16, kind: input, shape index: {}]
  %s17 = inlined_call_operand.vmem [shape: f32[1,128], index: 17, kind: input, shape index: {}]
  %s18 = inlined_call_operand.hbm [shape: f32[2,16,128], index: 18, kind: output, shape index: {}]
  %s19 = sld [smem:[#allocation0]]
  $region137: #{tpu_custom_call.1} parent=0
    _
  %s21 = ssub.s32 1, %s19
  %s22 = scalar_select 0, %s21, %s19
  $region1: #{tpu_custom_call.1} parent=0
    #allocation2 [shape = 'u8[32768]{0}', space=vmem, size = 0x8000, scoped, tag = 'input window, operand 0']
    #allocation3 [shape = 's32[2]{0}', space=sflag, size = 0x8, scoped, tag = 'scoped memory for tpu_custom_call.1']
    #allocation4 [shape = 's32[2]{0}', space=sflag, size = 0x8, scoped, tag = 'scoped memory for tpu_custom_call.1']
    #allocation5 [shape = 'u8[16384]{0}', space=vmem, size = 0x4000, scoped, tag = 'input window, operand 1']
    #allocation6 [shape = 's32[2]{0}', space=sflag, size = 0x8, scoped, tag = 'scoped memory for tpu_custom_call.1']
    #allocation7 [shape = 'u8[131072]{0}', space=vmem, size = 0x20000, scoped, tag = 'input window, operand 2, single buffered']
    #allocation8 [shape = 'u8[512]{0}', space=vmem, size = 0x400, scoped, tag = 'input window, operand 3, single buffered']
    #allocation9 [shape = 's32[1]{0}', space=sflag, size = 0x4, scoped, tag = 'scoped memory for tpu_custom_call.1']
    #allocation10 [shape = 'u8[393216]{0}', space=vmem, size = 0x60000, scoped, tag = 'input window, operand 6, single buffered']
    #allocation11 [shape = 'u8[131072]{0}', space=vmem, size = 0x20000, scoped, tag = 'input window, operand 8, single buffered']
    #allocation12 [shape = 's32[1]{0}', space=sflag, size = 0x4, scoped, tag = 'scoped memory for tpu_custom_call.1']
    #allocation13 [shape = 'u8[131072]{0}', space=vmem, size = 0x20000, scoped, tag = 'input window, operand 12, single buffered']
    #allocation14 [shape = 'u8[131072]{0}', space=vmem, size = 0x20000, scoped, tag = 'input window, operand 14, single buffered']
    #allocation15 [shape = 's32[1]{0}', space=sflag, size = 0x4, scoped, tag = 'scoped memory for tpu_custom_call.1']
    #allocation16 [shape = 'u8[16384]{0}', space=vmem, size = 0x4000, scoped, tag = 'output window, operand 0']
    %23 = vsyncpa [#allocation3], 0
    %s24 = scalar_lea.sflag [#allocation3], 1
    %25 = vsyncpa %s24, 0
    %26 = vsyncpa [#allocation6], 0
    %s27 = scalar_lea.sflag [#allocation6], 1
    %28 = vsyncpa %s27, 0
    %29 = vsyncpa [#allocation9], 0
    %30 = vsyncpa [#allocation12], 0
    %31 = vsyncpa [#allocation15], 0
    %32 = vsyncpa [#allocation4], 0
    %s33 = scalar_lea.sflag [#allocation4], 1
    %34 = vsyncpa %s33, 0
    loop: start=0, step=1, limit=4
    $region2: #{tpu_custom_call.1} parent=1 // loop_pre_header
      _
    $region3: #{tpu_custom_call.1} parent=1 // loop_header
      %s36 = sphi 0, %s40
      %p37 = scmp.ge.s32.totalorder %s36, 4
      %s46 = sphi 0, %s48
      %s49 = sphi 0, %s46
      %s50 = sphi 0, %s49
      %s66 = sphi 0, %s50
      %s72 = sphi 0, %s74
      %s75 = sphi 0, %s72
      %s76 = sphi 0, %s75
      %s92 = sphi 0, %s76
      %s96 = sphi 0, %s96
      %s98 = sphi 0, %s96
      %s99 = sphi 0, %s98
      %s113 = sphi 0, %s99
      %s117 = sphi 0, %s117
      %s119 = sphi 0, %s117
      %s120 = sphi 0, %s119
      %s134 = sphi 0, %s120
      %s138 = sphi 0, %s138
      %s140 = sphi 0, %s138
      %s141 = sphi 0, %s140
      %s155 = sphi 0, %s141
      %s159 = sphi 0, %s159
      %s161 = sphi 0, %s159
      %s162 = sphi 0, %s161
      %s176 = sphi 0, %s162
      %s180 = sphi 0, %s180
      %s182 = sphi 0, %s180
      %s183 = sphi 0, %s182
      %s197 = sphi 0, %s183
      %s201 = sphi 0, %s201
      %s203 = sphi 0, %s201
      %s204 = sphi 0, %s203
      %s218 = sphi 0, %s204
      %s222 = sphi 0, %s222
      %s224 = sphi 0, %s222
      %s225 = sphi 0, %s224
      %s239 = sphi 0, %s225
      %s243 = sphi 0, %s243
      %s245 = sphi 0, %s243
      %s246 = sphi 0, %s245
      %s260 = sphi 0, %s246
      %s264 = sphi 0, %s264
      %s266 = sphi 0, %s264
      %s267 = sphi 0, %s266
      %s281 = sphi 0, %s267
      %s285 = sphi 0, %s285
      %s287 = sphi 0, %s285
      %s288 = sphi 0, %s287
      %s302 = sphi 0, %s288
      %s306 = sphi 0, %s306
      %s308 = sphi 0, %s306
      %s309 = sphi 0, %s308
      %s323 = sphi 0, %s309
      %s327 = sphi 0, %s327
      %s329 = sphi 0, %s327
      %s330 = sphi 0, %s329
      %s344 = sphi 0, %s330
      %s348 = sphi 0, %s348
      %s350 = sphi 0, %s348
      %s351 = sphi 0, %s350
      %s365 = sphi 0, %s351
      %s369 = sphi 0, %s369
      %s371 = sphi 0, %s369
      %s372 = sphi 0, %s371
      %s386 = sphi 0, %s372
      %s390 = sphi 0, %s390
      %s392 = sphi 0, %s390
      %s393 = sphi 0, %s392
      %s407 = sphi 0, %s393
      %s411 = sphi 0, %s411
      %s413 = sphi 0, %s411
      %s414 = sphi 0, %s413
      %s428 = sphi 0, %s414
      %s434 = sphi 0, %s436
      %s437 = sphi 0, %s434
      %s438 = sphi 0, %s437
      %s454 = sphi 0, %s438
    $region4: #{tpu_custom_call.1} parent=1 // loop_header_branch
      %39 = sbr.rel (%p37) target = $region8
    $region5: #{tpu_custom_call.1} parent=1 // loop_body
      %s41 = ssub.s32 %s36, 1
      %s42 = ssub.s32 %s36, 2
      %s43 = sadd.s32 %s36, 1
      %s44 = ssub.s32 %s36, %s43
      %p45 = scmp.eq.s32.totalorder %s44, 0
      %s47 = sadd.s32 %s46, 1
      %s48 = scalar_select %p45, %s46, %s47
      %p51 = pneg %p45
      %p52 = scmp.eq.s32.totalorder %s36, 1
      %p53 = por %p51, %p52
      %p54 = scmp.ne.s32.totalorder %s46, %s49
      %p55 = scmp.eq.s32.totalorder %s36, 0
      %p56 = por %p54, %p55
      %p57 = scmp.ne.s32.totalorder %s46, %s49
      %p58 = scmp.eq.s32.totalorder %s41, 1
      %p59 = por %p57, %p58
      %p60 = scmp.ne.s32.totalorder %s49, %s50
      %p61 = scmp.eq.s32.totalorder %s41, 0
      %p62 = por %p60, %p61
      %p63 = scmp.ne.s32.totalorder %s49, %s50
      %p64 = scmp.eq.s32.totalorder %s42, 1
      %p65 = por %p63, %p64
      %p67 = scmp.ne.s32.totalorder %s50, %s66
      %p68 = scmp.eq.s32.totalorder %s42, 0
      %p69 = por %p67, %p68
      %s70 = ssub.s32 %s36, %s43
      %p71 = scmp.eq.s32.totalorder %s70, 0
      %s73 = sadd.s32 %s72, 1
      %s74 = scalar_select %p71, %s72, %s73
      %p77 = pneg %p71
      %p78 = scmp.eq.s32.totalorder %s36, 1
      %p79 = por %p77, %p78
      %p80 = scmp.ne.s32.totalorder %s72, %s75
      %p81 = scmp.eq.s32.totalorder %s36, 0
      %p82 = por %p80, %p81
      %p83 = scmp.ne.s32.totalorder %s72, %s75
      %p84 = scmp.eq.s32.totalorder %s41, 1
      %p85 = por %p83, %p84
      %p86 = scmp.ne.s32.totalorder %s75, %s76
      %p87 = scmp.eq.s32.totalorder %s41, 0
      %p88 = por %p86, %p87
      %p89 = scmp.ne.s32.totalorder %s75, %s76
      %p90 = scmp.eq.s32.totalorder %s42, 1
      %p91 = por %p89, %p90
      %p93 = scmp.ne.s32.totalorder %s76, %s92
      %p94 = scmp.eq.s32.totalorder %s42, 0
      %p95 = por %p93, %p94
      %s97 = sadd.s32 %s96, 1
      %p100 = scmp.eq.s32.totalorder %s36, 1
      %p101 = scmp.ne.s32.totalorder %s96, %s98
      %p102 = scmp.eq.s32.totalorder %s36, 0
      %p103 = por %p101, %p102
      %p104 = scmp.ne.s32.totalorder %s96, %s98
      %p105 = scmp.eq.s32.totalorder %s41, 1
      %p106 = por %p104, %p105
      %p107 = scmp.ne.s32.totalorder %s98, %s99
      %p108 = scmp.eq.s32.totalorder %s41, 0
      %p109 = por %p107, %p108
      %p110 = scmp.ne.s32.totalorder %s98, %s99
      %p111 = scmp.eq.s32.totalorder %s42, 1
      %p112 = por %p110, %p111
      %p114 = scmp.ne.s32.totalorder %s99, %s113
      %p115 = scmp.eq.s32.totalorder %s42, 0
      %p116 = por %p114, %p115
      %s118 = sadd.s32 %s117, 1
      %p121 = scmp.eq.s32.totalorder %s36, 1
      %p122 = scmp.ne.s32.totalorder %s117, %s119
      %p123 = scmp.eq.s32.totalorder %s36, 0
      %p124 = por %p122, %p123
      %p125 = scmp.ne.s32.totalorder %s117, %s119
      %p126 = scmp.eq.s32.totalorder %s41, 1
      %p127 = por %p125, %p126
      %p128 = scmp.ne.s32.totalorder %s119, %s120
      %p129 = scmp.eq.s32.totalorder %s41, 0
      %p130 = por %p128, %p129
      %p131 = scmp.ne.s32.totalorder %s119, %s120
      %p132 = scmp.eq.s32.totalorder %s42, 1
      %p133 = por %p131, %p132
      %p135 = scmp.ne.s32.totalorder %s120, %s134
      %p136 = scmp.eq.s32.totalorder %s42, 0
      %p137 = por %p135, %p136
      %s139 = sadd.s32 %s138, 1
      %p142 = scmp.eq.s32.totalorder %s36, 1
      %p143 = scmp.ne.s32.totalorder %s138, %s140
      %p144 = scmp.eq.s32.totalorder %s36, 0
      %p145 = por %p143, %p144
      %p146 = scmp.ne.s32.totalorder %s138, %s140
      %p147 = scmp.eq.s32.totalorder %s41, 1
      %p148 = por %p146, %p147
      %p149 = scmp.ne.s32.totalorder %s140, %s141
      %p150 = scmp.eq.s32.totalorder %s41, 0
      %p151 = por %p149, %p150
      %p152 = scmp.ne.s32.totalorder %s140, %s141
      %p153 = scmp.eq.s32.totalorder %s42, 1
      %p154 = por %p152, %p153
      %p156 = scmp.ne.s32.totalorder %s141, %s155
      %p157 = scmp.eq.s32.totalorder %s42, 0
      %p158 = por %p156, %p157
      %s160 = sadd.s32 %s159, 1
      %p163 = scmp.eq.s32.totalorder %s36, 1
      %p164 = scmp.ne.s32.totalorder %s159, %s161
      %p165 = scmp.eq.s32.totalorder %s36, 0
      %p166 = por %p164, %p165
      %p167 = scmp.ne.s32.totalorder %s159, %s161
      %p168 = scmp.eq.s32.totalorder %s41, 1
      %p169 = por %p167, %p168
      %p170 = scmp.ne.s32.totalorder %s161, %s162
      %p171 = scmp.eq.s32.totalorder %s41, 0
      %p172 = por %p170, %p171
      %p173 = scmp.ne.s32.totalorder %s161, %s162
      %p174 = scmp.eq.s32.totalorder %s42, 1
      %p175 = por %p173, %p174
      %p177 = scmp.ne.s32.totalorder %s162, %s176
      %p178 = scmp.eq.s32.totalorder %s42, 0
      %p179 = por %p177, %p178
      %s181 = sadd.s32 %s180, 1
      %p184 = scmp.eq.s32.totalorder %s36, 1
      %p185 = scmp.ne.s32.totalorder %s180, %s182
      %p186 = scmp.eq.s32.totalorder %s36, 0
      %p187 = por %p185, %p186
      %p188 = scmp.ne.s32.totalorder %s180, %s182
      %p189 = scmp.eq.s32.totalorder %s41, 1
      %p190 = por %p188, %p189
      %p191 = scmp.ne.s32.totalorder %s182, %s183
      %p192 = scmp.eq.s32.totalorder %s41, 0
      %p193 = por %p191, %p192
      %p194 = scmp.ne.s32.totalorder %s182, %s183
      %p195 = scmp.eq.s32.totalorder %s42, 1
      %p196 = por %p194, %p195
      %p198 = scmp.ne.s32.totalorder %s183, %s197
      %p199 = scmp.eq.s32.totalorder %s42, 0
      %p200 = por %p198, %p199
      %s202 = sadd.s32 %s201, 1
      %p205 = scmp.eq.s32.totalorder %s36, 1
      %p206 = scmp.ne.s32.totalorder %s201, %s203
      %p207 = scmp.eq.s32.totalorder %s36, 0
      %p208 = por %p206, %p207
      %p209 = scmp.ne.s32.totalorder %s201, %s203
      %p210 = scmp.eq.s32.totalorder %s41, 1
      %p211 = por %p209, %p210
      %p212 = scmp.ne.s32.totalorder %s203, %s204
      %p213 = scmp.eq.s32.totalorder %s41, 0
      %p214 = por %p212, %p213
      %p215 = scmp.ne.s32.totalorder %s203, %s204
      %p216 = scmp.eq.s32.totalorder %s42, 1
      %p217 = por %p215, %p216
      %p219 = scmp.ne.s32.totalorder %s204, %s218
      %p220 = scmp.eq.s32.totalorder %s42, 0
      %p221 = por %p219, %p220
      %s223 = sadd.s32 %s222, 1
      %p226 = scmp.eq.s32.totalorder %s36, 1
      %p227 = scmp.ne.s32.totalorder %s222, %s224
      %p228 = scmp.eq.s32.totalorder %s36, 0
      %p229 = por %p227, %p228
      %p230 = scmp.ne.s32.totalorder %s222, %s224
      %p231 = scmp.eq.s32.totalorder %s41, 1
      %p232 = por %p230, %p231
      %p233 = scmp.ne.s32.totalorder %s224, %s225
      %p234 = scmp.eq.s32.totalorder %s41, 0
      %p235 = por %p233, %p234
      %p236 = scmp.ne.s32.totalorder %s224, %s225
      %p237 = scmp.eq.s32.totalorder %s42, 1
      %p238 = por %p236, %p237
      %p240 = scmp.ne.s32.totalorder %s225, %s239
      %p241 = scmp.eq.s32.totalorder %s42, 0
      %p242 = por %p240, %p241
      %s244 = sadd.s32 %s243, 1
      %p247 = scmp.eq.s32.totalorder %s36, 1
      %p248 = scmp.ne.s32.totalorder %s243, %s245
      %p249 = scmp.eq.s32.totalorder %s36, 0
      %p250 = por %p248, %p249
      %p251 = scmp.ne.s32.totalorder %s243, %s245
      %p252 = scmp.eq.s32.totalorder %s41, 1
      %p253 = por %p251, %p252
      %p254 = scmp.ne.s32.totalorder %s245, %s246
      %p255 = scmp.eq.s32.totalorder %s41, 0
      %p256 = por %p254, %p255
      %p257 = scmp.ne.s32.totalorder %s245, %s246
      %p258 = scmp.eq.s32.totalorder %s42, 1
      %p259 = por %p257, %p258
      %p261 = scmp.ne.s32.totalorder %s246, %s260
      %p262 = scmp.eq.s32.totalorder %s42, 0
      %p263 = por %p261, %p262
      %s265 = sadd.s32 %s264, 1
      %p268 = scmp.eq.s32.totalorder %s36, 1
      %p269 = scmp.ne.s32.totalorder %s264, %s266
      %p270 = scmp.eq.s32.totalorder %s36, 0
      %p271 = por %p269, %p270
      %p272 = scmp.ne.s32.totalorder %s264, %s266
      %p273 = scmp.eq.s32.totalorder %s41, 1
      %p274 = por %p272, %p273
      %p275 = scmp.ne.s32.totalorder %s266, %s267
      %p276 = scmp.eq.s32.totalorder %s41, 0
      %p277 = por %p275, %p276
      %p278 = scmp.ne.s32.totalorder %s266, %s267
      %p279 = scmp.eq.s32.totalorder %s42, 1
      %p280 = por %p278, %p279
      %p282 = scmp.ne.s32.totalorder %s267, %s281
      %p283 = scmp.eq.s32.totalorder %s42, 0
      %p284 = por %p282, %p283
      %s286 = sadd.s32 %s285, 1
      %p289 = scmp.eq.s32.totalorder %s36, 1
      %p290 = scmp.ne.s32.totalorder %s285, %s287
      %p291 = scmp.eq.s32.totalorder %s36, 0
      %p292 = por %p290, %p291
      %p293 = scmp.ne.s32.totalorder %s285, %s287
      %p294 = scmp.eq.s32.totalorder %s41, 1
      %p295 = por %p293, %p294
      %p296 = scmp.ne.s32.totalorder %s287, %s288
      %p297 = scmp.eq.s32.totalorder %s41, 0
      %p298 = por %p296, %p297
      %p299 = scmp.ne.s32.totalorder %s287, %s288
      %p300 = scmp.eq.s32.totalorder %s42, 1
      %p301 = por %p299, %p300
      %p303 = scmp.ne.s32.totalorder %s288, %s302
      %p304 = scmp.eq.s32.totalorder %s42, 0
      %p305 = por %p303, %p304
      %s307 = sadd.s32 %s306, 1
      %p310 = scmp.eq.s32.totalorder %s36, 1
      %p311 = scmp.ne.s32.totalorder %s306, %s308
      %p312 = scmp.eq.s32.totalorder %s36, 0
      %p313 = por %p311, %p312
      %p314 = scmp.ne.s32.totalorder %s306, %s308
      %p315 = scmp.eq.s32.totalorder %s41, 1
      %p316 = por %p314, %p315
      %p317 = scmp.ne.s32.totalorder %s308, %s309
      %p318 = scmp.eq.s32.totalorder %s41, 0
      %p319 = por %p317, %p318
      %p320 = scmp.ne.s32.totalorder %s308, %s309
      %p321 = scmp.eq.s32.totalorder %s42, 1
      %p322 = por %p320, %p321
      %p324 = scmp.ne.s32.totalorder %s309, %s323
      %p325 = scmp.eq.s32.totalorder %s42, 0
      %p326 = por %p324, %p325
      %s328 = sadd.s32 %s327, 1
      %p331 = scmp.eq.s32.totalorder %s36, 1
      %p332 = scmp.ne.s32.totalorder %s327, %s329
      %p333 = scmp.eq.s32.totalorder %s36, 0
      %p334 = por %p332, %p333
      %p335 = scmp.ne.s32.totalorder %s327, %s329
      %p336 = scmp.eq.s32.totalorder %s41, 1
      %p337 = por %p335, %p336
      %p338 = scmp.ne.s32.totalorder %s329, %s330
      %p339 = scmp.eq.s32.totalorder %s41, 0
      %p340 = por %p338, %p339
      %p341 = scmp.ne.s32.totalorder %s329, %s330
      %p342 = scmp.eq.s32.totalorder %s42, 1
      %p343 = por %p341, %p342
      %p345 = scmp.ne.s32.totalorder %s330, %s344
      %p346 = scmp.eq.s32.totalorder %s42, 0
      %p347 = por %p345, %p346
      %s349 = sadd.s32 %s348, 1
      %p352 = scmp.eq.s32.totalorder %s36, 1
      %p353 = scmp.ne.s32.totalorder %s348, %s350
      %p354 = scmp.eq.s32.totalorder %s36, 0
      %p355 = por %p353, %p354
      %p356 = scmp.ne.s32.totalorder %s348, %s350
      %p357 = scmp.eq.s32.totalorder %s41, 1
      %p358 = por %p356, %p357
      %p359 = scmp.ne.s32.totalorder %s350, %s351
      %p360 = scmp.eq.s32.totalorder %s41, 0
      %p361 = por %p359, %p360
      %p362 = scmp.ne.s32.totalorder %s350, %s351
      %p363 = scmp.eq.s32.totalorder %s42, 1
      %p364 = por %p362, %p363
      %p366 = scmp.ne.s32.totalorder %s351, %s365
      %p367 = scmp.eq.s32.totalorder %s42, 0
      %p368 = por %p366, %p367
      %s370 = sadd.s32 %s369, 1
      %p373 = scmp.eq.s32.totalorder %s36, 1
      %p374 = scmp.ne.s32.totalorder %s369, %s371
      %p375 = scmp.eq.s32.totalorder %s36, 0
      %p376 = por %p374, %p375
      %p377 = scmp.ne.s32.totalorder %s369, %s371
      %p378 = scmp.eq.s32.totalorder %s41, 1
      %p379 = por %p377, %p378
      %p380 = scmp.ne.s32.totalorder %s371, %s372
      %p381 = scmp.eq.s32.totalorder %s41, 0
      %p382 = por %p380, %p381
      %p383 = scmp.ne.s32.totalorder %s371, %s372
      %p384 = scmp.eq.s32.totalorder %s42, 1
      %p385 = por %p383, %p384
      %p387 = scmp.ne.s32.totalorder %s372, %s386
      %p388 = scmp.eq.s32.totalorder %s42, 0
      %p389 = por %p387, %p388
      %s391 = sadd.s32 %s390, 1
      %p394 = scmp.eq.s32.totalorder %s36, 1
      %p395 = scmp.ne.s32.totalorder %s390, %s392
      %p396 = scmp.eq.s32.totalorder %s36, 0
      %p397 = por %p395, %p396
      %p398 = scmp.ne.s32.totalorder %s390, %s392
      %p399 = scmp.eq.s32.totalorder %s41, 1
      %p400 = por %p398, %p399
      %p401 = scmp.ne.s32.totalorder %s392, %s393
      %p402 = scmp.eq.s32.totalorder %s41, 0
      %p403 = por %p401, %p402
      %p404 = scmp.ne.s32.totalorder %s392, %s393
      %p405 = scmp.eq.s32.totalorder %s42, 1
      %p406 = por %p404, %p405
      %p408 = scmp.ne.s32.totalorder %s393, %s407
      %p409 = scmp.eq.s32.totalorder %s42, 0
      %p410 = por %p408, %p409
      %s412 = sadd.s32 %s411, 1
      %p415 = scmp.eq.s32.totalorder %s36, 1
      %p416 = scmp.ne.s32.totalorder %s411, %s413
      %p417 = scmp.eq.s32.totalorder %s36, 0
      %p418 = por %p416, %p417
      %p419 = scmp.ne.s32.totalorder %s411, %s413
      %p420 = scmp.eq.s32.totalorder %s41, 1
      %p421 = por %p419, %p420
      %p422 = scmp.ne.s32.totalorder %s413, %s414
      %p423 = scmp.eq.s32.totalorder %s41, 0
      %p424 = por %p422, %p423
      %p425 = scmp.ne.s32.totalorder %s413, %s414
      %p426 = scmp.eq.s32.totalorder %s42, 1
      %p427 = por %p425, %p426
      %p429 = scmp.ne.s32.totalorder %s414, %s428
      %p430 = scmp.eq.s32.totalorder %s42, 0
      %p431 = por %p429, %p430
      %s432 = ssub.s32 %s36, %s43
      %p433 = scmp.eq.s32.totalorder %s432, 0
      %s435 = sadd.s32 %s434, 1
      %s436 = scalar_select %p433, %s434, %s435
      %p439 = pneg %p433
      %p440 = scmp.eq.s32.totalorder %s36, 1
      %p441 = por %p439, %p440
      %p442 = scmp.ne.s32.totalorder %s434, %s437
      %p443 = scmp.eq.s32.totalorder %s36, 0
      %p444 = por %p442, %p443
      %p445 = scmp.ne.s32.totalorder %s434, %s437
      %p446 = scmp.eq.s32.totalorder %s41, 1
      %p447 = por %p445, %p446
      %p448 = scmp.ne.s32.totalorder %s437, %s438
      %p449 = scmp.eq.s32.totalorder %s41, 0
      %p450 = por %p448, %p449
      %p451 = scmp.ne.s32.totalorder %s437, %s438
      %p452 = scmp.eq.s32.totalorder %s42, 1
      %p453 = por %p451, %p452
      %p455 = scmp.ne.s32.totalorder %s438, %s454
      %p456 = scmp.eq.s32.totalorder %s42, 0
      %p457 = por %p455, %p456
      %p458 = scmp.le.s32.totalorder 1, %s36
      %p459 = scmp.lt.s32.totalorder %s36, 3
      %p460 = pnand %p458, %p459
      %p461 = pneg %p460
      // Predicated region
      $region9: #{tpu_custom_call.1} parent=5 // pred_check
        _
      $region10: #{tpu_custom_call.1} parent=5 // pred_check_branch
        %463 = sbr.rel (%p460) target = $region12
      $region11: #{tpu_custom_call.1} parent=5 // pred_region
        %s464 = ssub.s32 %s36, 1
        // Predicated region
        $region13: #{tpu_custom_call.1} parent=11 // pred_check
          %p465 = pneg %p109
        $region14: #{tpu_custom_call.1} parent=11 // pred_check_branch
          %467 = sbr.rel (%p465) target = $region16
        $region15: #{tpu_custom_call.1} parent=11 // pred_region
          %s469 = ssub.s32 4096, 4096
          %470 = vsyncadd [#allocation6], %s469
          %s471 = sshll.u32 [#allocation7], 4
          %s472 = int_to_ptr.vmem [resolvable:$true] %s471
          %477 = dma.hbm_to_vmem [thread:$0]  %s2, 4096, %s472, [#allocation6], 128, 128, 8
        $region16: #{tpu_custom_call.1} parent=11 // pred_fallthru
          _
        // Predicated region
        $region17: #{tpu_custom_call.1} parent=11 // pred_check
          %p478 = pneg %p130
        $region18: #{tpu_custom_call.1} parent=11 // pred_check_branch
          %480 = sbr.rel (%p478) target = $region20
        $region19: #{tpu_custom_call.1} parent=11 // pred_region
          %s482 = ssub.s32 16, 16
          %483 = vsyncadd [#allocation9], %s482
          %s485 = sshll.u32 [#allocation8], 4
          %s486 = int_to_ptr.vmem [resolvable:$true] %s485
          %488 = dma.hbm_to_vmem [thread:$0]  %s3, 16, %s486, [#allocation9]
        $region20: #{tpu_custom_call.1} parent=11 // pred_fallthru
          _
        // Predicated region
        $region21: #{tpu_custom_call.1} parent=11 // pred_check
          %p489 = pneg %p151
        $region22: #{tpu_custom_call.1} parent=11 // pred_check_branch
          %491 = sbr.rel (%p489) target = $region24
        $region23: #{tpu_custom_call.1} parent=11 // pred_region
          _
        $region24: #{tpu_custom_call.1} parent=11 // pred_fallthru
          _
        // Predicated region
        $region25: #{tpu_custom_call.1} parent=11 // pred_check
          %p492 = pneg %p172
        $region26: #{tpu_custom_call.1} parent=11 // pred_check_branch
          %494 = sbr.rel (%p492) target = $region28
        $region27: #{tpu_custom_call.1} parent=11 // pred_region
          _
        $region28: #{tpu_custom_call.1} parent=11 // pred_fallthru
          _
        // Predicated region
        $region29: #{tpu_custom_call.1} parent=11 // pred_check
          %p495 = pneg %p193
        $region30: #{tpu_custom_call.1} parent=11 // pred_check_branch
          %497 = sbr.rel (%p495) target = $region32
        $region31: #{tpu_custom_call.1} parent=11 // pred_region
          %s499 = ssub.s32 12288, 12288
          %500 = vsyncadd [#allocation9], %s499
          %s501 = sshll.u32 [#allocation10], 4
          %s502 = int_to_ptr.vmem [resolvable:$true] %s501
          %507 = dma.hbm_to_vmem [thread:$0]  %s6, 12288, %s502, [#allocation9], 384, 384, 24
        $region32: #{tpu_custom_call.1} parent=11 // pred_fallthru
          _
        // Predicated region
        $region33: #{tpu_custom_call.1} parent=11 // pred_check
          %p508 = pneg %p214
        $region34: #{tpu_custom_call.1} parent=11 // pred_check_branch
          %510 = sbr.rel (%p508) target = $region36
        $region35: #{tpu_custom_call.1} parent=11 // pred_region
          _
        $region36: #{tpu_custom_call.1} parent=11 // pred_fallthru
          _
        // Predicated region
        $region37: #{tpu_custom_call.1} parent=11 // pred_check
          %p511 = pneg %p235
        $region38: #{tpu_custom_call.1} parent=11 // pred_check_branch
          %513 = sbr.rel (%p511) target = $region40
        $region39: #{tpu_custom_call.1} parent=11 // pred_region
          %s515 = ssub.s32 4096, 4096
          %516 = vsyncadd [#allocation12], %s515
          %s517 = sshll.u32 [#allocation11], 4
          %s518 = int_to_ptr.vmem [resolvable:$true] %s517
          %523 = dma.hbm_to_vmem [thread:$0]  %s8, 4096, %s518, [#allocation12], 128, 128, 8
        $region40: #{tpu_custom_call.1} parent=11 // pred_fallthru
          _
        // Predicated region
        $region41: #{tpu_custom_call.1} parent=11 // pred_check
          %p524 = pneg %p256
        $region42: #{tpu_custom_call.1} parent=11 // pred_check_branch
          %526 = sbr.rel (%p524) target = $region44
        $region43: #{tpu_custom_call.1} parent=11 // pred_region
          _
        $region44: #{tpu_custom_call.1} parent=11 // pred_fallthru
          _
        // Predicated region
        $region45: #{tpu_custom_call.1} parent=11 // pred_check
          %p527 = pneg %p277
        $region46: #{tpu_custom_call.1} parent=11 // pred_check_branch
          %529 = sbr.rel (%p527) target = $region48
        $region47: #{tpu_custom_call.1} parent=11 // pred_region
          _
        $region48: #{tpu_custom_call.1} parent=11 // pred_fallthru
          _
        // Predicated region
        $region49: #{tpu_custom_call.1} parent=11 // pred_check
          %p530 = pneg %p298
        $region50: #{tpu_custom_call.1} parent=11 // pred_check_branch
          %532 = sbr.rel (%p530) target = $region52
        $region51: #{tpu_custom_call.1} parent=11 // pred_region
          _
        $region52: #{tpu_custom_call.1} parent=11 // pred_fallthru
          _
        // Predicated region
        $region53: #{tpu_custom_call.1} parent=11 // pred_check
          %p533 = pneg %p319
        $region54: #{tpu_custom_call.1} parent=11 // pred_check_branch
          %535 = sbr.rel (%p533) target = $region56
        $region55: #{tpu_custom_call.1} parent=11 // pred_region
          %s537 = ssub.s32 4096, 4096
          %538 = vsyncadd [#allocation12], %s537
          %s539 = sshll.u32 [#allocation13], 4
          %s540 = int_to_ptr.vmem [resolvable:$true] %s539
          %545 = dma.hbm_to_vmem [thread:$0]  %s12, 4096, %s540, [#allocation12], 128, 128, 8
        $region56: #{tpu_custom_call.1} parent=11 // pred_fallthru
          _
        // Predicated region
        $region57: #{tpu_custom_call.1} parent=11 // pred_check
          %p546 = pneg %p340
        $region58: #{tpu_custom_call.1} parent=11 // pred_check_branch
          %548 = sbr.rel (%p546) target = $region60
        $region59: #{tpu_custom_call.1} parent=11 // pred_region
          _
        $region60: #{tpu_custom_call.1} parent=11 // pred_fallthru
          _
        // Predicated region
        $region61: #{tpu_custom_call.1} parent=11 // pred_check
          %p549 = pneg %p361
        $region62: #{tpu_custom_call.1} parent=11 // pred_check_branch
          %551 = sbr.rel (%p549) target = $region64
        $region63: #{tpu_custom_call.1} parent=11 // pred_region
          %s553 = ssub.s32 4096, 4096
          %554 = vsyncadd [#allocation15], %s553
          %s555 = sshll.u32 [#allocation14], 4
          %s556 = int_to_ptr.vmem [resolvable:$true] %s555
          %561 = dma.hbm_to_vmem [thread:$0]  %s14, 4096, %s556, [#allocation15], 128, 128, 8
        $region64: #{tpu_custom_call.1} parent=11 // pred_fallthru
          _
        // Predicated region
        $region65: #{tpu_custom_call.1} parent=11 // pred_check
          %p562 = pneg %p382
        $region66: #{tpu_custom_call.1} parent=11 // pred_check_branch
          %564 = sbr.rel (%p562) target = $region68
        $region67: #{tpu_custom_call.1} parent=11 // pred_region
          _
        $region68: #{tpu_custom_call.1} parent=11 // pred_fallthru
          _
        // Predicated region
        $region69: #{tpu_custom_call.1} parent=11 // pred_check
          %p565 = pneg %p403
        $region70: #{tpu_custom_call.1} parent=11 // pred_check_branch
          %567 = sbr.rel (%p565) target = $region72
        $region71: #{tpu_custom_call.1} parent=11 // pred_region
          _
        $region72: #{tpu_custom_call.1} parent=11 // pred_fallthru
          _
        // Predicated region
        $region73: #{tpu_custom_call.1} parent=11 // pred_check
          %p568 = pneg %p424
        $region74: #{tpu_custom_call.1} parent=11 // pred_check_branch
          %570 = sbr.rel (%p568) target = $region76
        $region75: #{tpu_custom_call.1} parent=11 // pred_region
          _
        $region76: #{tpu_custom_call.1} parent=11 // pred_fallthru
          _
      $region12: #{tpu_custom_call.1} parent=5 // pred_fallthru
        _
      %p571 = scmp.lt.s32.totalorder %s36, 2
      // Predicated region
      $region77: #{tpu_custom_call.1} parent=5 // pred_check
        %p572 = pneg %p571
      $region78: #{tpu_custom_call.1} parent=5 // pred_check_branch
        %574 = sbr.rel (%p572) target = $region80
      $region79: #{tpu_custom_call.1} parent=5 // pred_region
        // Predicated region
        $region81: #{tpu_custom_call.1} parent=79 // pred_check
          %p575 = pneg %p56
        $region82: #{tpu_custom_call.1} parent=79 // pred_check_branch
          %577 = sbr.rel (%p575) target = $region84
        $region83: #{tpu_custom_call.1} parent=79 // pred_region
          %s578 = sand.u32 %s46, 1
          %s579 = scalar_lea.sflag [#allocation3], %s578
          %s580 = sand.u32 %s46, 1
          %s581 = smul.addr %s580, 32
          %s582 = scalar_lea.vmem [#allocation2], %s581
          %s584 = ssub.s32 512, 512
          %585 = vsyncadd %s579, %s584
          %s586 = smul.addr %s36, 4
          %s587 = smul.addr %s586, 128
          %s588 = scalar_lea.hbm %s0, %s587
          %s589 = sshll.u32 %s582, 4
          %s590 = int_to_ptr.vmem [resolvable:$true] %s589
          %595 = dma.hbm_to_vmem [thread:$0]  %s588, 512, %s590, %s579, 256, 256, 16
        $region84: #{tpu_custom_call.1} parent=79 // pred_fallthru
          _
        // Predicated region
        $region85: #{tpu_custom_call.1} parent=79 // pred_check
          %p596 = pneg %p82
        $region86: #{tpu_custom_call.1} parent=79 // pred_check_branch
          %598 = sbr.rel (%p596) target = $region88
        $region87: #{tpu_custom_call.1} parent=79 // pred_region
          %s599 = sand.u32 %s36, 1
          %s600 = scalar_lea.sflag [#allocation6], %s599
          %s601 = sand.u32 %s72, 1
          %s602 = smul.addr %s601, 16
          %s603 = scalar_lea.vmem [#allocation5], %s602
          %s605 = ssub.s32 256, 256
          %606 = vsyncadd %s600, %s605
          %s607 = smul.addr %s36, 2
          %s608 = smul.addr %s607, 128
          %s609 = scalar_lea.hbm %s1, %s608
          %s610 = sshll.u32 %s603, 4
          %s611 = int_to_ptr.vmem [resolvable:$true] %s610
          %616 = dma.hbm_to_vmem [thread:$0]  %s609, 256, %s611, %s600, 128, 128, 8
        $region88: #{tpu_custom_call.1} parent=79 // pred_fallthru
          _
      $region80: #{tpu_custom_call.1} parent=5 // pred_fallthru
        _
      %p617 = scmp.le.s32.totalorder 1, %s36
      %p618 = scmp.lt.s32.totalorder %s36, 3
      %p619 = pnand %p617, %p618
      %p620 = pneg %p619
      // Predicated region
      $region89: #{tpu_custom_call.1} parent=5 // pred_check
        _
      $region90: #{tpu_custom_call.1} parent=5 // pred_check_branch
        %622 = sbr.rel (%p619) target = $region92
      $region91: #{tpu_custom_call.1} parent=5 // pred_region
        %s623 = ssub.s32 %s36, 1
        %s624 = sand.u32 %s49, 1
        %s625 = scalar_lea.sflag [#allocation3], %s624
        %s626 = sand.u32 %s49, 1
        %s627 = smul.addr %s626, 32
        %s628 = scalar_lea.vmem [#allocation2], %s627
        // Predicated region
        $region93: #{tpu_custom_call.1} parent=91 // pred_check
          %p629 = pneg %p62
        $region94: #{tpu_custom_call.1} parent=91 // pred_check_branch
          %631 = sbr.rel (%p629) target = $region96
        $region95: #{tpu_custom_call.1} parent=91 // pred_region
          %632 = dma.done %s625, 512
        $region96: #{tpu_custom_call.1} parent=91 // pred_fallthru
          _
        %s633 = sand.u32 %s41, 1
        %s634 = scalar_lea.sflag [#allocation6], %s633
        %s635 = sand.u32 %s75, 1
        %s636 = smul.addr %s635, 16
        %s637 = scalar_lea.vmem [#allocation5], %s636
        // Predicated region
        $region97: #{tpu_custom_call.1} parent=91 // pred_check
          %p638 = pneg %p88
        $region98: #{tpu_custom_call.1} parent=91 // pred_check_branch
          %640 = sbr.rel (%p638) target = $region100
        $region99: #{tpu_custom_call.1} parent=91 // pred_region
          %641 = dma.done %s634, 256
        $region100: #{tpu_custom_call.1} parent=91 // pred_fallthru
          _
        // Predicated region
        $region101: #{tpu_custom_call.1} parent=91 // pred_check
          %p642 = pneg %p109
        $region102: #{tpu_custom_call.1} parent=91 // pred_check_branch
          %644 = sbr.rel (%p642) target = $region104
        $region103: #{tpu_custom_call.1} parent=91 // pred_region
          %645 = dma.done [#allocation6], 4096
        $region104: #{tpu_custom_call.1} parent=91 // pred_fallthru
          _
        // Predicated region
        $region105: #{tpu_custom_call.1} parent=91 // pred_check
          %p646 = pneg %p130
        $region106: #{tpu_custom_call.1} parent=91 // pred_check_branch
          %648 = sbr.rel (%p646) target = $region108
        $region107: #{tpu_custom_call.1} parent=91 // pred_region
          %649 = dma.done [#allocation9], 16
        $region108: #{tpu_custom_call.1} parent=91 // pred_fallthru
          _
        // Predicated region
        $region109: #{tpu_custom_call.1} parent=91 // pred_check
          %p650 = pneg %p193
        $region110: #{tpu_custom_call.1} parent=91 // pred_check_branch
          %652 = sbr.rel (%p650) target = $region112
        $region111: #{tpu_custom_call.1} parent=91 // pred_region
          %653 = dma.done [#allocation9], 12288
        $region112: #{tpu_custom_call.1} parent=91 // pred_fallthru
          _
        // Predicated region
        $region113: #{tpu_custom_call.1} parent=91 // pred_check
          %p654 = pneg %p235
        $region114: #{tpu_custom_call.1} parent=91 // pred_check_branch
          %656 = sbr.rel (%p654) target = $region116
        $region115: #{tpu_custom_call.1} parent=91 // pred_region
          %657 = dma.done [#allocation12], 4096
        $region116: #{tpu_custom_call.1} parent=91 // pred_fallthru
          _
        // Predicated region
        $region117: #{tpu_custom_call.1} parent=91 // pred_check
          %p658 = pneg %p319
        $region118: #{tpu_custom_call.1} parent=91 // pred_check_branch
          %660 = sbr.rel (%p658) target = $region120
        $region119: #{tpu_custom_call.1} parent=91 // pred_region
          %661 = dma.done [#allocation12], 4096
        $region120: #{tpu_custom_call.1} parent=91 // pred_fallthru
          _
        // Predicated region
        $region121: #{tpu_custom_call.1} parent=91 // pred_check
          %p662 = pneg %p361
        $region122: #{tpu_custom_call.1} parent=91 // pred_check_branch
          %664 = sbr.rel (%p662) target = $region124
        $region123: #{tpu_custom_call.1} parent=91 // pred_region
          %665 = dma.done [#allocation15], 4096
        $region124: #{tpu_custom_call.1} parent=91 // pred_fallthru
          _
        %s666 = sand.u32 %s49, 1
        %s667 = scalar_lea.sflag [#allocation3], %s666
        %s668 = sand.u32 %s49, 1
        %s669 = smul.addr %s668, 32
        %s670 = scalar_lea.vmem [#allocation2], %s669
        %p671 = pneg %p62
        %p672 = pneg %p59
        %s673 = sand.u32 %s41, 1
        %s674 = scalar_lea.sflag [#allocation6], %s673
        %s675 = sand.u32 %s75, 1
        %s676 = smul.addr %s675, 16
        %s677 = scalar_lea.vmem [#allocation5], %s676
        %p678 = pneg %p88
        %p679 = pneg %p85
        %p680 = pneg %p109
        %p681 = pneg %p106
        %p682 = pneg %p130
        %p683 = pneg %p127
        %p684 = pneg %p151
        %p685 = pneg %p148
        %p686 = pneg %p172
        %p687 = pneg %p169
        %p688 = pneg %p193
        %p689 = pneg %p190
        %p690 = pneg %p214
        %p691 = pneg %p211
        %p692 = pneg %p235
        %p693 = pneg %p232
        %p694 = pneg %p256
        %p695 = pneg %p253
        %p696 = pneg %p277
        %p697 = pneg %p274
        %p698 = pneg %p298
        %p699 = pneg %p295
        %p700 = pneg %p319
        %p701 = pneg %p316
        %p702 = pneg %p340
        %p703 = pneg %p337
        %p704 = pneg %p361
        %p705 = pneg %p358
        %p706 = pneg %p382
        %p707 = pneg %p379
        %p708 = pneg %p403
        %p709 = pneg %p400
        %p710 = pneg %p424
        %p711 = pneg %p421
        %p712 = pneg %p450
        %p713 = pneg %p447
        %s714 = sand.u32 %s437, 1
        %s715 = scalar_lea.sflag [#allocation4], %s714
        %s716 = sand.u32 %s437, 1
        %s717 = smul.addr %s716, 16
        %s718 = scalar_lea.vmem [#allocation16], %s717
        %v720 = vlaneseq
        %v721 = vand.u32 %v720, 127
        %vm722 = vcmp.lt.s32.totalorder %v721, 32
        %v723 = vsel %vm722, 1, 0
        %v724 = vcvt.s32.f32 %v723
        %v725 = vld [vmem:[%s628] sm:$0xff]
        %v726 = vld [vmem:[%s628 + $0x8] sm:$0xff]
        %v727 = vld [vmem:[%s628 + $0x10] sm:$0xff]
        %v728 = vld [vmem:[%s628 + $0x18] sm:$0xff]
        %v729 = vld [vmem:[#allocation7] sm:$0xff]
        %v730 = vld [vmem:[#allocation7 + $0x8] sm:$0xff]
        %v731 = vld [vmem:[#allocation7 + $0x10] sm:$0xff]
        %v732 = vld [vmem:[#allocation7 + $0x18] sm:$0xff]
        %v733 = vld [vmem:[#allocation7 + $0x20] sm:$0xff]
        %v734 = vld [vmem:[#allocation7 + $0x28] sm:$0xff]
        %v735 = vld [vmem:[#allocation7 + $0x30] sm:$0xff]
        %v736 = vld [vmem:[#allocation7 + $0x38] sm:$0xff]
        %v737 = vld [vmem:[#allocation7 + $0x40] sm:$0xff]
        %v738 = vld [vmem:[#allocation7 + $0x48] sm:$0xff]
        %v739 = vld [vmem:[#allocation7 + $0x50] sm:$0xff]
        %v740 = vld [vmem:[#allocation7 + $0x58] sm:$0xff]
        %v741 = vld [vmem:[#allocation7 + $0x60] sm:$0xff]
        %v742 = vld [vmem:[#allocation7 + $0x68] sm:$0xff]
        %v743 = vld [vmem:[#allocation7 + $0x70] sm:$0xff]
        %v744 = vld [vmem:[#allocation7 + $0x78] sm:$0xff]
        %v745 = vld [vmem:[#allocation7 + $0x80] sm:$0xff]
        %v746 = vld [vmem:[#allocation7 + $0x88] sm:$0xff]
        %v747 = vld [vmem:[#allocation7 + $0x90] sm:$0xff]
        %v748 = vld [vmem:[#allocation7 + $0x98] sm:$0xff]
        %v749 = vld [vmem:[#allocation7 + $0xa0] sm:$0xff]
        %v750 = vld [vmem:[#allocation7 + $0xa8] sm:$0xff]
        %v751 = vld [vmem:[#allocation7 + $0xb0] sm:$0xff]
        %v752 = vld [vmem:[#allocation7 + $0xb8] sm:$0xff]
        %v753 = vld [vmem:[#allocation7 + $0xc0] sm:$0xff]
        %v754 = vld [vmem:[#allocation7 + $0xc8] sm:$0xff]
        %v755 = vld [vmem:[#allocation7 + $0xd0] sm:$0xff]
        %v756 = vld [vmem:[#allocation7 + $0xd8] sm:$0xff]
        %v757 = vld [vmem:[#allocation7 + $0xe0] sm:$0xff]
        %v758 = vld [vmem:[#allocation7 + $0xe8] sm:$0xff]
        %v759 = vld [vmem:[#allocation7 + $0xf0] sm:$0xff]
        %v760 = vld [vmem:[#allocation7 + $0xf8] sm:$0xff]
        %v761 = vpack.c.bf16 %v727, %v725
        %v762 = vpack.c.bf16 %v728, %v726
        %v763 = vpack.c.bf16 %v730, %v729
        %v764 = vpack.c.bf16 %v732, %v731
        %v765 = vpack.c.bf16 %v734, %v733
        %v766 = vpack.c.bf16 %v736, %v735
        %v767 = vpack.c.bf16 %v738, %v737
        %v768 = vpack.c.bf16 %v740, %v739
        %v769 = vpack.c.bf16 %v742, %v741
        %v770 = vpack.c.bf16 %v744, %v743
        %v771 = vpack.c.bf16 %v746, %v745
        %v772 = vpack.c.bf16 %v748, %v747
        %v773 = vpack.c.bf16 %v750, %v749
        %v774 = vpack.c.bf16 %v752, %v751
        %v775 = vpack.c.bf16 %v754, %v753
        %v776 = vpack.c.bf16 %v756, %v755
        %v777 = vpack.c.bf16 %v758, %v757
        %v778 = vpack.c.bf16 %v760, %v759
        %v779 = vld [vmem:[#allocation8] sm:$0x1]
        %v781 = vlaneseq
        %v782 = vshrl.u32 %v781, 7
        %v783 = vsub.s32 0, %v782
        %v784 = vrot.slane %v779, %v783
        %786 = vmatprep.subr.bf16.mxu0 0
        %787 = vmatpush1.bf16.msra.mxu0 %v763
        %788 = vmatprep.subr.bf16.mxu0 0
        %789 = vmatpush1.bf16.msra.mxu0 %v764
        %790 = vmatprep.subr.bf16.mxu0 0
        %791 = vmatpush1.bf16.msra.mxu0 %v765
        %792 = vmatprep.subr.bf16.mxu0 0
        %793 = vmatpush1.bf16.msra.mxu0 %v766
        %794 = vmatprep.subr.bf16.mxu0 0
        %795 = vmatpush1.bf16.msra.mxu0 %v767
        %796 = vmatprep.subr.bf16.mxu0 0
        %797 = vmatpush1.bf16.msra.mxu0 %v768
        %798 = vmatprep.subr.bf16.mxu0 0
        %799 = vmatpush1.bf16.msra.mxu0 %v769
        %800 = vmatprep.subr.bf16.mxu0 0
        %801 = vmatpush1.bf16.msra.mxu0 %v770
        %802 = vmatprep.subr.bf16.mxu0 0
        %803 = vmatpush1.bf16.msra.mxu0 %v771
        %804 = vmatprep.subr.bf16.mxu0 0
        %805 = vmatpush1.bf16.msra.mxu0 %v772
        %806 = vmatprep.subr.bf16.mxu0 0
        %807 = vmatpush1.bf16.msra.mxu0 %v773
        %808 = vmatprep.subr.bf16.mxu0 0
        %809 = vmatpush1.bf16.msra.mxu0 %v774
        %810 = vmatprep.subr.bf16.mxu0 0
        %811 = vmatpush1.bf16.msra.mxu0 %v775
        %812 = vmatprep.subr.bf16.mxu0 0
        %813 = vmatpush1.bf16.msra.mxu0 %v776
        %814 = vmatprep.subr.bf16.mxu0 0
        %815 = vmatpush1.bf16.msra.mxu0 %v777
        %816 = vmatprep.subr.bf16.mxu0 0
        %817 = vmatpush1.bf16.msra.mxu0 %v778
        %818 = vmatprep.mubr.bf16.mxu0 %v762
        %819 = vmatmul.mubr.bf16.gmra.mrb[0].mxu0 %v761
        %v820 = vpop.f32.mrb[0].mxu0
        %v821 = vadd.f32 %v784, %v820
        %v822 = vpop.f32.mrb[0].mxu0
        %v823 = vpop.f32.mrb[0].mxu0
        %v824 = vadd.f32 %v784, %v823
        %v825 = vpop.f32.mrb[0].mxu0
        %826 = vdwg.mxu0
        %v827 = vld [vmem:[%s637] sm:$0xff]
        %v828 = vld [vmem:[%s637 + $0x8] sm:$0xff]
        %v829 = vadd.f32 %v821, %v827
        %v830 = vadd.f32 %v824, %v828
        %v831 = vld [vmem:[%s4] sm:$0x1]
        %v832 = vld [vmem:[%s5] sm:$0x1]
        %833 = vadd.xlane.f32.xlu0 %v829
        %v834 = vpop.xlane.xlu0 %833
        %835 = vadd.xlane.f32.xlu0 %v830
        %v836 = vpop.xlane.xlu0 %835
        %v837 = vmul.f32 %v834, 0.03125
        %v838 = vmul.f32 %v836, 0.03125
        %v839 = vsub.f32 %v829, %v837
        %v840 = vsub.f32 %v830, %v838
        %v841 = vmul.f32 %v839, %v724
        %v842 = vmul.f32 %v840, %v724
        %v843 = vmul.f32 %v841, %v841
        %v844 = vmul.f32 %v842, %v842
        %845 = vadd.xlane.f32.xlu0 %v843
        %v846 = vpop.xlane.xlu0 %845
        %847 = vadd.xlane.f32.xlu0 %v844
        %v848 = vpop.xlane.xlu0 %847
        %v849 = vmul.f32 %v846, 0.03125
        %v850 = vmul.f32 %v848, 0.03125
        %v851 = vadd.f32 %v849, 1e-06
        %v852 = vadd.f32 %v850, 1e-06
        %v853 = vrsqrt.pop %v851
        %v854 = vrsqrt.pop %v852
        %v855 = vmul.f32 %v841, %v853
        %v856 = vmul.f32 %v842, %v854
        %v858 = vlaneseq
        %v859 = vshrl.u32 %v858, 7
        %v860 = vsub.s32 0, %v859
        %v861 = vrot.slane %v831, %v860
        %v863 = vmul.f32 %v855, %v861
        %v864 = vmul.f32 %v856, %v861
        %v866 = vlaneseq
        %v867 = vshrl.u32 %v866, 7
        %v868 = vsub.s32 0, %v867
        %v869 = vrot.slane %v832, %v868
        %v871 = vadd.f32 %v863, %v869
        %v872 = vadd.f32 %v864, %v869
        %v873 = vld [vmem:[#allocation10] sm:$0xff]
        %v874 = vld [vmem:[#allocation10 + $0x8] sm:$0xff]
        %v875 = vld [vmem:[#allocation10 + $0x10] sm:$0xff]
        %v876 = vld [vmem:[#allocation10 + $0x18] sm:$0xff]
        %v877 = vld [vmem:[#allocation10 + $0x20] sm:$0xff]
        %v878 = vld [vmem:[#allocation10 + $0x28] sm:$0xff]
        %v879 = vld [vmem:[#allocation10 + $0x30] sm:$0xff]
        %v880 = vld [vmem:[#allocation10 + $0x38] sm:$0xff]
        %v881 = vld [vmem:[#allocation10 + $0x40] sm:$0xff]
        %v882 = vld [vmem:[#allocation10 + $0x48] sm:$0xff]
        %v883 = vld [vmem:[#allocation10 + $0x50] sm:$0xff]
        %v884 = vld [vmem:[#allocation10 + $0x58] sm:$0xff]
        %v885 = vld [vmem:[#allocation10 + $0x60] sm:$0xff]
        %v886 = vld [vmem:[#allocation10 + $0x68] sm:$0xff]
        %v887 = vld [vmem:[#allocation10 + $0x70] sm:$0xff]
        %v888 = vld [vmem:[#allocation10 + $0x78] sm:$0xff]
        %v889 = vld [vmem:[#allocation10 + $0x80] sm:$0xff]
        %v890 = vld [vmem:[#allocation10 + $0x88] sm:$0xff]
        %v891 = vld [vmem:[#allocation10 + $0x90] sm:$0xff]
        %v892 = vld [vmem:[#allocation10 + $0x98] sm:$0xff]
        %v893 = vld [vmem:[#allocation10 + $0xa0] sm:$0xff]
        %v894 = vld [vmem:[#allocation10 + $0xa8] sm:$0xff]
        %v895 = vld [vmem:[#allocation10 + $0xb0] sm:$0xff]
        %v896 = vld [vmem:[#allocation10 + $0xb8] sm:$0xff]
        %v897 = vld [vmem:[#allocation10 + $0xc0] sm:$0xff]
        %v898 = vld [vmem:[#allocation10 + $0xc8] sm:$0xff]
        %v899 = vld [vmem:[#allocation10 + $0xd0] sm:$0xff]
        %v900 = vld [vmem:[#allocation10 + $0xd8] sm:$0xff]
        %v901 = vld [vmem:[#allocation10 + $0xe0] sm:$0xff]
        %v902 = vld [vmem:[#allocation10 + $0xe8] sm:$0xff]
        %v903 = vld [vmem:[#allocation10 + $0xf0] sm:$0xff]
        %v904 = vld [vmem:[#allocation10 + $0xf8] sm:$0xff]
        %v905 = vld [vmem:[#allocation10 + $0x100] sm:$0xff]
        %v906 = vld [vmem:[#allocation10 + $0x108] sm:$0xff]
        %v907 = vld [vmem:[#allocation10 + $0x110] sm:$0xff]
        %v908 = vld [vmem:[#allocation10 + $0x118] sm:$0xff]
        %v909 = vld [vmem:[#allocation10 + $0x120] sm:$0xff]
        %v910 = vld [vmem:[#allocation10 + $0x128] sm:$0xff]
        %v911 = vld [vmem:[#allocation10 + $0x130] sm:$0xff]
        %v912 = vld [vmem:[#allocation10 + $0x138] sm:$0xff]
        %v913 = vld [vmem:[#allocation10 + $0x140] sm:$0xff]
        %v914 = vld [vmem:[#allocation10 + $0x148] sm:$0xff]
        %v915 = vld [vmem:[#allocation10 + $0x150] sm:$0xff]
        %v916 = vld [vmem:[#allocation10 + $0x158] sm:$0xff]
        %v917 = vld [vmem:[#allocation10 + $0x160] sm:$0xff]
        %v918 = vld [vmem:[#allocation10 + $0x168] sm:$0xff]
        %v919 = vld [vmem:[#allocation10 + $0x170] sm:$0xff]
        %v920 = vld [vmem:[#allocation10 + $0x178] sm:$0xff]
        %v921 = vpack.c.bf16 %v872, %v871
        %v922 = vpack.c.bf16 %v876, %v873
        %v923 = vpack.c.bf16 %v877, %v874
        %v924 = vpack.c.bf16 %v878, %v875
        %v925 = vpack.c.bf16 %v882, %v879
        %v926 = vpack.c.bf16 %v883, %v880
        %v927 = vpack.c.bf16 %v884, %v881
        %v928 = vpack.c.bf16 %v888, %v885
        %v929 = vpack.c.bf16 %v889, %v886
        %v930 = vpack.c.bf16 %v890, %v887
        %v931 = vpack.c.bf16 %v894, %v891
        %v932 = vpack.c.bf16 %v895, %v892
        %v933 = vpack.c.bf16 %v896, %v893
        %v934 = vpack.c.bf16 %v900, %v897
        %v935 = vpack.c.bf16 %v901, %v898
        %v936 = vpack.c.bf16 %v902, %v899
        %v937 = vpack.c.bf16 %v906, %v903
        %v938 = vpack.c.bf16 %v907, %v904
        %v939 = vpack.c.bf16 %v908, %v905
        %v940 = vpack.c.bf16 %v912, %v909
        %v941 = vpack.c.bf16 %v913, %v910
        %v942 = vpack.c.bf16 %v914, %v911
        %v943 = vpack.c.bf16 %v918, %v915
        %v944 = vpack.c.bf16 %v919, %v916
        %v945 = vpack.c.bf16 %v920, %v917
        %v946 = vld [vmem:[%s7] sm:$0x7]
        %v948 = vlaneseq
        %v949 = vshrl.u32 %v948, 7
        %v950 = vsub.s32 0, %v949
        %v951 = vrot.slane %v946, %v950
        %v952 = vlaneseq
        %v953 = vshrl.u32 %v952, 7
        %v954 = vsub.s32 1, %v953
        %v955 = vrot.slane %v946, %v954
        %v956 = vlaneseq
        %v957 = vshrl.u32 %v956, 7
        %v958 = vsub.s32 2, %v957
        %v959 = vrot.slane %v946, %v958
        %963 = vmatprep.subr.bf16.mxu0 %v923
        %964 = vmatpush1.bf16.msra.mxu0 %v922
        %965 = vmatprep.subr.bf16.mxu0 %v926
        %966 = vmatpush1.bf16.msra.mxu0 %v925
        %967 = vmatprep.subr.bf16.mxu0 %v929
        %968 = vmatpush1.bf16.msra.mxu0 %v928
        %969 = vmatprep.subr.bf16.mxu0 %v932
        %970 = vmatpush1.bf16.msra.mxu0 %v931
        %971 = vmatprep.subr.bf16.mxu0 %v935
        %972 = vmatpush1.bf16.msra.mxu0 %v934
        %973 = vmatprep.subr.bf16.mxu0 %v938
        %974 = vmatpush1.bf16.msra.mxu0 %v937
        %975 = vmatprep.subr.bf16.mxu0 %v941
        %976 = vmatpush1.bf16.msra.mxu0 %v940
        %977 = vmatprep.subr.bf16.mxu0 %v944
        %978 = vmatpush1.bf16.msra.mxu0 %v943
        %979 = vmatprep.subr.bf16.mxu0 0
        %980 = vmatpush1.bf16.msra.mxu0 0
        %981 = vmatprep.subr.bf16.mxu0 0
        %982 = vmatpush1.bf16.msra.mxu0 0
        %983 = vmatprep.subr.bf16.mxu0 0
        %984 = vmatpush1.bf16.msra.mxu0 0
        %985 = vmatprep.subr.bf16.mxu0 0
        %986 = vmatpush1.bf16.msra.mxu0 0
        %987 = vmatprep.subr.bf16.mxu0 0
        %988 = vmatpush1.bf16.msra.mxu0 0
        %989 = vmatprep.subr.bf16.mxu0 0
        %990 = vmatpush1.bf16.msra.mxu0 0
        %991 = vmatprep.subr.bf16.mxu0 0
        %992 = vmatpush1.bf16.msra.mxu0 0
        %993 = vmatprep.subr.bf16.mxu0 0
        %994 = vmatpush1.bf16.msra.mxu0 0
        %995 = vmatprep.mubr.bf16.mxu0 0
        %996 = vmatmul.mubr.bf16.gmra.mrb[0].mxu0 %v921
        %v997 = vpop.f32.mrb[0].mxu0
        %v998 = vadd.f32 %v951, %v997
        %v999 = vpop.f32.mrb[0].mxu0
        %v1000 = vadd.f32 %v955, %v999
        %v1001 = vpop.f32.mrb[0].mxu0
        %v1002 = vadd.f32 %v951, %v1001
        %v1003 = vpop.f32.mrb[0].mxu0
        %v1004 = vadd.f32 %v955, %v1003
        %1005 = vdwg.mxu0
        %1006 = vmatprep.subr.bf16.mxu0 0
        %1007 = vmatpush1.bf16.msra.mxu0 %v924
        %1008 = vmatprep.subr.bf16.mxu0 0
        %1009 = vmatpush1.bf16.msra.mxu0 %v927
        %1010 = vmatprep.subr.bf16.mxu0 0
        %1011 = vmatpush1.bf16.msra.mxu0 %v930
        %1012 = vmatprep.subr.bf16.mxu0 0
        %1013 = vmatpush1.bf16.msra.mxu0 %v933
        %1014 = vmatprep.subr.bf16.mxu0 0
        %1015 = vmatpush1.bf16.msra.mxu0 %v936
        %1016 = vmatprep.subr.bf16.mxu0 0
        %1017 = vmatpush1.bf16.msra.mxu0 %v939
        %1018 = vmatprep.subr.bf16.mxu0 0
        %1019 = vmatpush1.bf16.msra.mxu0 %v942
        %1020 = vmatprep.subr.bf16.mxu0 0
        %1021 = vmatpush1.bf16.msra.mxu0 %v945
        %1022 = vmatprep.subr.bf16.mxu0 0
        %1023 = vmatpush1.bf16.msra.mxu0 0
        %1024 = vmatprep.subr.bf16.mxu0 0
        %1025 = vmatpush1.bf16.msra.mxu0 0
        %1026 = vmatprep.subr.bf16.mxu0 0
        %1027 = vmatpush1.bf16.msra.mxu0 0
        %1028 = vmatprep.subr.bf16.mxu0 0
        %1029 = vmatpush1.bf16.msra.mxu0 0
        %1030 = vmatprep.subr.bf16.mxu0 0
        %1031 = vmatpush1.bf16.msra.mxu0 0
        %1032 = vmatprep.subr.bf16.mxu0 0
        %1033 = vmatpush1.bf16.msra.mxu0 0
        %1034 = vmatprep.subr.bf16.mxu0 0
        %1035 = vmatpush1.bf16.msra.mxu0 0
        %1036 = vmatprep.subr.bf16.mxu0 0
        %1037 = vmatpush1.bf16.msra.mxu0 0
        %1038 = vmatprep.mubr.bf16.mxu0 0
        %1039 = vmatmul.mubr.bf16.gmra.mrb[0].mxu0 %v921
        %v1040 = vpop.f32.mrb[0].mxu0
        %v1041 = vadd.f32 %v959, %v1040
        %v1042 = vpop.f32.mrb[0].mxu0
        %v1043 = vpop.f32.mrb[0].mxu0
        %v1044 = vadd.f32 %v959, %v1043
        %v1045 = vpop.f32.mrb[0].mxu0
        %1046 = vdwg.mxu0
        %v1047 = vld [vmem:[#allocation11] sm:$0xff]
        %v1048 = vld [vmem:[#allocation11 + $0x8] sm:$0xff]
        %v1049 = vld [vmem:[#allocation11 + $0x10] sm:$0xff]
        %v1050 = vld [vmem:[#allocation11 + $0x18] sm:$0xff]
        %v1051 = vld [vmem:[#allocation11 + $0x20] sm:$0xff]
        %v1052 = vld [vmem:[#allocation11 + $0x28] sm:$0xff]
        %v1053 = vld [vmem:[#allocation11 + $0x30] sm:$0xff]
        %v1054 = vld [vmem:[#allocation11 + $0x38] sm:$0xff]
        %v1055 = vld [vmem:[#allocation11 + $0x40] sm:$0xff]
        %v1056 = vld [vmem:[#allocation11 + $0x48] sm:$0xff]
        %v1057 = vld [vmem:[#allocation11 + $0x50] sm:$0xff]
        %v1058 = vld [vmem:[#allocation11 + $0x58] sm:$0xff]
        %v1059 = vld [vmem:[#allocation11 + $0x60] sm:$0xff]
        %v1060 = vld [vmem:[#allocation11 + $0x68] sm:$0xff]
        %v1061 = vld [vmem:[#allocation11 + $0x70] sm:$0xff]
        %v1062 = vld [vmem:[#allocation11 + $0x78] sm:$0xff]
        %v1063 = vld [vmem:[%s9] sm:$0x1]
        %v1064 = vpack.c.bf16 %v1002, %v998
        %v1065 = vpack.c.bf16 %v1004, %v1000
        %vm1066 = vcmask 523264
        %v1068 = vsel %vm1066, %v1064, 0
        %v1071 = vsel %vm1066, %v1065, 0
        %1073 = vmatprep.subr.bf16.mxu0 0
        %1074 = vmatpush1.bf16.xpose.msra.mxu0 %v1071
        %1075 = vmatprep.subr.bf16.mxu0 0
        %1076 = vmatpush1.bf16.xpose.msra.mxu0 0
        %1077 = vmatprep.subr.bf16.mxu0 0
        %1078 = vmatpush1.bf16.xpose.msra.mxu0 0
        %1079 = vmatprep.subr.bf16.mxu0 0
        %1080 = vmatpush1.bf16.xpose.msra.mxu0 0
        %1081 = vmatprep.subr.bf16.mxu0 0
        %1082 = vmatpush1.bf16.xpose.msra.mxu0 0
        %1083 = vmatprep.subr.bf16.mxu0 0
        %1084 = vmatpush1.bf16.xpose.msra.mxu0 0
        %1085 = vmatprep.subr.bf16.mxu0 0
        %1086 = vmatpush1.bf16.xpose.msra.mxu0 0
        %1087 = vmatprep.subr.bf16.mxu0 0
        %1088 = vmatpush1.bf16.xpose.msra.mxu0 0
        %1089 = vmatprep.subr.bf16.mxu0 0
        %1090 = vmatpush1.bf16.xpose.msra.mxu0 0
        %1091 = vmatprep.subr.bf16.mxu0 0
        %1092 = vmatpush1.bf16.xpose.msra.mxu0 0
        %1093 = vmatprep.subr.bf16.mxu0 0
        %1094 = vmatpush1.bf16.xpose.msra.mxu0 0
        %1095 = vmatprep.subr.bf16.mxu0 0
        %1096 = vmatpush1.bf16.xpose.msra.mxu0 0
        %1097 = vmatprep.subr.bf16.mxu0 0
        %1098 = vmatpush1.bf16.xpose.msra.mxu0 0
        %1099 = vmatprep.subr.bf16.mxu0 0
        %1100 = vmatpush1.bf16.xpose.msra.mxu0 0
        %1101 = vmatprep.subr.bf16.mxu0 0
        %1102 = vmatpush1.bf16.xpose.msra.mxu0 0
        %1103 = vmatprep.subr.bf16.mxu0 0
        %1104 = vmatpush1.bf16.xpose.msra.mxu0 0
        %1105 = vmatprep.mubr.bf16.mxu0 0
        %1106 = vmatmul.mubr.bf16.gmra.mrb[0].mxu0 %v1068
        %v1107 = vpop.f32.mrb[0].mxu0
        %v1108 = vadd.f32 0.0, %v1107
        %v1109 = vpop.f32.mrb[0].mxu0
        %v1110 = vpop.f32.mrb[0].mxu0
        %v1111 = vadd.f32 0.0, %v1110
        %v1112 = vpop.f32.mrb[0].mxu0
        %1113 = vdwg.mxu0
        %vm1114 = vcmask 130048
        %v1115 = vsel %vm1114, %v1108, -inf
        %1116 = vmax.xlane.f32.xlu0 %v1115
        %v1117 = vpop.xlane.xlu0 %1116
        %v1118 = vsel %vm1114, %v1111, -inf
        %1119 = vmax.xlane.f32.xlu0 %v1118
        %v1120 = vpop.xlane.xlu0 %1119
        %v1121 = vsub.f32 %v1108, %v1117
        %v1122 = vsub.f32 %v1111, %v1120
        %v1123 = vmul.f32 %v1121, 1.442695
        %v1124 = vpow.pop %v1123
        %v1125 = vmul.f32 %v1122, 1.442695
        %v1126 = vpow.pop %v1125
        %v1127 = vsel %vm1114, %v1124, 0.0
        %1128 = vadd.xlane.f32.xlu0 %v1127
        %v1129 = vpop.xlane.xlu0 %1128
        %v1130 = vsel %vm1114, %v1126, 0.0
        %1131 = vadd.xlane.f32.xlu0 %v1130
        %v1132 = vpop.xlane.xlu0 %1131
        %v1133 = vrcp.pop %v1129
        %v1134 = vrcp.pop %v1132
        %v1135 = vmul.f32 %v1124, %v1133
        %v1136 = vmul.f32 %v1126, %v1134
        %v1137 = vpack.c.bf16 %v1136, %v1135
        %v1138 = vpack.c.bf16 %v1044, %v1041
        %v1140 = vsel %vm1114, %v1137, 0
        %1142 = vmatprep.subr.bf16.mxu0 0
        %1143 = vmatpush1.bf16.msra.mxu0 %v1138
        %1144 = vmatprep.subr.bf16.mxu0 0
        %1145 = vmatpush1.bf16.msra.mxu0 0
        %1146 = vmatprep.subr.bf16.mxu0 0
        %1147 = vmatpush1.bf16.msra.mxu0 0
        %1148 = vmatprep.subr.bf16.mxu0 0
        %1149 = vmatpush1.bf16.msra.mxu0 0
        %1150 = vmatprep.subr.bf16.mxu0 0
        %1151 = vmatpush1.bf16.msra.mxu0 0
        %1152 = vmatprep.subr.bf16.mxu0 0
        %1153 = vmatpush1.bf16.msra.mxu0 0
        %1154 = vmatprep.subr.bf16.mxu0 0
        %1155 = vmatpush1.bf16.msra.mxu0 0
        %1156 = vmatprep.subr.bf16.mxu0 0
        %1157 = vmatpush1.bf16.msra.mxu0 0
        %1158 = vmatprep.subr.bf16.mxu0 0
        %1159 = vmatpush1.bf16.msra.mxu0 0
        %1160 = vmatprep.subr.bf16.mxu0 0
        %1161 = vmatpush1.bf16.msra.mxu0 0
        %1162 = vmatprep.subr.bf16.mxu0 0
        %1163 = vmatpush1.bf16.msra.mxu0 0
        %1164 = vmatprep.subr.bf16.mxu0 0
        %1165 = vmatpush1.bf16.msra.mxu0 0
        %1166 = vmatprep.subr.bf16.mxu0 0
        %1167 = vmatpush1.bf16.msra.mxu0 0
        %1168 = vmatprep.subr.bf16.mxu0 0
        %1169 = vmatpush1.bf16.msra.mxu0 0
        %1170 = vmatprep.subr.bf16.mxu0 0
        %1171 = vmatpush1.bf16.msra.mxu0 0
        %1172 = vmatprep.subr.bf16.mxu0 0
        %1173 = vmatpush1.bf16.msra.mxu0 0
        %1174 = vmatprep.mubr.bf16.mxu0 0
        %1175 = vmatmul.mubr.bf16.gmra.mrb[0].mxu0 %v1140
        %v1176 = vpop.f32.mrb[0].mxu0
        %v1177 = vadd.f32 0.0, %v1176
        %v1178 = vpop.f32.mrb[0].mxu0
        %v1179 = vpop.f32.mrb[0].mxu0
        %v1180 = vadd.f32 0.0, %v1179
        %v1181 = vpop.f32.mrb[0].mxu0
        %1182 = vdwg.mxu0
        %v1183 = vpack.c.bf16 %v1180, %v1177
        %v1184 = vpack.c.bf16 %v1048, %v1047
        %v1185 = vpack.c.bf16 %v1050, %v1049
        %v1186 = vpack.c.bf16 %v1052, %v1051
        %v1187 = vpack.c.bf16 %v1054, %v1053
        %v1189 = vsel %vm1066, %v1183, 0
        %1191 = vmatprep.subr.bf16.mxu0 0
        %1192 = vmatpush1.bf16.msra.mxu0 %v1184
        %1193 = vmatprep.subr.bf16.mxu0 0
        %1194 = vmatpush1.bf16.msra.mxu0 %v1185
        %1195 = vmatprep.subr.bf16.mxu0 0
        %1196 = vmatpush1.bf16.msra.mxu0 %v1186
        %1197 = vmatprep.subr.bf16.mxu0 0
        %1198 = vmatpush1.bf16.msra.mxu0 %v1187
        %1199 = vmatprep.subr.bf16.mxu0 0
        %1200 = vmatpush1.bf16.msra.mxu0 0
        %1201 = vmatprep.subr.bf16.mxu0 0
        %1202 = vmatpush1.bf16.msra.mxu0 0
        %1203 = vmatprep.subr.bf16.mxu0 0
        %1204 = vmatpush1.bf16.msra.mxu0 0
        %1205 = vmatprep.subr.bf16.mxu0 0
        %1206 = vmatpush1.bf16.msra.mxu0 0
        %1207 = vmatprep.subr.bf16.mxu0 0
        %1208 = vmatpush1.bf16.msra.mxu0 0
        %1209 = vmatprep.subr.bf16.mxu0 0
        %1210 = vmatpush1.bf16.msra.mxu0 0
        %1211 = vmatprep.subr.bf16.mxu0 0
        %1212 = vmatpush1.bf16.msra.mxu0 0
        %1213 = vmatprep.subr.bf16.mxu0 0
        %1214 = vmatpush1.bf16.msra.mxu0 0
        %1215 = vmatprep.subr.bf16.mxu0 0
        %1216 = vmatpush1.bf16.msra.mxu0 0
        %1217 = vmatprep.subr.bf16.mxu0 0
        %1218 = vmatpush1.bf16.msra.mxu0 0
        %1219 = vmatprep.subr.bf16.mxu0 0
        %1220 = vmatpush1.bf16.msra.mxu0 0
        %1221 = vmatprep.subr.bf16.mxu0 0
        %1222 = vmatpush1.bf16.msra.mxu0 0
        %1223 = vmatprep.mubr.bf16.mxu0 0
        %1224 = vmatmul.mubr.bf16.gmra.mrb[0].mxu0 %v1189
        %v1225 = vpop.f32.mrb[0].mxu0
        %v1226 = vadd.f32 0.0, %v1225
        %v1227 = vpop.f32.mrb[0].mxu0
        %v1228 = vpop.f32.mrb[0].mxu0
        %v1229 = vadd.f32 0.0, %v1228
        %v1230 = vpop.f32.mrb[0].mxu0
        %1231 = vdwg.mxu0
        %v1233 = vlaneseq
        %v1234 = vshrl.u32 %v1233, 7
        %v1235 = vsub.s32 0, %v1234
        %v1236 = vrot.slane %v1063, %v1235
        %v1238 = vadd.f32 %v1236, %v1226
        %v1239 = vadd.f32 %v1236, %v1229
        %1241 = vrot.lane.b32.xlu0 %v1064, 64
        %v1242 = vpop.permute.xlu0 %1241
        %1244 = vrot.lane.b32.xlu0 %v1065, 64
        %v1245 = vpop.permute.xlu0 %1244
        %v1247 = vsel %vm1066, %v1242, 0
        %v1250 = vsel %vm1066, %v1245, 0
        %1252 = vmatprep.subr.bf16.mxu0 0
        %1253 = vmatpush1.bf16.xpose.msra.mxu0 %v1250
        %1254 = vmatprep.subr.bf16.mxu0 0
        %1255 = vmatpush1.bf16.xpose.msra.mxu0 0
        %1256 = vmatprep.subr.bf16.mxu0 0
        %1257 = vmatpush1.bf16.xpose.msra.mxu0 0
        %1258 = vmatprep.subr.bf16.mxu0 0
        %1259 = vmatpush1.bf16.xpose.msra.mxu0 0
        %1260 = vmatprep.subr.bf16.mxu0 0
        %1261 = vmatpush1.bf16.xpose.msra.mxu0 0
        %1262 = vmatprep.subr.bf16.mxu0 0
        %1263 = vmatpush1.bf16.xpose.msra.mxu0 0
        %1264 = vmatprep.subr.bf16.mxu0 0
        %1265 = vmatpush1.bf16.xpose.msra.mxu0 0
        %1266 = vmatprep.subr.bf16.mxu0 0
        %1267 = vmatpush1.bf16.xpose.msra.mxu0 0
        %1268 = vmatprep.subr.bf16.mxu0 0
        %1269 = vmatpush1.bf16.xpose.msra.mxu0 0
        %1270 = vmatprep.subr.bf16.mxu0 0
        %1271 = vmatpush1.bf16.xpose.msra.mxu0 0
        %1272 = vmatprep.subr.bf16.mxu0 0
        %1273 = vmatpush1.bf16.xpose.msra.mxu0 0
        %1274 = vmatprep.subr.bf16.mxu0 0
        %1275 = vmatpush1.bf16.xpose.msra.mxu0 0
        %1276 = vmatprep.subr.bf16.mxu0 0
        %1277 = vmatpush1.bf16.xpose.msra.mxu0 0
        %1278 = vmatprep.subr.bf16.mxu0 0
        %1279 = vmatpush1.bf16.xpose.msra.mxu0 0
        %1280 = vmatprep.subr.bf16.mxu0 0
        %1281 = vmatpush1.bf16.xpose.msra.mxu0 0
        %1282 = vmatprep.subr.bf16.mxu0 0
        %1283 = vmatpush1.bf16.xpose.msra.mxu0 0
        %1284 = vmatprep.mubr.bf16.mxu0 0
        %1285 = vmatmul.mubr.bf16.gmra.mrb[0].mxu0 %v1247
        %v1286 = vpop.f32.mrb[0].mxu0
        %v1287 = vadd.f32 0.0, %v1286
        %v1288 = vpop.f32.mrb[0].mxu0
        %v1289 = vpop.f32.mrb[0].mxu0
        %v1290 = vadd.f32 0.0, %v1289
        %v1291 = vpop.f32.mrb[0].mxu0
        %1292 = vdwg.mxu0
        %v1293 = vsel %vm1114, %v1287, -inf
        %1294 = vmax.xlane.f32.xlu0 %v1293
        %v1295 = vpop.xlane.xlu0 %1294
        %v1296 = vsel %vm1114, %v1290, -inf
        %1297 = vmax.xlane.f32.xlu0 %v1296
        %v1298 = vpop.xlane.xlu0 %1297
        %v1299 = vsub.f32 %v1287, %v1295
        %v1300 = vsub.f32 %v1290, %v1298
        %v1301 = vmul.f32 %v1299, 1.442695
        %v1302 = vpow.pop %v1301
        %v1303 = vmul.f32 %v1300, 1.442695
        %v1304 = vpow.pop %v1303
        %v1305 = vsel %vm1114, %v1302, 0.0
        %1306 = vadd.xlane.f32.xlu0 %v1305
        %v1307 = vpop.xlane.xlu0 %1306
        %v1308 = vsel %vm1114, %v1304, 0.0
        %1309 = vadd.xlane.f32.xlu0 %v1308
        %v1310 = vpop.xlane.xlu0 %1309
        %v1311 = vrcp.pop %v1307
        %v1312 = vrcp.pop %v1310
        %v1313 = vmul.f32 %v1302, %v1311
        %v1314 = vmul.f32 %v1304, %v1312
        %v1315 = vpack.c.bf16 %v1314, %v1313
        %1317 = vrot.lane.b32.xlu0 %v1138, 64
        %v1318 = vpop.permute.xlu0 %1317
        %v1321 = vsel %vm1114, %v1315, 0
        %1323 = vmatprep.subr.bf16.mxu0 0
        %1324 = vmatpush1.bf16.msra.mxu0 %v1318
        %1325 = vmatprep.subr.bf16.mxu0 0
        %1326 = vmatpush1.bf16.msra.mxu0 0
        %1327 = vmatprep.subr.bf16.mxu0 0
        %1328 = vmatpush1.bf16.msra.mxu0 0
        %1329 = vmatprep.subr.bf16.mxu0 0
        %1330 = vmatpush1.bf16.msra.mxu0 0
        %1331 = vmatprep.subr.bf16.mxu0 0
        %1332 = vmatpush1.bf16.msra.mxu0 0
        %1333 = vmatprep.subr.bf16.mxu0 0
        %1334 = vmatpush1.bf16.msra.mxu0 0
        %1335 = vmatprep.subr.bf16.mxu0 0
        %1336 = vmatpush1.bf16.msra.mxu0 0
        %1337 = vmatprep.subr.bf16.mxu0 0
        %1338 = vmatpush1.bf16.msra.mxu0 0
        %1339 = vmatprep.subr.bf16.mxu0 0
        %1340 = vmatpush1.bf16.msra.mxu0 0
        %1341 = vmatprep.subr.bf16.mxu0 0
        %1342 = vmatpush1.bf16.msra.mxu0 0
        %1343 = vmatprep.subr.bf16.mxu0 0
        %1344 = vmatpush1.bf16.msra.mxu0 0
        %1345 = vmatprep.subr.bf16.mxu0 0
        %1346 = vmatpush1.bf16.msra.mxu0 0
        %1347 = vmatprep.subr.bf16.mxu0 0
        %1348 = vmatpush1.bf16.msra.mxu0 0
        %1349 = vmatprep.subr.bf16.mxu0 0
        %1350 = vmatpush1.bf16.msra.mxu0 0
        %1351 = vmatprep.subr.bf16.mxu0 0
        %1352 = vmatpush1.bf16.msra.mxu0 0
        %1353 = vmatprep.subr.bf16.mxu0 0
        %1354 = vmatpush1.bf16.msra.mxu0 0
        %1355 = vmatprep.mubr.bf16.mxu0 0
        %1356 = vmatmul.mubr.bf16.gmra.mrb[0].mxu0 %v1321
        %v1357 = vpop.f32.mrb[0].mxu0
        %v1358 = vadd.f32 0.0, %v1357
        %v1359 = vpop.f32.mrb[0].mxu0
        %v1360 = vpop.f32.mrb[0].mxu0
        %v1361 = vadd.f32 0.0, %v1360
        %v1362 = vpop.f32.mrb[0].mxu0
        %1363 = vdwg.mxu0
        %v1364 = vpack.c.bf16 %v1361, %v1358
        %v1365 = vpack.c.bf16 %v1056, %v1055
        %v1366 = vpack.c.bf16 %v1058, %v1057
        %v1367 = vpack.c.bf16 %v1060, %v1059
        %v1368 = vpack.c.bf16 %v1062, %v1061
        %v1370 = vsel %vm1066, %v1364, 0
        %1372 = vmatprep.subr.bf16.mxu0 0
        %1373 = vmatpush1.bf16.msra.mxu0 %v1365
        %1374 = vmatprep.subr.bf16.mxu0 0
        %1375 = vmatpush1.bf16.msra.mxu0 %v1366
        %1376 = vmatprep.subr.bf16.mxu0 0
        %1377 = vmatpush1.bf16.msra.mxu0 %v1367
        %1378 = vmatprep.subr.bf16.mxu0 0
        %1379 = vmatpush1.bf16.msra.mxu0 %v1368
        %1380 = vmatprep.subr.bf16.mxu0 0
        %1381 = vmatpush1.bf16.msra.mxu0 0
        %1382 = vmatprep.subr.bf16.mxu0 0
        %1383 = vmatpush1.bf16.msra.mxu0 0
        %1384 = vmatprep.subr.bf16.mxu0 0
        %1385 = vmatpush1.bf16.msra.mxu0 0
        %1386 = vmatprep.subr.bf16.mxu0 0
        %1387 = vmatpush1.bf16.msra.mxu0 0
        %1388 = vmatprep.subr.bf16.mxu0 0
        %1389 = vmatpush1.bf16.msra.mxu0 0
        %1390 = vmatprep.subr.bf16.mxu0 0
        %1391 = vmatpush1.bf16.msra.mxu0 0
        %1392 = vmatprep.subr.bf16.mxu0 0
        %1393 = vmatpush1.bf16.msra.mxu0 0
        %1394 = vmatprep.subr.bf16.mxu0 0
        %1395 = vmatpush1.bf16.msra.mxu0 0
        %1396 = vmatprep.subr.bf16.mxu0 0
        %1397 = vmatpush1.bf16.msra.mxu0 0
        %1398 = vmatprep.subr.bf16.mxu0 0
        %1399 = vmatpush1.bf16.msra.mxu0 0
        %1400 = vmatprep.subr.bf16.mxu0 0
        %1401 = vmatpush1.bf16.msra.mxu0 0
        %1402 = vmatprep.subr.bf16.mxu0 0
        %1403 = vmatpush1.bf16.msra.mxu0 0
        %1404 = vmatprep.mubr.bf16.mxu0 0
        %1405 = vmatmul.mubr.bf16.gmra.mrb[0].mxu0 %v1370
        %v1406 = vpop.f32.mrb[0].mxu0
        %v1407 = vadd.f32 0.0, %v1406
        %v1408 = vpop.f32.mrb[0].mxu0
        %v1409 = vpop.f32.mrb[0].mxu0
        %v1410 = vadd.f32 0.0, %v1409
        %v1411 = vpop.f32.mrb[0].mxu0
        %1412 = vdwg.mxu0
        %v1413 = vadd.f32 %v1238, %v1407
        %v1414 = vadd.f32 %v1239, %v1410
        %v1415 = vadd.f32 %v829, %v1413
        %v1416 = vadd.f32 %v830, %v1414
        %v1417 = vld [vmem:[%s10] sm:$0x1]
        %v1418 = vld [vmem:[%s11] sm:$0x1]
        %1419 = vadd.xlane.f32.xlu0 %v1415
        %v1420 = vpop.xlane.xlu0 %1419
        %1421 = vadd.xlane.f32.xlu0 %v1416
        %v1422 = vpop.xlane.xlu0 %1421
        %v1423 = vmul.f32 %v1420, 0.03125
        %v1424 = vmul.f32 %v1422, 0.03125
        %v1425 = vsub.f32 %v1415, %v1423
        %v1426 = vsub.f32 %v1416, %v1424
        %v1427 = vmul.f32 %v1425, %v724
        %v1428 = vmul.f32 %v1426, %v724
        %v1429 = vmul.f32 %v1427, %v1427
        %v1430 = vmul.f32 %v1428, %v1428
        %1431 = vadd.xlane.f32.xlu0 %v1429
        %v1432 = vpop.xlane.xlu0 %1431
        %1433 = vadd.xlane.f32.xlu0 %v1430
        %v1434 = vpop.xlane.xlu0 %1433
        %v1435 = vmul.f32 %v1432, 0.03125
        %v1436 = vmul.f32 %v1434, 0.03125
        %v1437 = vadd.f32 %v1435, 1e-06
        %v1438 = vadd.f32 %v1436, 1e-06
        %v1439 = vrsqrt.pop %v1437
        %v1440 = vrsqrt.pop %v1438
        %v1441 = vmul.f32 %v1427, %v1439
        %v1442 = vmul.f32 %v1428, %v1440
        %v1444 = vlaneseq
        %v1445 = vshrl.u32 %v1444, 7
        %v1446 = vsub.s32 0, %v1445
        %v1447 = vrot.slane %v1417, %v1446
        %v1449 = vmul.f32 %v1441, %v1447
        %v1450 = vmul.f32 %v1442, %v1447
        %v1452 = vlaneseq
        %v1453 = vshrl.u32 %v1452, 7
        %v1454 = vsub.s32 0, %v1453
        %v1455 = vrot.slane %v1418, %v1454
        %v1457 = vadd.f32 %v1449, %v1455
        %v1458 = vadd.f32 %v1450, %v1455
        %v1459 = vld [vmem:[#allocation13] sm:$0xff]
        %v1460 = vld [vmem:[#allocation13 + $0x8] sm:$0xff]
        %v1461 = vld [vmem:[#allocation13 + $0x10] sm:$0xff]
        %v1462 = vld [vmem:[#allocation13 + $0x18] sm:$0xff]
        %v1463 = vld [vmem:[#allocation13 + $0x20] sm:$0xff]
        %v1464 = vld [vmem:[#allocation13 + $0x28] sm:$0xff]
        %v1465 = vld [vmem:[#allocation13 + $0x30] sm:$0xff]
        %v1466 = vld [vmem:[#allocation13 + $0x38] sm:$0xff]
        %v1467 = vld [vmem:[#allocation13 + $0x40] sm:$0xff]
        %v1468 = vld [vmem:[#allocation13 + $0x48] sm:$0xff]
        %v1469 = vld [vmem:[#allocation13 + $0x50] sm:$0xff]
        %v1470 = vld [vmem:[#allocation13 + $0x58] sm:$0xff]
        %v1471 = vld [vmem:[#allocation13 + $0x60] sm:$0xff]
        %v1472 = vld [vmem:[#allocation13 + $0x68] sm:$0xff]
        %v1473 = vld [vmem:[#allocation13 + $0x70] sm:$0xff]
        %v1474 = vld [vmem:[#allocation13 + $0x78] sm:$0xff]
        %v1475 = vpack.c.bf16 %v1458, %v1457
        %v1476 = vpack.c.bf16 %v1460, %v1459
        %v1477 = vpack.c.bf16 %v1462, %v1461
        %v1478 = vpack.c.bf16 %v1464, %v1463
        %v1479 = vpack.c.bf16 %v1466, %v1465
        %v1480 = vpack.c.bf16 %v1468, %v1467
        %v1481 = vpack.c.bf16 %v1470, %v1469
        %v1482 = vpack.c.bf16 %v1472, %v1471
        %v1483 = vpack.c.bf16 %v1474, %v1473
        %v1484 = vld [vmem:[%s13] sm:$0x1]
        %v1486 = vlaneseq
        %v1487 = vshrl.u32 %v1486, 7
        %v1488 = vsub.s32 0, %v1487
        %v1489 = vrot.slane %v1484, %v1488
        %1491 = vmatprep.subr.bf16.mxu0 0
        %1492 = vmatpush1.bf16.msra.mxu0 %v1476
        %1493 = vmatprep.subr.bf16.mxu0 0
        %1494 = vmatpush1.bf16.msra.mxu0 %v1477
        %1495 = vmatprep.subr.bf16.mxu0 0
        %1496 = vmatpush1.bf16.msra.mxu0 %v1478
        %1497 = vmatprep.subr.bf16.mxu0 0
        %1498 = vmatpush1.bf16.msra.mxu0 %v1479
        %1499 = vmatprep.subr.bf16.mxu0 0
        %1500 = vmatpush1.bf16.msra.mxu0 %v1480
        %1501 = vmatprep.subr.bf16.mxu0 0
        %1502 = vmatpush1.bf16.msra.mxu0 %v1481
        %1503 = vmatprep.subr.bf16.mxu0 0
        %1504 = vmatpush1.bf16.msra.mxu0 %v1482
        %1505 = vmatprep.subr.bf16.mxu0 0
        %1506 = vmatpush1.bf16.msra.mxu0 %v1483
        %1507 = vmatprep.subr.bf16.mxu0 0
        %1508 = vmatpush1.bf16.msra.mxu0 0
        %1509 = vmatprep.subr.bf16.mxu0 0
        %1510 = vmatpush1.bf16.msra.mxu0 0
        %1511 = vmatprep.subr.bf16.mxu0 0
        %1512 = vmatpush1.bf16.msra.mxu0 0
        %1513 = vmatprep.subr.bf16.mxu0 0
        %1514 = vmatpush1.bf16.msra.mxu0 0
        %1515 = vmatprep.subr.bf16.mxu0 0
        %1516 = vmatpush1.bf16.msra.mxu0 0
        %1517 = vmatprep.subr.bf16.mxu0 0
        %1518 = vmatpush1.bf16.msra.mxu0 0
        %1519 = vmatprep.subr.bf16.mxu0 0
        %1520 = vmatpush1.bf16.msra.mxu0 0
        %1521 = vmatprep.subr.bf16.mxu0 0
        %1522 = vmatpush1.bf16.msra.mxu0 0
        %1523 = vmatprep.mubr.bf16.mxu0 0
        %1524 = vmatmul.mubr.bf16.gmra.mrb[0].mxu0 %v1475
        %v1525 = vpop.f32.mrb[0].mxu0
        %v1526 = vadd.f32 %v1489, %v1525
        %v1527 = vpop.f32.mrb[0].mxu0
        %v1528 = vpop.f32.mrb[0].mxu0
        %v1529 = vadd.f32 %v1489, %v1528
        %v1530 = vpop.f32.mrb[0].mxu0
        %1531 = vdwg.mxu0
        %v1532 = vmul.f32 %v1526, 0.5
        %v1533 = vmul.f32 %v1529, 0.5
        %v1534 = vmul.f32 %v1526, 0.044715
        %v1535 = vmul.f32 %v1529, 0.044715
        %v1536 = vmul.f32 %v1534, %v1526
        %v1537 = vmul.f32 %v1535, %v1529
        %v1538 = vmul.f32 %v1536, %v1526
        %v1539 = vmul.f32 %v1537, %v1529
        %v1540 = vadd.f32 %v1526, %v1538
        %v1541 = vadd.f32 %v1529, %v1539
        %v1542 = vmul.f32 %v1540, 0.7978846
        %v1543 = vmul.f32 %v1541, 0.7978846
        %v1544 = vtanh.pop %v1542
        %v1545 = vtanh.pop %v1543
        %v1546 = vadd.f32 %v1544, 1.0
        %v1547 = vadd.f32 %v1545, 1.0
        %v1548 = vmul.f32 %v1532, %v1546
        %v1549 = vmul.f32 %v1533, %v1547
        %v1550 = vld [vmem:[#allocation14] sm:$0xff]
        %v1551 = vld [vmem:[#allocation14 + $0x8] sm:$0xff]
        %v1552 = vld [vmem:[#allocation14 + $0x10] sm:$0xff]
        %v1553 = vld [vmem:[#allocation14 + $0x18] sm:$0xff]
        %v1554 = vld [vmem:[#allocation14 + $0x20] sm:$0xff]
        %v1555 = vld [vmem:[#allocation14 + $0x28] sm:$0xff]
        %v1556 = vld [vmem:[#allocation14 + $0x30] sm:$0xff]
        %v1557 = vld [vmem:[#allocation14 + $0x38] sm:$0xff]
        %v1558 = vld [vmem:[#allocation14 + $0x40] sm:$0xff]
        %v1559 = vld [vmem:[#allocation14 + $0x48] sm:$0xff]
        %v1560 = vld [vmem:[#allocation14 + $0x50] sm:$0xff]
        %v1561 = vld [vmem:[#allocation14 + $0x58] sm:$0xff]
        %v1562 = vld [vmem:[#allocation14 + $0x60] sm:$0xff]
        %v1563 = vld [vmem:[#allocation14 + $0x68] sm:$0xff]
        %v1564 = vld [vmem:[#allocation14 + $0x70] sm:$0xff]
        %v1565 = vld [vmem:[#allocation14 + $0x78] sm:$0xff]
        %v1566 = vpack.c.bf16 %v1549, %v1548
        %v1567 = vpack.c.bf16 %v1551, %v1550
        %v1568 = vpack.c.bf16 %v1553, %v1552
        %v1569 = vpack.c.bf16 %v1555, %v1554
        %v1570 = vpack.c.bf16 %v1557, %v1556
        %v1571 = vpack.c.bf16 %v1559, %v1558
        %v1572 = vpack.c.bf16 %v1561, %v1560
        %v1573 = vpack.c.bf16 %v1563, %v1562
        %v1574 = vpack.c.bf16 %v1565, %v1564
        %v1575 = vld [vmem:[%s15] sm:$0x1]
        %v1577 = vlaneseq
        %v1578 = vshrl.u32 %v1577, 7
        %v1579 = vsub.s32 0, %v1578
        %v1580 = vrot.slane %v1575, %v1579
        %1582 = vmatprep.subr.bf16.mxu0 0
        %1583 = vmatpush1.bf16.msra.mxu0 %v1567
        %1584 = vmatprep.subr.bf16.mxu0 0
        %1585 = vmatpush1.bf16.msra.mxu0 %v1568
        %1586 = vmatprep.subr.bf16.mxu0 0
        %1587 = vmatpush1.bf16.msra.mxu0 %v1569
        %1588 = vmatprep.subr.bf16.mxu0 0
        %1589 = vmatpush1.bf16.msra.mxu0 %v1570
        %1590 = vmatprep.subr.bf16.mxu0 0
        %1591 = vmatpush1.bf16.msra.mxu0 %v1571
        %1592 = vmatprep.subr.bf16.mxu0 0
        %1593 = vmatpush1.bf16.msra.mxu0 %v1572
        %1594 = vmatprep.subr.bf16.mxu0 0
        %1595 = vmatpush1.bf16.msra.mxu0 %v1573
        %1596 = vmatprep.subr.bf16.mxu0 0
        %1597 = vmatpush1.bf16.msra.mxu0 %v1574
        %1598 = vmatprep.subr.bf16.mxu0 0
        %1599 = vmatpush1.bf16.msra.mxu0 0
        %1600 = vmatprep.subr.bf16.mxu0 0
        %1601 = vmatpush1.bf16.msra.mxu0 0
        %1602 = vmatprep.subr.bf16.mxu0 0
        %1603 = vmatpush1.bf16.msra.mxu0 0
        %1604 = vmatprep.subr.bf16.mxu0 0
        %1605 = vmatpush1.bf16.msra.mxu0 0
        %1606 = vmatprep.subr.bf16.mxu0 0
        %1607 = vmatpush1.bf16.msra.mxu0 0
        %1608 = vmatprep.subr.bf16.mxu0 0
        %1609 = vmatpush1.bf16.msra.mxu0 0
        %1610 = vmatprep.subr.bf16.mxu0 0
        %1611 = vmatpush1.bf16.msra.mxu0 0
        %1612 = vmatprep.subr.bf16.mxu0 0
        %1613 = vmatpush1.bf16.msra.mxu0 0
        %1614 = vmatprep.mubr.bf16.mxu0 0
        %1615 = vmatmul.mubr.bf16.gmra.mrb[0].mxu0 %v1566
        %v1616 = vpop.f32.mrb[0].mxu0
        %v1617 = vadd.f32 %v1580, %v1616
        %v1618 = vpop.f32.mrb[0].mxu0
        %v1619 = vpop.f32.mrb[0].mxu0
        %v1620 = vadd.f32 %v1580, %v1619
        %v1621 = vpop.f32.mrb[0].mxu0
        %1622 = vdwg.mxu0
        %v1623 = vadd.f32 %v1415, %v1617
        %v1624 = vadd.f32 %v1416, %v1620
        %s1625 = scalar_lea.vmem %s4, 1
        %v1626 = vld [vmem:[%s1625] sm:$0x1]
        %s1627 = scalar_lea.vmem %s5, 1
        %v1628 = vld [vmem:[%s1627] sm:$0x1]
        %1629 = vadd.xlane.f32.xlu0 %v1623
        %v1630 = vpop.xlane.xlu0 %1629
        %1631 = vadd.xlane.f32.xlu0 %v1624
        %v1632 = vpop.xlane.xlu0 %1631
        %v1633 = vmul.f32 %v1630, 0.03125
        %v1634 = vmul.f32 %v1632, 0.03125
        %v1635 = vsub.f32 %v1623, %v1633
        %v1636 = vsub.f32 %v1624, %v1634
        %v1637 = vmul.f32 %v1635, %v724
        %v1638 = vmul.f32 %v1636, %v724
        %v1639 = vmul.f32 %v1637, %v1637
        %v1640 = vmul.f32 %v1638, %v1638
        %1641 = vadd.xlane.f32.xlu0 %v1639
        %v1642 = vpop.xlane.xlu0 %1641
        %1643 = vadd.xlane.f32.xlu0 %v1640
        %v1644 = vpop.xlane.xlu0 %1643
        %v1645 = vmul.f32 %v1642, 0.03125
        %v1646 = vmul.f32 %v1644, 0.03125
        %v1647 = vadd.f32 %v1645, 1e-06
        %v1648 = vadd.f32 %v1646, 1e-06
        %v1649 = vrsqrt.pop %v1647
        %v1650 = vrsqrt.pop %v1648
        %v1651 = vmul.f32 %v1637, %v1649
        %v1652 = vmul.f32 %v1638, %v1650
        %v1654 = vlaneseq
        %v1655 = vshrl.u32 %v1654, 7
        %v1656 = vsub.s32 0, %v1655
        %v1657 = vrot.slane %v1626, %v1656
        %v1659 = vmul.f32 %v1651, %v1657
        %v1660 = vmul.f32 %v1652, %v1657
        %v1662 = vlaneseq
        %v1663 = vshrl.u32 %v1662, 7
        %v1664 = vsub.s32 0, %v1663
        %v1665 = vrot.slane %v1628, %v1664
        %v1667 = vadd.f32 %v1659, %v1665
        %v1668 = vadd.f32 %v1660, %v1665
        %s1669 = scalar_lea.vmem [#allocation10], 384
        %v1670 = vld [vmem:[%s1669] sm:$0xff]
        %v1671 = vld [vmem:[%s1669 + $0x8] sm:$0xff]
        %v1672 = vld [vmem:[%s1669 + $0x10] sm:$0xff]
        %v1673 = vld [vmem:[%s1669 + $0x18] sm:$0xff]
        %v1674 = vld [vmem:[%s1669 + $0x20] sm:$0xff]
        %v1675 = vld [vmem:[%s1669 + $0x28] sm:$0xff]
        %v1676 = vld [vmem:[%s1669 + $0x30] sm:$0xff]
        %v1677 = vld [vmem:[%s1669 + $0x38] sm:$0xff]
        %v1678 = vld [vmem:[%s1669 + $0x40] sm:$0xff]
        %v1679 = vld [vmem:[%s1669 + $0x48] sm:$0xff]
        %v1680 = vld [vmem:[%s1669 + $0x50] sm:$0xff]
        %v1681 = vld [vmem:[%s1669 + $0x58] sm:$0xff]
        %v1682 = vld [vmem:[%s1669 + $0x60] sm:$0xff]
        %v1683 = vld [vmem:[%s1669 + $0x68] sm:$0xff]
        %v1684 = vld [vmem:[%s1669 + $0x70] sm:$0xff]
        %v1685 = vld [vmem:[%s1669 + $0x78] sm:$0xff]
        %v1686 = vld [vmem:[%s1669 + $0x80] sm:$0xff]
        %v1687 = vld [vmem:[%s1669 + $0x88] sm:$0xff]
        %v1688 = vld [vmem:[%s1669 + $0x90] sm:$0xff]
        %v1689 = vld [vmem:[%s1669 + $0x98] sm:$0xff]
        %v1690 = vld [vmem:[%s1669 + $0xa0] sm:$0xff]
        %v1691 = vld [vmem:[%s1669 + $0xa8] sm:$0xff]
        %v1692 = vld [vmem:[%s1669 + $0xb0] sm:$0xff]
        %v1693 = vld [vmem:[%s1669 + $0xb8] sm:$0xff]
        %v1694 = vld [vmem:[%s1669 + $0xc0] sm:$0xff]
        %v1695 = vld [vmem:[%s1669 + $0xc8] sm:$0xff]
        %v1696 = vld [vmem:[%s1669 + $0xd0] sm:$0xff]
        %v1697 = vld [vmem:[%s1669 + $0xd8] sm:$0xff]
        %v1698 = vld [vmem:[%s1669 + $0xe0] sm:$0xff]
        %v1699 = vld [vmem:[%s1669 + $0xe8] sm:$0xff]
        %v1700 = vld [vmem:[%s1669 + $0xf0] sm:$0xff]
        %v1701 = vld [vmem:[%s1669 + $0xf8] sm:$0xff]
        %v1702 = vld [vmem:[%s1669 + $0x100] sm:$0xff]
        %v1703 = vld [vmem:[%s1669 + $0x108] sm:$0xff]
        %v1704 = vld [vmem:[%s1669 + $0x110] sm:$0xff]
        %v1705 = vld [vmem:[%s1669 + $0x118] sm:$0xff]
        %v1706 = vld [vmem:[%s1669 + $0x120] sm:$0xff]
        %v1707 = vld [vmem:[%s1669 + $0x128] sm:$0xff]
        %v1708 = vld [vmem:[%s1669 + $0x130] sm:$0xff]
        %v1709 = vld [vmem:[%s1669 + $0x138] sm:$0xff]
        %v1710 = vld [vmem:[%s1669 + $0x140] sm:$0xff]
        %v1711 = vld [vmem:[%s1669 + $0x148] sm:$0xff]
        %v1712 = vld [vmem:[%s1669 + $0x150] sm:$0xff]
        %v1713 = vld [vmem:[%s1669 + $0x158] sm:$0xff]
        %v1714 = vld [vmem:[%s1669 + $0x160] sm:$0xff]
        %v1715 = vld [vmem:[%s1669 + $0x168] sm:$0xff]
        %v1716 = vld [vmem:[%s1669 + $0x170] sm:$0xff]
        %v1717 = vld [vmem:[%s1669 + $0x178] sm:$0xff]
        %v1718 = vpack.c.bf16 %v1668, %v1667
        %v1719 = vpack.c.bf16 %v1673, %v1670
        %v1720 = vpack.c.bf16 %v1674, %v1671
        %v1721 = vpack.c.bf16 %v1675, %v1672
        %v1722 = vpack.c.bf16 %v1679, %v1676
        %v1723 = vpack.c.bf16 %v1680, %v1677
        %v1724 = vpack.c.bf16 %v1681, %v1678
        %v1725 = vpack.c.bf16 %v1685, %v1682
        %v1726 = vpack.c.bf16 %v1686, %v1683
        %v1727 = vpack.c.bf16 %v1687, %v1684
        %v1728 = vpack.c.bf16 %v1691, %v1688
        %v1729 = vpack.c.bf16 %v1692, %v1689
        %v1730 = vpack.c.bf16 %v1693, %v1690
        %v1731 = vpack.c.bf16 %v1697, %v1694
        %v1732 = vpack.c.bf16 %v1698, %v1695
        %v1733 = vpack.c.bf16 %v1699, %v1696
        %v1734 = vpack.c.bf16 %v1703, %v1700
        %v1735 = vpack.c.bf16 %v1704, %v1701
        %v1736 = vpack.c.bf16 %v1705, %v1702
        %v1737 = vpack.c.bf16 %v1709, %v1706
        %v1738 = vpack.c.bf16 %v1710, %v1707
        %v1739 = vpack.c.bf16 %v1711, %v1708
        %v1740 = vpack.c.bf16 %v1715, %v1712
        %v1741 = vpack.c.bf16 %v1716, %v1713
        %v1742 = vpack.c.bf16 %v1717, %v1714
        %s1743 = scalar_lea.vmem %s7, 3
        %v1744 = vld [vmem:[%s1743] sm:$0x7]
        %v1746 = vlaneseq
        %v1747 = vshrl.u32 %v1746, 7
        %v1748 = vsub.s32 0, %v1747
        %v1749 = vrot.slane %v1744, %v1748
        %v1750 = vlaneseq
        %v1751 = vshrl.u32 %v1750, 7
        %v1752 = vsub.s32 1, %v1751
        %v1753 = vrot.slane %v1744, %v1752
        %v1754 = vlaneseq
        %v1755 = vshrl.u32 %v1754, 7
        %v1756 = vsub.s32 2, %v1755
        %v1757 = vrot.slane %v1744, %v1756
        %1761 = vmatprep.subr.bf16.mxu0 %v1720
        %1762 = vmatpush1.bf16.msra.mxu0 %v1719
        %1763 = vmatprep.subr.bf16.mxu0 %v1723
        %1764 = vmatpush1.bf16.msra.mxu0 %v1722
        %1765 = vmatprep.subr.bf16.mxu0 %v1726
        %1766 = vmatpush1.bf16.msra.mxu0 %v1725
        %1767 = vmatprep.subr.bf16.mxu0 %v1729
        %1768 = vmatpush1.bf16.msra.mxu0 %v1728
        %1769 = vmatprep.subr.bf16.mxu0 %v1732
        %1770 = vmatpush1.bf16.msra.mxu0 %v1731
        %1771 = vmatprep.subr.bf16.mxu0 %v1735
        %1772 = vmatpush1.bf16.msra.mxu0 %v1734
        %1773 = vmatprep.subr.bf16.mxu0 %v1738
        %1774 = vmatpush1.bf16.msra.mxu0 %v1737
        %1775 = vmatprep.subr.bf16.mxu0 %v1741
        %1776 = vmatpush1.bf16.msra.mxu0 %v1740
        %1777 = vmatprep.subr.bf16.mxu0 0
        %1778 = vmatpush1.bf16.msra.mxu0 0
        %1779 = vmatprep.subr.bf16.mxu0 0
        %1780 = vmatpush1.bf16.msra.mxu0 0
        %1781 = vmatprep.subr.bf16.mxu0 0
        %1782 = vmatpush1.bf16.msra.mxu0 0
        %1783 = vmatprep.subr.bf16.mxu0 0
        %1784 = vmatpush1.bf16.msra.mxu0 0
        %1785 = vmatprep.subr.bf16.mxu0 0
        %1786 = vmatpush1.bf16.msra.mxu0 0
        %1787 = vmatprep.subr.bf16.mxu0 0
        %1788 = vmatpush1.bf16.msra.mxu0 0
        %1789 = vmatprep.subr.bf16.mxu0 0
        %1790 = vmatpush1.bf16.msra.mxu0 0
        %1791 = vmatprep.subr.bf16.mxu0 0
        %1792 = vmatpush1.bf16.msra.mxu0 0
        %1793 = vmatprep.mubr.bf16.mxu0 0
        %1794 = vmatmul.mubr.bf16.gmra.mrb[0].mxu0 %v1718
        %v1795 = vpop.f32.mrb[0].mxu0
        %v1796 = vadd.f32 %v1749, %v1795
        %v1797 = vpop.f32.mrb[0].mxu0
        %v1798 = vadd.f32 %v1753, %v1797
        %v1799 = vpop.f32.mrb[0].mxu0
        %v1800 = vadd.f32 %v1749, %v1799
        %v1801 = vpop.f32.mrb[0].mxu0
        %v1802 = vadd.f32 %v1753, %v1801
        %1803 = vdwg.mxu0
        %1804 = vmatprep.subr.bf16.mxu0 0
        %1805 = vmatpush1.bf16.msra.mxu0 %v1721
        %1806 = vmatprep.subr.bf16.mxu0 0
        %1807 = vmatpush1.bf16.msra.mxu0 %v1724
        %1808 = vmatprep.subr.bf16.mxu0 0
        %1809 = vmatpush1.bf16.msra.mxu0 %v1727
        %1810 = vmatprep.subr.bf16.mxu0 0
        %1811 = vmatpush1.bf16.msra.mxu0 %v1730
        %1812 = vmatprep.subr.bf16.mxu0 0
        %1813 = vmatpush1.bf16.msra.mxu0 %v1733
        %1814 = vmatprep.subr.bf16.mxu0 0
        %1815 = vmatpush1.bf16.msra.mxu0 %v1736
        %1816 = vmatprep.subr.bf16.mxu0 0
        %1817 = vmatpush1.bf16.msra.mxu0 %v1739
        %1818 = vmatprep.subr.bf16.mxu0 0
        %1819 = vmatpush1.bf16.msra.mxu0 %v1742
        %1820 = vmatprep.subr.bf16.mxu0 0
        %1821 = vmatpush1.bf16.msra.mxu0 0
        %1822 = vmatprep.subr.bf16.mxu0 0
        %1823 = vmatpush1.bf16.msra.mxu0 0
        %1824 = vmatprep.subr.bf16.mxu0 0
        %1825 = vmatpush1.bf16.msra.mxu0 0
        %1826 = vmatprep.subr.bf16.mxu0 0
        %1827 = vmatpush1.bf16.msra.mxu0 0
        %1828 = vmatprep.subr.bf16.mxu0 0
        %1829 = vmatpush1.bf16.msra.mxu0 0
        %1830 = vmatprep.subr.bf16.mxu0 0
        %1831 = vmatpush1.bf16.msra.mxu0 0
        %1832 = vmatprep.subr.bf16.mxu0 0
        %1833 = vmatpush1.bf16.msra.mxu0 0
        %1834 = vmatprep.subr.bf16.mxu0 0
        %1835 = vmatpush1.bf16.msra.mxu0 0
        %1836 = vmatprep.mubr.bf16.mxu0 0
        %1837 = vmatmul.mubr.bf16.gmra.mrb[0].mxu0 %v1718
        %v1838 = vpop.f32.mrb[0].mxu0
        %v1839 = vadd.f32 %v1757, %v1838
        %v1840 = vpop.f32.mrb[0].mxu0
        %v1841 = vpop.f32.mrb[0].mxu0
        %v1842 = vadd.f32 %v1757, %v1841
        %v1843 = vpop.f32.mrb[0].mxu0
        %1844 = vdwg.mxu0
        %s1845 = scalar_lea.vmem [#allocation11], 128
        %v1846 = vld [vmem:[%s1845] sm:$0xff]
        %v1847 = vld [vmem:[%s1845 + $0x8] sm:$0xff]
        %v1848 = vld [vmem:[%s1845 + $0x10] sm:$0xff]
        %v1849 = vld [vmem:[%s1845 + $0x18] sm:$0xff]
        %v1850 = vld [vmem:[%s1845 + $0x20] sm:$0xff]
        %v1851 = vld [vmem:[%s1845 + $0x28] sm:$0xff]
        %v1852 = vld [vmem:[%s1845 + $0x30] sm:$0xff]
        %v1853 = vld [vmem:[%s1845 + $0x38] sm:$0xff]
        %v1854 = vld [vmem:[%s1845 + $0x40] sm:$0xff]
        %v1855 = vld [vmem:[%s1845 + $0x48] sm:$0xff]
        %v1856 = vld [vmem:[%s1845 + $0x50] sm:$0xff]
        %v1857 = vld [vmem:[%s1845 + $0x58] sm:$0xff]
        %v1858 = vld [vmem:[%s1845 + $0x60] sm:$0xff]
        %v1859 = vld [vmem:[%s1845 + $0x68] sm:$0xff]
        %v1860 = vld [vmem:[%s1845 + $0x70] sm:$0xff]
        %v1861 = vld [vmem:[%s1845 + $0x78] sm:$0xff]
        %s1862 = scalar_lea.vmem %s9, 1
        %v1863 = vld [vmem:[%s1862] sm:$0x1]
        %v1864 = vpack.c.bf16 %v1800, %v1796
        %v1865 = vpack.c.bf16 %v1802, %v1798
        %v1867 = vsel %vm1066, %v1864, 0
        %v1870 = vsel %vm1066, %v1865, 0
        %1872 = vmatprep.subr.bf16.mxu0 0
        %1873 = vmatpush1.bf16.xpose.msra.mxu0 %v1870
        %1874 = vmatprep.subr.bf16.mxu0 0
        %1875 = vmatpush1.bf16.xpose.msra.mxu0 0
        %1876 = vmatprep.subr.bf16.mxu0 0
        %1877 = vmatpush1.bf16.xpose.msra.mxu0 0
        %1878 = vmatprep.subr.bf16.mxu0 0
        %1879 = vmatpush1.bf16.xpose.msra.mxu0 0
        %1880 = vmatprep.subr.bf16.mxu0 0
        %1881 = vmatpush1.bf16.xpose.msra.mxu0 0
        %1882 = vmatprep.subr.bf16.mxu0 0
        %1883 = vmatpush1.bf16.xpose.msra.mxu0 0
        %1884 = vmatprep.subr.bf16.mxu0 0
        %1885 = vmatpush1.bf16.xpose.msra.mxu0 0
        %1886 = vmatprep.subr.bf16.mxu0 0
        %1887 = vmatpush1.bf16.xpose.msra.mxu0 0
        %1888 = vmatprep.subr.bf16.mxu0 0
        %1889 = vmatpush1.bf16.xpose.msra.mxu0 0
        %1890 = vmatprep.subr.bf16.mxu0 0
        %1891 = vmatpush1.bf16.xpose.msra.mxu0 0
        %1892 = vmatprep.subr.bf16.mxu0 0
        %1893 = vmatpush1.bf16.xpose.msra.mxu0 0
        %1894 = vmatprep.subr.bf16.mxu0 0
        %1895 = vmatpush1.bf16.xpose.msra.mxu0 0
        %1896 = vmatprep.subr.bf16.mxu0 0
        %1897 = vmatpush1.bf16.xpose.msra.mxu0 0
        %1898 = vmatprep.subr.bf16.mxu0 0
        %1899 = vmatpush1.bf16.xpose.msra.mxu0 0
        %1900 = vmatprep.subr.bf16.mxu0 0
        %1901 = vmatpush1.bf16.xpose.msra.mxu0 0
        %1902 = vmatprep.subr.bf16.mxu0 0
        %1903 = vmatpush1.bf16.xpose.msra.mxu0 0
        %1904 = vmatprep.mubr.bf16.mxu0 0
        %1905 = vmatmul.mubr.bf16.gmra.mrb[0].mxu0 %v1867
        %v1906 = vpop.f32.mrb[0].mxu0
        %v1907 = vadd.f32 0.0, %v1906
        %v1908 = vpop.f32.mrb[0].mxu0
        %v1909 = vpop.f32.mrb[0].mxu0
        %v1910 = vadd.f32 0.0, %v1909
        %v1911 = vpop.f32.mrb[0].mxu0
        %1912 = vdwg.mxu0
        %v1913 = vsel %vm1114, %v1907, -inf
        %1914 = vmax.xlane.f32.xlu0 %v1913
        %v1915 = vpop.xlane.xlu0 %1914
        %v1916 = vsel %vm1114, %v1910, -inf
        %1917 = vmax.xlane.f32.xlu0 %v1916
        %v1918 = vpop.xlane.xlu0 %1917
        %v1919 = vsub.f32 %v1907, %v1915
        %v1920 = vsub.f32 %v1910, %v1918
        %v1921 = vmul.f32 %v1919, 1.442695
        %v1922 = vpow.pop %v1921
        %v1923 = vmul.f32 %v1920, 1.442695
        %v1924 = vpow.pop %v1923
        %v1925 = vsel %vm1114, %v1922, 0.0
        %1926 = vadd.xlane.f32.xlu0 %v1925
        %v1927 = vpop.xlane.xlu0 %1926
        %v1928 = vsel %vm1114, %v1924, 0.0
        %1929 = vadd.xlane.f32.xlu0 %v1928
        %v1930 = vpop.xlane.xlu0 %1929
        %v1931 = vrcp.pop %v1927
        %v1932 = vrcp.pop %v1930
        %v1933 = vmul.f32 %v1922, %v1931
        %v1934 = vmul.f32 %v1924, %v1932
        %v1935 = vpack.c.bf16 %v1934, %v1933
        %v1936 = vpack.c.bf16 %v1842, %v1839
        %v1938 = vsel %vm1114, %v1935, 0
        %1940 = vmatprep.subr.bf16.mxu0 0
        %1941 = vmatpush1.bf16.msra.mxu0 %v1936
        %1942 = vmatprep.subr.bf16.mxu0 0
        %1943 = vmatpush1.bf16.msra.mxu0 0
        %1944 = vmatprep.subr.bf16.mxu0 0
        %1945 = vmatpush1.bf16.msra.mxu0 0
        %1946 = vmatprep.subr.bf16.mxu0 0
        %1947 = vmatpush1.bf16.msra.mxu0 0
        %1948 = vmatprep.subr.bf16.mxu0 0
        %1949 = vmatpush1.bf16.msra.mxu0 0
        %1950 = vmatprep.subr.bf16.mxu0 0
        %1951 = vmatpush1.bf16.msra.mxu0 0
        %1952 = vmatprep.subr.bf16.mxu0 0
        %1953 = vmatpush1.bf16.msra.mxu0 0
        %1954 = vmatprep.subr.bf16.mxu0 0
        %1955 = vmatpush1.bf16.msra.mxu0 0
        %1956 = vmatprep.subr.bf16.mxu0 0
        %1957 = vmatpush1.bf16.msra.mxu0 0
        %1958 = vmatprep.subr.bf16.mxu0 0
        %1959 = vmatpush1.bf16.msra.mxu0 0
        %1960 = vmatprep.subr.bf16.mxu0 0
        %1961 = vmatpush1.bf16.msra.mxu0 0
        %1962 = vmatprep.subr.bf16.mxu0 0
        %1963 = vmatpush1.bf16.msra.mxu0 0
        %1964 = vmatprep.subr.bf16.mxu0 0
        %1965 = vmatpush1.bf16.msra.mxu0 0
        %1966 = vmatprep.subr.bf16.mxu0 0
        %1967 = vmatpush1.bf16.msra.mxu0 0
        %1968 = vmatprep.subr.bf16.mxu0 0
        %1969 = vmatpush1.bf16.msra.mxu0 0
        %1970 = vmatprep.subr.bf16.mxu0 0
        %1971 = vmatpush1.bf16.msra.mxu0 0
        %1972 = vmatprep.mubr.bf16.mxu0 0
        %1973 = vmatmul.mubr.bf16.gmra.mrb[0].mxu0 %v1938
        %v1974 = vpop.f32.mrb[0].mxu0
        %v1975 = vadd.f32 0.0, %v1974
        %v1976 = vpop.f32.mrb[0].mxu0
        %v1977 = vpop.f32.mrb[0].mxu0
        %v1978 = vadd.f32 0.0, %v1977
        %v1979 = vpop.f32.mrb[0].mxu0
        %1980 = vdwg.mxu0
        %v1981 = vpack.c.bf16 %v1978, %v1975
        %v1982 = vpack.c.bf16 %v1847, %v1846
        %v1983 = vpack.c.bf16 %v1849, %v1848
        %v1984 = vpack.c.bf16 %v1851, %v1850
        %v1985 = vpack.c.bf16 %v1853, %v1852
        %v1987 = vsel %vm1066, %v1981, 0
        %1989 = vmatprep.subr.bf16.mxu0 0
        %1990 = vmatpush1.bf16.msra.mxu0 %v1982
        %1991 = vmatprep.subr.bf16.mxu0 0
        %1992 = vmatpush1.bf16.msra.mxu0 %v1983
        %1993 = vmatprep.subr.bf16.mxu0 0
        %1994 = vmatpush1.bf16.msra.mxu0 %v1984
        %1995 = vmatprep.subr.bf16.mxu0 0
        %1996 = vmatpush1.bf16.msra.mxu0 %v1985
        %1997 = vmatprep.subr.bf16.mxu0 0
        %1998 = vmatpush1.bf16.msra.mxu0 0
        %1999 = vmatprep.subr.bf16.mxu0 0
        %2000 = vmatpush1.bf16.msra.mxu0 0
        %2001 = vmatprep.subr.bf16.mxu0 0
        %2002 = vmatpush1.bf16.msra.mxu0 0
        %2003 = vmatprep.subr.bf16.mxu0 0
        %2004 = vmatpush1.bf16.msra.mxu0 0
        %2005 = vmatprep.subr.bf16.mxu0 0
        %2006 = vmatpush1.bf16.msra.mxu0 0
        %2007 = vmatprep.subr.bf16.mxu0 0
        %2008 = vmatpush1.bf16.msra.mxu0 0
        %2009 = vmatprep.subr.bf16.mxu0 0
        %2010 = vmatpush1.bf16.msra.mxu0 0
        %2011 = vmatprep.subr.bf16.mxu0 0
        %2012 = vmatpush1.bf16.msra.mxu0 0
        %2013 = vmatprep.subr.bf16.mxu0 0
        %2014 = vmatpush1.bf16.msra.mxu0 0
        %2015 = vmatprep.subr.bf16.mxu0 0
        %2016 = vmatpush1.bf16.msra.mxu0 0
        %2017 = vmatprep.subr.bf16.mxu0 0
        %2018 = vmatpush1.bf16.msra.mxu0 0
        %2019 = vmatprep.subr.bf16.mxu0 0
        %2020 = vmatpush1.bf16.msra.mxu0 0
        %2021 = vmatprep.mubr.bf16.mxu0 0
        %2022 = vmatmul.mubr.bf16.gmra.mrb[0].mxu0 %v1987
        %v2023 = vpop.f32.mrb[0].mxu0
        %v2024 = vadd.f32 0.0, %v2023
        %v2025 = vpop.f32.mrb[0].mxu0
        %v2026 = vpop.f32.mrb[0].mxu0
        %v2027 = vadd.f32 0.0, %v2026
        %v2028 = vpop.f32.mrb[0].mxu0
        %2029 = vdwg.mxu0
        %v2031 = vlaneseq
        %v2032 = vshrl.u32 %v2031, 7
        %v2033 = vsub.s32 0, %v2032
        %v2034 = vrot.slane %v1863, %v2033
        %v2036 = vadd.f32 %v2034, %v2024
        %v2037 = vadd.f32 %v2034, %v2027
        %2039 = vrot.lane.b32.xlu0 %v1864, 64
        %v2040 = vpop.permute.xlu0 %2039
        %2042 = vrot.lane.b32.xlu0 %v1865, 64
        %v2043 = vpop.permute.xlu0 %2042
        %v2045 = vsel %vm1066, %v2040, 0
        %v2048 = vsel %vm1066, %v2043, 0
        %2050 = vmatprep.subr.bf16.mxu0 0
        %2051 = vmatpush1.bf16.xpose.msra.mxu0 %v2048
        %2052 = vmatprep.subr.bf16.mxu0 0
        %2053 = vmatpush1.bf16.xpose.msra.mxu0 0
        %2054 = vmatprep.subr.bf16.mxu0 0
        %2055 = vmatpush1.bf16.xpose.msra.mxu0 0
        %2056 = vmatprep.subr.bf16.mxu0 0
        %2057 = vmatpush1.bf16.xpose.msra.mxu0 0
        %2058 = vmatprep.subr.bf16.mxu0 0
        %2059 = vmatpush1.bf16.xpose.msra.mxu0 0
        %2060 = vmatprep.subr.bf16.mxu0 0
        %2061 = vmatpush1.bf16.xpose.msra.mxu0 0
        %2062 = vmatprep.subr.bf16.mxu0 0
        %2063 = vmatpush1.bf16.xpose.msra.mxu0 0
        %2064 = vmatprep.subr.bf16.mxu0 0
        %2065 = vmatpush1.bf16.xpose.msra.mxu0 0
        %2066 = vmatprep.subr.bf16.mxu0 0
        %2067 = vmatpush1.bf16.xpose.msra.mxu0 0
        %2068 = vmatprep.subr.bf16.mxu0 0
        %2069 = vmatpush1.bf16.xpose.msra.mxu0 0
        %2070 = vmatprep.subr.bf16.mxu0 0
        %2071 = vmatpush1.bf16.xpose.msra.mxu0 0
        %2072 = vmatprep.subr.bf16.mxu0 0
        %2073 = vmatpush1.bf16.xpose.msra.mxu0 0
        %2074 = vmatprep.subr.bf16.mxu0 0
        %2075 = vmatpush1.bf16.xpose.msra.mxu0 0
        %2076 = vmatprep.subr.bf16.mxu0 0
        %2077 = vmatpush1.bf16.xpose.msra.mxu0 0
        %2078 = vmatprep.subr.bf16.mxu0 0
        %2079 = vmatpush1.bf16.xpose.msra.mxu0 0
        %2080 = vmatprep.subr.bf16.mxu0 0
        %2081 = vmatpush1.bf16.xpose.msra.mxu0 0
        %2082 = vmatprep.mubr.bf16.mxu0 0
        %2083 = vmatmul.mubr.bf16.gmra.mrb[0].mxu0 %v2045
        %v2084 = vpop.f32.mrb[0].mxu0
        %v2085 = vadd.f32 0.0, %v2084
        %v2086 = vpop.f32.mrb[0].mxu0
        %v2087 = vpop.f32.mrb[0].mxu0
        %v2088 = vadd.f32 0.0, %v2087
        %v2089 = vpop.f32.mrb[0].mxu0
        %2090 = vdwg.mxu0
        %v2091 = vsel %vm1114, %v2085, -inf
        %2092 = vmax.xlane.f32.xlu0 %v2091
        %v2093 = vpop.xlane.xlu0 %2092
        %v2094 = vsel %vm1114, %v2088, -inf
        %2095 = vmax.xlane.f32.xlu0 %v2094
        %v2096 = vpop.xlane.xlu0 %2095
        %v2097 = vsub.f32 %v2085, %v2093
        %v2098 = vsub.f32 %v2088, %v2096
        %v2099 = vmul.f32 %v2097, 1.442695
        %v2100 = vpow.pop %v2099
        %v2101 = vmul.f32 %v2098, 1.442695
        %v2102 = vpow.pop %v2101
        %v2103 = vsel %vm1114, %v2100, 0.0
        %2104 = vadd.xlane.f32.xlu0 %v2103
        %v2105 = vpop.xlane.xlu0 %2104
        %v2106 = vsel %vm1114, %v2102, 0.0
        %2107 = vadd.xlane.f32.xlu0 %v2106
        %v2108 = vpop.xlane.xlu0 %2107
        %v2109 = vrcp.pop %v2105
        %v2110 = vrcp.pop %v2108
        %v2111 = vmul.f32 %v2100, %v2109
        %v2112 = vmul.f32 %v2102, %v2110
        %v2113 = vpack.c.bf16 %v2112, %v2111
        %2115 = vrot.lane.b32.xlu0 %v1936, 64
        %v2116 = vpop.permute.xlu0 %2115
        %v2119 = vsel %vm1114, %v2113, 0
        %2121 = vmatprep.subr.bf16.mxu0 0
        %2122 = vmatpush1.bf16.msra.mxu0 %v2116
        %2123 = vmatprep.subr.bf16.mxu0 0
        %2124 = vmatpush1.bf16.msra.mxu0 0
        %2125 = vmatprep.subr.bf16.mxu0 0
        %2126 = vmatpush1.bf16.msra.mxu0 0
        %2127 = vmatprep.subr.bf16.mxu0 0
        %2128 = vmatpush1.bf16.msra.mxu0 0
        %2129 = vmatprep.subr.bf16.mxu0 0
        %2130 = vmatpush1.bf16.msra.mxu0 0
        %2131 = vmatprep.subr.bf16.mxu0 0
        %2132 = vmatpush1.bf16.msra.mxu0 0
        %2133 = vmatprep.subr.bf16.mxu0 0
        %2134 = vmatpush1.bf16.msra.mxu0 0
        %2135 = vmatprep.subr.bf16.mxu0 0
        %2136 = vmatpush1.bf16.msra.mxu0 0
        %2137 = vmatprep.subr.bf16.mxu0 0
        %2138 = vmatpush1.bf16.msra.mxu0 0
        %2139 = vmatprep.subr.bf16.mxu0 0
        %2140 = vmatpush1.bf16.msra.mxu0 0
        %2141 = vmatprep.subr.bf16.mxu0 0
        %2142 = vmatpush1.bf16.msra.mxu0 0
        %2143 = vmatprep.subr.bf16.mxu0 0
        %2144 = vmatpush1.bf16.msra.mxu0 0
        %2145 = vmatprep.subr.bf16.mxu0 0
        %2146 = vmatpush1.bf16.msra.mxu0 0
        %2147 = vmatprep.subr.bf16.mxu0 0
        %2148 = vmatpush1.bf16.msra.mxu0 0
        %2149 = vmatprep.subr.bf16.mxu0 0
        %2150 = vmatpush1.bf16.msra.mxu0 0
        %2151 = vmatprep.subr.bf16.mxu0 0
        %2152 = vmatpush1.bf16.msra.mxu0 0
        %2153 = vmatprep.mubr.bf16.mxu0 0
        %2154 = vmatmul.mubr.bf16.gmra.mrb[0].mxu0 %v2119
        %v2155 = vpop.f32.mrb[0].mxu0
        %v2156 = vadd.f32 0.0, %v2155
        %v2157 = vpop.f32.mrb[0].mxu0
        %v2158 = vpop.f32.mrb[0].mxu0
        %v2159 = vadd.f32 0.0, %v2158
        %v2160 = vpop.f32.mrb[0].mxu0
        %2161 = vdwg.mxu0
        %v2162 = vpack.c.bf16 %v2159, %v2156
        %v2163 = vpack.c.bf16 %v1855, %v1854
        %v2164 = vpack.c.bf16 %v1857, %v1856
        %v2165 = vpack.c.bf16 %v1859, %v1858
        %v2166 = vpack.c.bf16 %v1861, %v1860
        %v2168 = vsel %vm1066, %v2162, 0
        %2170 = vmatprep.subr.bf16.mxu0 0
        %2171 = vmatpush1.bf16.msra.mxu0 %v2163
        %2172 = vmatprep.subr.bf16.mxu0 0
        %2173 = vmatpush1.bf16.msra.mxu0 %v2164
        %2174 = vmatprep.subr.bf16.mxu0 0
        %2175 = vmatpush1.bf16.msra.mxu0 %v2165
        %2176 = vmatprep.subr.bf16.mxu0 0
        %2177 = vmatpush1.bf16.msra.mxu0 %v2166
        %2178 = vmatprep.subr.bf16.mxu0 0
        %2179 = vmatpush1.bf16.msra.mxu0 0
        %2180 = vmatprep.subr.bf16.mxu0 0
        %2181 = vmatpush1.bf16.msra.mxu0 0
        %2182 = vmatprep.subr.bf16.mxu0 0
        %2183 = vmatpush1.bf16.msra.mxu0 0
        %2184 = vmatprep.subr.bf16.mxu0 0
        %2185 = vmatpush1.bf16.msra.mxu0 0
        %2186 = vmatprep.subr.bf16.mxu0 0
        %2187 = vmatpush1.bf16.msra.mxu0 0
        %2188 = vmatprep.subr.bf16.mxu0 0
        %2189 = vmatpush1.bf16.msra.mxu0 0
        %2190 = vmatprep.subr.bf16.mxu0 0
        %2191 = vmatpush1.bf16.msra.mxu0 0
        %2192 = vmatprep.subr.bf16.mxu0 0
        %2193 = vmatpush1.bf16.msra.mxu0 0
        %2194 = vmatprep.subr.bf16.mxu0 0
        %2195 = vmatpush1.bf16.msra.mxu0 0
        %2196 = vmatprep.subr.bf16.mxu0 0
        %2197 = vmatpush1.bf16.msra.mxu0 0
        %2198 = vmatprep.subr.bf16.mxu0 0
        %2199 = vmatpush1.bf16.msra.mxu0 0
        %2200 = vmatprep.subr.bf16.mxu0 0
        %2201 = vmatpush1.bf16.msra.mxu0 0
        %2202 = vmatprep.mubr.bf16.mxu0 0
        %2203 = vmatmul.mubr.bf16.gmra.mrb[0].mxu0 %v2168
        %v2204 = vpop.f32.mrb[0].mxu0
        %v2205 = vadd.f32 0.0, %v2204
        %v2206 = vpop.f32.mrb[0].mxu0
        %v2207 = vpop.f32.mrb[0].mxu0
        %v2208 = vadd.f32 0.0, %v2207
        %v2209 = vpop.f32.mrb[0].mxu0
        %2210 = vdwg.mxu0
        %v2211 = vadd.f32 %v2036, %v2205
        %v2212 = vadd.f32 %v2037, %v2208
        %v2213 = vadd.f32 %v1623, %v2211
        %v2214 = vadd.f32 %v1624, %v2212
        %s2215 = scalar_lea.vmem %s10, 1
        %v2216 = vld [vmem:[%s2215] sm:$0x1]
        %s2217 = scalar_lea.vmem %s11, 1
        %v2218 = vld [vmem:[%s2217] sm:$0x1]
        %2219 = vadd.xlane.f32.xlu0 %v2213
        %v2220 = vpop.xlane.xlu0 %2219
        %2221 = vadd.xlane.f32.xlu0 %v2214
        %v2222 = vpop.xlane.xlu0 %2221
        %v2223 = vmul.f32 %v2220, 0.03125
        %v2224 = vmul.f32 %v2222, 0.03125
        %v2225 = vsub.f32 %v2213, %v2223
        %v2226 = vsub.f32 %v2214, %v2224
        %v2227 = vmul.f32 %v2225, %v724
        %v2228 = vmul.f32 %v2226, %v724
        %v2229 = vmul.f32 %v2227, %v2227
        %v2230 = vmul.f32 %v2228, %v2228
        %2231 = vadd.xlane.f32.xlu0 %v2229
        %v2232 = vpop.xlane.xlu0 %2231
        %2233 = vadd.xlane.f32.xlu0 %v2230
        %v2234 = vpop.xlane.xlu0 %2233
        %v2235 = vmul.f32 %v2232, 0.03125
        %v2236 = vmul.f32 %v2234, 0.03125
        %v2237 = vadd.f32 %v2235, 1e-06
        %v2238 = vadd.f32 %v2236, 1e-06
        %v2239 = vrsqrt.pop %v2237
        %v2240 = vrsqrt.pop %v2238
        %v2241 = vmul.f32 %v2227, %v2239
        %v2242 = vmul.f32 %v2228, %v2240
        %v2244 = vlaneseq
        %v2245 = vshrl.u32 %v2244, 7
        %v2246 = vsub.s32 0, %v2245
        %v2247 = vrot.slane %v2216, %v2246
        %v2249 = vmul.f32 %v2241, %v2247
        %v2250 = vmul.f32 %v2242, %v2247
        %v2252 = vlaneseq
        %v2253 = vshrl.u32 %v2252, 7
        %v2254 = vsub.s32 0, %v2253
        %v2255 = vrot.slane %v2218, %v2254
        %v2257 = vadd.f32 %v2249, %v2255
        %v2258 = vadd.f32 %v2250, %v2255
        %s2259 = scalar_lea.vmem [#allocation13], 128
        %v2260 = vld [vmem:[%s2259] sm:$0xff]
        %v2261 = vld [vmem:[%s2259 + $0x8] sm:$0xff]
        %v2262 = vld [vmem:[%s2259 + $0x10] sm:$0xff]
        %v2263 = vld [vmem:[%s2259 + $0x18] sm:$0xff]
        %v2264 = vld [vmem:[%s2259 + $0x20] sm:$0xff]
        %v2265 = vld [vmem:[%s2259 + $0x28] sm:$0xff]
        %v2266 = vld [vmem:[%s2259 + $0x30] sm:$0xff]
        %v2267 = vld [vmem:[%s2259 + $0x38] sm:$0xff]
        %v2268 = vld [vmem:[%s2259 + $0x40] sm:$0xff]
        %v2269 = vld [vmem:[%s2259 + $0x48] sm:$0xff]
        %v2270 = vld [vmem:[%s2259 + $0x50] sm:$0xff]
        %v2271 = vld [vmem:[%s2259 + $0x58] sm:$0xff]
        %v2272 = vld [vmem:[%s2259 + $0x60] sm:$0xff]
        %v2273 = vld [vmem:[%s2259 + $0x68] sm:$0xff]
        %v2274 = vld [vmem:[%s2259 + $0x70] sm:$0xff]
        %v2275 = vld [vmem:[%s2259 + $0x78] sm:$0xff]
        %v2276 = vpack.c.bf16 %v2258, %v2257
        %v2277 = vpack.c.bf16 %v2261, %v2260
        %v2278 = vpack.c.bf16 %v2263, %v2262
        %v2279 = vpack.c.bf16 %v2265, %v2264
        %v2280 = vpack.c.bf16 %v2267, %v2266
        %v2281 = vpack.c.bf16 %v2269, %v2268
        %v2282 = vpack.c.bf16 %v2271, %v2270
        %v2283 = vpack.c.bf16 %v2273, %v2272
        %v2284 = vpack.c.bf16 %v2275, %v2274
        %s2285 = scalar_lea.vmem %s13, 1
        %v2286 = vld [vmem:[%s2285] sm:$0x1]
        %v2288 = vlaneseq
        %v2289 = vshrl.u32 %v2288, 7
        %v2290 = vsub.s32 0, %v2289
        %v2291 = vrot.slane %v2286, %v2290
        %2293 = vmatprep.subr.bf16.mxu0 0
        %2294 = vmatpush1.bf16.msra.mxu0 %v2277
        %2295 = vmatprep.subr.bf16.mxu0 0
        %2296 = vmatpush1.bf16.msra.mxu0 %v2278
        %2297 = vmatprep.subr.bf16.mxu0 0
        %2298 = vmatpush1.bf16.msra.mxu0 %v2279
        %2299 = vmatprep.subr.bf16.mxu0 0
        %2300 = vmatpush1.bf16.msra.mxu0 %v2280
        %2301 = vmatprep.subr.bf16.mxu0 0
        %2302 = vmatpush1.bf16.msra.mxu0 %v2281
        %2303 = vmatprep.subr.bf16.mxu0 0
        %2304 = vmatpush1.bf16.msra.mxu0 %v2282
        %2305 = vmatprep.subr.bf16.mxu0 0
        %2306 = vmatpush1.bf16.msra.mxu0 %v2283
        %2307 = vmatprep.subr.bf16.mxu0 0
        %2308 = vmatpush1.bf16.msra.mxu0 %v2284
        %2309 = vmatprep.subr.bf16.mxu0 0
        %2310 = vmatpush1.bf16.msra.mxu0 0
        %2311 = vmatprep.subr.bf16.mxu0 0
        %2312 = vmatpush1.bf16.msra.mxu0 0
        %2313 = vmatprep.subr.bf16.mxu0 0
        %2314 = vmatpush1.bf16.msra.mxu0 0
        %2315 = vmatprep.subr.bf16.mxu0 0
        %2316 = vmatpush1.bf16.msra.mxu0 0
        %2317 = vmatprep.subr.bf16.mxu0 0
        %2318 = vmatpush1.bf16.msra.mxu0 0
        %2319 = vmatprep.subr.bf16.mxu0 0
        %2320 = vmatpush1.bf16.msra.mxu0 0
        %2321 = vmatprep.subr.bf16.mxu0 0
        %2322 = vmatpush1.bf16.msra.mxu0 0
        %2323 = vmatprep.subr.bf16.mxu0 0
        %2324 = vmatpush1.bf16.msra.mxu0 0
        %2325 = vmatprep.mubr.bf16.mxu0 0
        %2326 = vmatmul.mubr.bf16.gmra.mrb[0].mxu0 %v2276
        %v2327 = vpop.f32.mrb[0].mxu0
        %v2328 = vadd.f32 %v2291, %v2327
        %v2329 = vpop.f32.mrb[0].mxu0
        %v2330 = vpop.f32.mrb[0].mxu0
        %v2331 = vadd.f32 %v2291, %v2330
        %v2332 = vpop.f32.mrb[0].mxu0
        %2333 = vdwg.mxu0
        %v2334 = vmul.f32 %v2328, 0.5
        %v2335 = vmul.f32 %v2331, 0.5
        %v2336 = vmul.f32 %v2328, 0.044715
        %v2337 = vmul.f32 %v2331, 0.044715
        %v2338 = vmul.f32 %v2336, %v2328
        %v2339 = vmul.f32 %v2337, %v2331
        %v2340 = vmul.f32 %v2338, %v2328
        %v2341 = vmul.f32 %v2339, %v2331
        %v2342 = vadd.f32 %v2328, %v2340
        %v2343 = vadd.f32 %v2331, %v2341
        %v2344 = vmul.f32 %v2342, 0.7978846
        %v2345 = vmul.f32 %v2343, 0.7978846
        %v2346 = vtanh.pop %v2344
        %v2347 = vtanh.pop %v2345
        %v2348 = vadd.f32 %v2346, 1.0
        %v2349 = vadd.f32 %v2347, 1.0
        %v2350 = vmul.f32 %v2334, %v2348
        %v2351 = vmul.f32 %v2335, %v2349
        %s2352 = scalar_lea.vmem [#allocation14], 128
        %v2353 = vld [vmem:[%s2352] sm:$0xff]
        %v2354 = vld [vmem:[%s2352 + $0x8] sm:$0xff]
        %v2355 = vld [vmem:[%s2352 + $0x10] sm:$0xff]
        %v2356 = vld [vmem:[%s2352 + $0x18] sm:$0xff]
        %v2357 = vld [vmem:[%s2352 + $0x20] sm:$0xff]
        %v2358 = vld [vmem:[%s2352 + $0x28] sm:$0xff]
        %v2359 = vld [vmem:[%s2352 + $0x30] sm:$0xff]
        %v2360 = vld [vmem:[%s2352 + $0x38] sm:$0xff]
        %v2361 = vld [vmem:[%s2352 + $0x40] sm:$0xff]
        %v2362 = vld [vmem:[%s2352 + $0x48] sm:$0xff]
        %v2363 = vld [vmem:[%s2352 + $0x50] sm:$0xff]
        %v2364 = vld [vmem:[%s2352 + $0x58] sm:$0xff]
        %v2365 = vld [vmem:[%s2352 + $0x60] sm:$0xff]
        %v2366 = vld [vmem:[%s2352 + $0x68] sm:$0xff]
        %v2367 = vld [vmem:[%s2352 + $0x70] sm:$0xff]
        %v2368 = vld [vmem:[%s2352 + $0x78] sm:$0xff]
        %v2369 = vpack.c.bf16 %v2351, %v2350
        %v2370 = vpack.c.bf16 %v2354, %v2353
        %v2371 = vpack.c.bf16 %v2356, %v2355
        %v2372 = vpack.c.bf16 %v2358, %v2357
        %v2373 = vpack.c.bf16 %v2360, %v2359
        %v2374 = vpack.c.bf16 %v2362, %v2361
        %v2375 = vpack.c.bf16 %v2364, %v2363
        %v2376 = vpack.c.bf16 %v2366, %v2365
        %v2377 = vpack.c.bf16 %v2368, %v2367
        %s2378 = scalar_lea.vmem %s15, 1
        %v2379 = vld [vmem:[%s2378] sm:$0x1]
        %v2381 = vlaneseq
        %v2382 = vshrl.u32 %v2381, 7
        %v2383 = vsub.s32 0, %v2382
        %v2384 = vrot.slane %v2379, %v2383
        %2386 = vmatprep.subr.bf16.mxu0 0
        %2387 = vmatpush1.bf16.msra.mxu0 %v2370
        %2388 = vmatprep.subr.bf16.mxu0 0
        %2389 = vmatpush1.bf16.msra.mxu0 %v2371
        %2390 = vmatprep.subr.bf16.mxu0 0
        %2391 = vmatpush1.bf16.msra.mxu0 %v2372
        %2392 = vmatprep.subr.bf16.mxu0 0
        %2393 = vmatpush1.bf16.msra.mxu0 %v2373
        %2394 = vmatprep.subr.bf16.mxu0 0
        %2395 = vmatpush1.bf16.msra.mxu0 %v2374
        %2396 = vmatprep.subr.bf16.mxu0 0
        %2397 = vmatpush1.bf16.msra.mxu0 %v2375
        %2398 = vmatprep.subr.bf16.mxu0 0
        %2399 = vmatpush1.bf16.msra.mxu0 %v2376
        %2400 = vmatprep.subr.bf16.mxu0 0
        %2401 = vmatpush1.bf16.msra.mxu0 %v2377
        %2402 = vmatprep.subr.bf16.mxu0 0
        %2403 = vmatpush1.bf16.msra.mxu0 0
        %2404 = vmatprep.subr.bf16.mxu0 0
        %2405 = vmatpush1.bf16.msra.mxu0 0
        %2406 = vmatprep.subr.bf16.mxu0 0
        %2407 = vmatpush1.bf16.msra.mxu0 0
        %2408 = vmatprep.subr.bf16.mxu0 0
        %2409 = vmatpush1.bf16.msra.mxu0 0
        %2410 = vmatprep.subr.bf16.mxu0 0
        %2411 = vmatpush1.bf16.msra.mxu0 0
        %2412 = vmatprep.subr.bf16.mxu0 0
        %2413 = vmatpush1.bf16.msra.mxu0 0
        %2414 = vmatprep.subr.bf16.mxu0 0
        %2415 = vmatpush1.bf16.msra.mxu0 0
        %2416 = vmatprep.subr.bf16.mxu0 0
        %2417 = vmatpush1.bf16.msra.mxu0 0
        %2418 = vmatprep.mubr.bf16.mxu0 0
        %2419 = vmatmul.mubr.bf16.gmra.mrb[0].mxu0 %v2369
        %v2420 = vpop.f32.mrb[0].mxu0
        %v2421 = vadd.f32 %v2384, %v2420
        %v2422 = vpop.f32.mrb[0].mxu0
        %v2423 = vpop.f32.mrb[0].mxu0
        %v2424 = vadd.f32 %v2384, %v2423
        %v2425 = vpop.f32.mrb[0].mxu0
        %2426 = vdwg.mxu0
        %v2427 = vadd.f32 %v2213, %v2421
        %v2428 = vadd.f32 %v2214, %v2424
        %v2429 = vld [vmem:[%s16] sm:$0x1]
        %v2430 = vld [vmem:[%s17] sm:$0x1]
        %2431 = vadd.xlane.f32.xlu0 %v2427
        %v2432 = vpop.xlane.xlu0 %2431
        %2433 = vadd.xlane.f32.xlu0 %v2428
        %v2434 = vpop.xlane.xlu0 %2433
        %v2435 = vmul.f32 %v2432, 0.03125
        %v2436 = vmul.f32 %v2434, 0.03125
        %v2437 = vsub.f32 %v2427, %v2435
        %v2438 = vsub.f32 %v2428, %v2436
        %v2439 = vmul.f32 %v2437, %v724
        %v2440 = vmul.f32 %v2438, %v724
        %v2441 = vmul.f32 %v2439, %v2439
        %v2442 = vmul.f32 %v2440, %v2440
        %2443 = vadd.xlane.f32.xlu0 %v2441
        %v2444 = vpop.xlane.xlu0 %2443
        %2445 = vadd.xlane.f32.xlu0 %v2442
        %v2446 = vpop.xlane.xlu0 %2445
        %v2447 = vmul.f32 %v2444, 0.03125
        %v2448 = vmul.f32 %v2446, 0.03125
        %v2449 = vadd.f32 %v2447, 1e-06
        %v2450 = vadd.f32 %v2448, 1e-06
        %v2451 = vrsqrt.pop %v2449
        %v2452 = vrsqrt.pop %v2450
        %v2453 = vmul.f32 %v2439, %v2451
        %v2454 = vmul.f32 %v2440, %v2452
        %v2456 = vlaneseq
        %v2457 = vshrl.u32 %v2456, 7
        %v2458 = vsub.s32 0, %v2457
        %v2459 = vrot.slane %v2429, %v2458
        %v2461 = vmul.f32 %v2453, %v2459
        %v2462 = vmul.f32 %v2454, %v2459
        %v2464 = vlaneseq
        %v2465 = vshrl.u32 %v2464, 7
        %v2466 = vsub.s32 0, %v2465
        %v2467 = vrot.slane %v2430, %v2466
        %v2469 = vadd.f32 %v2461, %v2467
        %v2470 = vadd.f32 %v2462, %v2467
        %2471 = vst [vmem:[%s718] sm:$0xff] %v2469
        %2472 = vst [vmem:[%s718 + $0x8] sm:$0xff] %v2470
        %s2473 = sand.u32 %s437, 1
        %s2474 = scalar_lea.sflag [#allocation4], %s2473
        %s2475 = sand.u32 %s437, 1
        %s2476 = smul.addr %s2475, 16
        %s2477 = scalar_lea.vmem [#allocation16], %s2476
        // Predicated region
        $region125: #{tpu_custom_call.1} parent=91 // pred_check
          %p2478 = pneg %p447
        $region126: #{tpu_custom_call.1} parent=91 // pred_check_branch
          %2480 = sbr.rel (%p2478) target = $region128
        $region127: #{tpu_custom_call.1} parent=91 // pred_region
          %s2482 = ssub.s32 256, 256
          %2483 = vsyncadd %s2474, %s2482
          %s2484 = smul.addr %s41, 2
          %s2485 = smul.addr %s2484, 128
          %s2486 = scalar_lea.hbm %s18, %s2485
          %s2487 = sshll.u32 %s2477, 4
          %s2488 = int_to_ptr.vmem [resolvable:$true] %s2487
          %2493 = dma.vmem_to_hbm [thread:$0]  %s2488, 256, %s2486, %s2474, 128, 128, 8
        $region128: #{tpu_custom_call.1} parent=91 // pred_fallthru
          _
      $region92: #{tpu_custom_call.1} parent=5 // pred_fallthru
        _
      %p2494 = scmp.le.s32.totalorder 2, %s36
      // Predicated region
      $region129: #{tpu_custom_call.1} parent=5 // pred_check
        %p2495 = pneg %p2494
      $region130: #{tpu_custom_call.1} parent=5 // pred_check_branch
        %2497 = sbr.rel (%p2495) target = $region132
      $region131: #{tpu_custom_call.1} parent=5 // pred_region
        %s2498 = ssub.s32 %s36, 2
        // Predicated region
        $region133: #{tpu_custom_call.1} parent=131 // pred_check
          %p2499 = pneg %p453
        $region134: #{tpu_custom_call.1} parent=131 // pred_check_branch
          %2501 = sbr.rel (%p2499) target = $region136
        $region135: #{tpu_custom_call.1} parent=131 // pred_region
          %s2502 = sand.u32 %s438, 1
          %s2503 = scalar_lea.sflag [#allocation4], %s2502
          %s2504 = sand.u32 %s438, 1
          %s2505 = smul.addr %s2504, 16
          %s2506 = scalar_lea.vmem [#allocation16], %s2505
          %2507 = dma.done %s2503, 256
        $region136: #{tpu_custom_call.1} parent=131 // pred_fallthru
          _
      $region132: #{tpu_custom_call.1} parent=5 // pred_fallthru
        _
    $region6: #{tpu_custom_call.1} parent=1 // loop_footer
      %s40 = sadd.s32 1, %s36
    $region7: #{tpu_custom_call.1} parent=1 // loop_footer_branch
      %35 = sbr.rel target = $region3
    $region8: #{tpu_custom_call.1} parent=1 // loop_exit
      _
    %2508 = vsyncpa [#allocation3], 1
    %s2509 = scalar_lea.sflag [#allocation3], 1
    %2510 = vsyncpa %s2509, 1
    %2511 = vsyncpa [#allocation6], 1
    %s2512 = scalar_lea.sflag [#allocation6], 1
    %2513 = vsyncpa %s2512, 1
    %2514 = vsyncpa [#allocation9], 1
    %2515 = vsyncpa [#allocation12], 1
    %2516 = vsyncpa [#allocation15], 1
    %2517 = vsyncpa [#allocation4], 1
    %s2518 = scalar_lea.sflag [#allocation4], 1
    %2519 = vsyncpa %s2518, 1

</llo_original>
